<compile_context>
chip_gen: v7x
topology: tpu7x:2x2x1
jax: 0.10.0
libtpu: 0.0.40
codegen_flags: <defaults>
</compile_context>

<pallas_src>
import numpy as np
import jax
import jax.numpy as jnp
from jax import lax
from jax.experimental import pallas as pl
from jax.experimental.pallas import tpu as pltpu

F1 = 8      # temporal filters
D = 2       # depth multiplier
F2 = 16     # separable-conv filters (= F1 * D)
TIME_K = 64
SEP_K = 16
BN_EPS = 1e-5


def _num_tensorcores():
    # v7x has 2 TensorCores per chip; v5e/v6e have 1.
    try:
        kind = jax.devices()[0].device_kind.lower()
        if "v7" in kind or "7x" in kind:
            return 2
    except Exception:
        pass
    return 1


# ----------------------------------------------------------------------------
# Pallas kernel: EEGNet forward for one block of Bb batch elements per step.
# Row layouts: step-2 intermediates use rows (j, b) j-major; the pointwise
# matrix re-orders rows to (b, j') so the FC reduction per batch is a
# contiguous group of F2 rows.
# ----------------------------------------------------------------------------
def eegnet_kernel(x_ref, wmix_ref, mtcat_ref, b2_ref, m1cat_ref, wpw_ref,
                  b3_ref, wfct_ref, srow_ref, bfc_ref, o_ref):
    bb = o_ref.shape[1]
    n_cls = o_ref.shape[2]
    dbb = D * bb
    t_full = m1cat_ref.shape[0]            # T
    tb = m1cat_ref.shape[1] // F2          # lane-aligned per-channel block width
    t4 = wfct_ref.shape[2]                 # T // 4

    def elu(h):
        # TODO(synk): jnp.expm1 would be marginally more accurate near zero.
        return jnp.where(h > 0, h, jnp.exp(jnp.minimum(h, 0.0)) - 1.0)

    # -- step1+2 linear part: depthwise channel mixing (BN2 scale folded),
    #    then the 64-tap temporal conv as ONE stacked Toeplitz-band matmul
    #    (BN1 scale folded in); per-filter results are the diagonal blocks.
    z = jnp.dot(wmix_ref[...], x_ref[...],
                preferred_element_type=jnp.float32).astype(jnp.bfloat16)     # [F2*Bb, Tpad]
    h_all = jnp.dot(z, mtcat_ref[...], preferred_element_type=jnp.float32)   # [F2*Bb, F1*T]
    h2 = jnp.concatenate(
        [h_all[f * dbb:(f + 1) * dbb, f * t_full:(f + 1) * t_full]
         for f in range(F1)], axis=0)                                        # [F2*Bb, T] rows (j,b)
    h2 = elu(h2 + b2_ref[...])

    # -- avgpool(1,4) + (7,8) same-pad + 16-tap separable depthwise conv,
    #    folded into ONE stacked matmul; per-channel results are the
    #    (row-group j, lane-aligned column block j) diagonal blocks.
    hw = jnp.dot(h2.astype(jnp.bfloat16), m1cat_ref[...],
                 preferred_element_type=jnp.float32)                         # [F2*Bb, F2*TB]
    hsep = jnp.concatenate(
        [hw[j * bb:(j + 1) * bb, j * tb:j * tb + t4] for j in range(F2)],
        axis=0)                                                              # [F2*Bb, T4] rows (j,b)

    # -- pointwise conv (BN3 scale folded; rows (j,b) -> (b,j')), bias, ELU.
    h3 = jnp.dot(wpw_ref[...], hsep.astype(jnp.bfloat16),
                 preferred_element_type=jnp.float32)                         # [Bb*F2, T4] rows (b,j')
    h3 = elu(h3 + b3_ref[...])

    # -- avgpool(1,8) folded into the FC weights; per-class weighted lane
    #    sums, then one small matmul reduces the F2 rows of each batch elem.
    cols = [jnp.sum(h3 * wfct_ref[k], axis=1, keepdims=True)
            for k in range(n_cls)]                                           # K x [Bb*F2, 1]
    s = jnp.concatenate(cols, axis=1)                                        # [Bb*F2, K]
    out = jnp.dot(srow_ref[...], s, preferred_element_type=jnp.float32)      # [Bb, K]
    out = out + bfc_ref[...]
    o_ref[...] = out[None].astype(o_ref.dtype)


# ----------------------------------------------------------------------------
# Wrapper: BN folding / Toeplitz & pooling matrix construction (all jnp,
# jit-safe), then pallas_call over batch blocks.
# ----------------------------------------------------------------------------
def eegnet_forward(x, params, eps=BN_EPS, batch_block=None):
    B, C, T = x.shape
    assert T % 32 == 0
    K = params['wfc'].shape[0]
    T4, T32 = T // 4, T // 32
    Tpad = ((T + TIME_K - 1 + 127) // 128) * 128      # time rounded to 128 lanes
    TB = ((T4 + 127) // 128) * 128                    # lane-aligned per-channel block

    # ---- generation-aware batch block: 1 grid step per TensorCore, capped
    #      at 16 because the block-diagonal matrices grow O(Bb^2). ----------
    if batch_block is None:
        n_tc = _num_tensorcores()
        batch_block = min(16, max(1, -(-B // n_tc)))
    Bb = batch_block
    B_pad = -(-B // Bb) * Bb
    nsteps = B_pad // Bb
    if nsteps > 1 and (Bb * C) % 8 != 0:              # keep the input block sublane-aligned
        Bb, nsteps = B_pad, 1

    # ---- input: pad batch to B_pad, "same" (31,32) time padding to Tpad ---
    left = (TIME_K - 1) // 2
    xp = jnp.pad(x.astype(jnp.float32),
                 ((0, B_pad - B), (0, 0), (left, Tpad - T - left)))
    X2 = xp.reshape(B_pad * C, Tpad).astype(jnp.bfloat16)        # rows (b, c)

    # ---- BN folding --------------------------------------------------------
    def fold_bn(bn):
        g, b, m, v = bn
        s = g / jnp.sqrt(v + eps)
        return s, b - m * s

    s1, o1 = fold_bn(params['bn1'])                   # per F1
    s2, o2 = fold_bn(params['bn2'])                   # per 16
    s3, o3 = fold_bn(params['bn3'])                   # per 16

    wt = params['w_time'].reshape(F1, TIME_K)
    wdw = params['w_dw'].reshape(F1 * D, C)           # [16, C]
    wsd = params['w_sdw'].reshape(F2, SEP_K)
    wpw = params['w_pw'].reshape(F2, F2)

    eye = jnp.eye(Bb, dtype=jnp.float32)

    # depthwise channel mixing with s2 folded; block-diagonal over the batch
    # block: rows (j, b), cols (b, c).
    wdw_s = s2[:, None] * wdw
    WmixBig = (wdw_s[:, None, None, :] * eye[None, :, :, None]
               ).reshape(F1 * D * Bb, Bb * C).astype(jnp.bfloat16)

    # stacked per-filter Toeplitz bands with s1 folded:
    # MtCat[tau, f*T + t] = s1_f * wt[f, tau - t]  for 0 <= tau - t < 64.
    tp = jnp.arange(Tpad)[:, None]
    tt = jnp.arange(T)[None, :]
    kk = tp - tt
    valid = (kk >= 0) & (kk < TIME_K)
    kc = jnp.clip(kk, 0, TIME_K - 1)
    wt_s = wt * s1[:, None]
    MtCat = jnp.transpose(jnp.where(valid[None], wt_s[:, kc], 0.0),
                          (1, 0, 2)).reshape(Tpad, F1 * T).astype(jnp.bfloat16)

    # bias after step 2: BN1 bias pushed through the channel mixing + BN2 bias
    fmap = jnp.arange(F1 * D) // D
    bias2 = s2 * o1[fmap] * jnp.sum(wdw, axis=1) + o2             # [16]
    b2_rep = jnp.repeat(bias2, Bb)[:, None]                       # rows (j, b)

    # avgpool(1,4) + (7,8) same-pad + 16-tap separable depthwise folded per
    # channel: M1[j, t, u] = 0.25 * wsd[j, t//4 + 7 - u] (tap in range);
    # each channel's [T, T4] block is padded to TB lanes and stacked.
    v4 = jnp.arange(T)[:, None] // 4
    uu = jnp.arange(T4)[None, :]
    tap = v4 + (SEP_K - 1) // 2 - uu
    tvalid = (tap >= 0) & (tap < SEP_K)
    tapc = jnp.clip(tap, 0, SEP_K - 1)
    M1 = jnp.where(tvalid[None], 0.25 * wsd[:, tapc], 0.0)        # [F2, T, T4]
    M1 = jnp.pad(M1, ((0, 0), (0, 0), (0, TB - T4)))
    M1cat = jnp.transpose(M1, (1, 0, 2)).reshape(T, F2 * TB).astype(jnp.bfloat16)

    # pointwise conv with s3 folded; maps rows (j, b) -> rows (b, j').
    wpw_s = s3[:, None] * wpw
    WpwBig = (eye[:, None, None, :] * wpw_s[None, :, :, None]
              ).reshape(Bb * F2, F2 * Bb).astype(jnp.bfloat16)
    b3_rep = jnp.tile(o3, Bb)[:, None]                            # rows (b, j')

    # avgpool(1,8) folded into the FC weights, tiled over the batch block,
    # plus the per-batch row-group reduction matrix.
    wfc3 = params['wfc'].reshape(K, F2, T32)
    wfcP = wfc3[:, :, jnp.arange(T4) // 8] / 8.0                  # [K, F2, T4]
    WfcTile = jnp.tile(wfcP, (1, Bb, 1))                          # [K, Bb*F2, T4]
    Srow = jnp.repeat(eye, F2, axis=1)                            # [Bb, Bb*F2]
    bfc = params['bfc'].reshape(1, K)

    def full(a):
        n = a.ndim
        return pl.BlockSpec(a.shape, lambda i: (0,) * n)

    out = pl.pallas_call(
        eegnet_kernel,
        out_shape=jax.ShapeDtypeStruct((nsteps, Bb, K), jnp.float32),
        grid=(nsteps,),
        in_specs=[
            pl.BlockSpec((Bb * C, Tpad), lambda i: (i, 0)),
            full(WmixBig), full(MtCat), full(b2_rep), full(M1cat),
            full(WpwBig), full(b3_rep), full(WfcTile), full(Srow), full(bfc),
        ],
        out_specs=pl.BlockSpec((1, Bb, K), lambda i: (i, 0, 0)),
        compiler_params=pltpu.CompilerParams(
            dimension_semantics=("parallel",),
            vmem_limit_bytes=32 * 1024 * 1024),
    )(X2, WmixBig, MtCat, b2_rep, M1cat, WpwBig, b3_rep, WfcTile, Srow, bfc)
    return out.reshape(B_pad, K)[:B]


# ----------------------------------------------------------------------------
# Deterministic synthetic parameters (glorot-style).
# ----------------------------------------------------------------------------
def build_params(key, n_channels, n_samples, n_classes):
    ks = jax.random.split(key, 6)

    def glorot(k, shape):
        fan_in = int(np.prod(shape[1:]))
        fan_out = int(shape[0] * np.prod(shape[2:])) if len(shape) > 2 else int(shape[0])
        limit = float(np.sqrt(6.0 / (fan_in + fan_out)))
        return jax.random.uniform(k, shape, jnp.float32, -limit, limit)

    feat = F2 * (n_samples // 32)
    params = {
        'w_time': glorot(ks[0], (F1, 1, 1, TIME_K)),           # time_conv
        'w_dw':   glorot(ks[1], (F1 * D, 1, n_channels, 1)),   # depthwise (C,1)
        'w_sdw':  glorot(ks[2], (F2, 1, 1, SEP_K)),            # separable depthwise
        'w_pw':   glorot(ks[3], (F2, F2, 1, 1)),               # separable pointwise
        'wfc':    glorot(ks[4], (n_classes, feat)),
        'bfc':    0.01 * jnp.arange(n_classes, dtype=jnp.float32),
    }

    def bn(n):
        g = jnp.ones((n,), jnp.float32)
        b = jnp.zeros((n,), jnp.float32)
        m = 0.01 * jnp.arange(n, dtype=jnp.float32)
        v = 1.0 + 0.05 * jnp.arange(n, dtype=jnp.float32)
        return (g, b, m, v)

    params['bn1'] = bn(F1)
    params['bn2'] = bn(F1 * D)
    params['bn3'] = bn(F2)
    return params


# ----------------------------------------------------------------------------
# Pure-JAX f32 reference (mirrors the PyTorch NCHW pipeline) for validation.
# ----------------------------------------------------------------------------
def eegnet_reference(x, params, eps=BN_EPS):
    dn = ('NCHW', 'OIHW', 'NCHW')

    def bn_apply(h, bn):
        g, b, m, v = bn
        sh = (1, -1, 1, 1)
        return (h - m.reshape(sh)) * (g / jnp.sqrt(v + eps)).reshape(sh) + b.reshape(sh)

    X = x[:, None, :, :]                                          # [B,1,C,T]
    h = jnp.pad(X, ((0, 0), (0, 0), (0, 0), (31, 32)))
    h = lax.conv_general_dilated(h, params['w_time'], (1, 1), 'VALID', dimension_numbers=dn)
    h = bn_apply(h, params['bn1'])                                # step1 (dropout=id)

    h = lax.conv_general_dilated(h, params['w_dw'], (1, 1), 'VALID',
                                 dimension_numbers=dn, feature_group_count=F1)
    h = bn_apply(h, params['bn2'])
    h = jax.nn.elu(h)
    Bn, Ch, H, W = h.shape
    h = h.reshape(Bn, Ch, H, W // 4, 4).mean(-1)                  # avgpool (1,4)

    h = jnp.pad(h, ((0, 0), (0, 0), (0, 0), (7, 8)))
    h = lax.conv_general_dilated(h, params['w_sdw'], (1, 1), 'VALID',
                                 dimension_numbers=dn, feature_group_count=F2)
    h = lax.conv_general_dilated(h, params['w_pw'], (1, 1), 'VALID', dimension_numbers=dn)
    h = bn_apply(h, params['bn3'])
    h = jax.nn.elu(h)
    Bn, Ch, H, W = h.shape
    h = h.reshape(Bn, Ch, H, W // 8, 8).mean(-1)                  # avgpool (1,8)

    feat = h.reshape(Bn, -1)
    return feat @ params['wfc'].T + params['bfc'][None, :]


if __name__ == "__main__":
    B, C, T, K = 8, 8, 128, 4          # batch, EEG channels, samples, classes
    key = jax.random.PRNGKey(0)
    kx, kp = jax.random.split(key)
    x = jax.random.normal(kx, (B, C, T), jnp.float32)
    params = build_params(kp, C, T, K)

    fwd = jax.jit(eegnet_forward)                 # wrapper is jit-safe
    out = jax.block_until_ready(fwd(x, params))
    ref = jax.block_until_ready(eegnet_reference(x, params))

    # bf16 MXU operands with f32 accumulation -> slightly relaxed tolerance
    # vs. the all-f32 variant (logits are O(0.01-0.05), error ~2e-4 RMS).
    np.testing.assert_allclose(np.asarray(out), np.asarray(ref), rtol=1e-2, atol=4e-3)
    print("KERNEL_OK")
</pallas_src>

<mosaic_0001>
module attributes {stable_mosaic.version = 11 : i64} {
  func.func @eegnet_kernel(%arg0: i32, %arg1: memref<64x256xbf16, #tpu.memory_space<vmem>>, %arg2: memref<128x64xbf16, #tpu.memory_space<vmem>>, %arg3: memref<256x1024xbf16, #tpu.memory_space<vmem>>, %arg4: memref<128x1xf32, #tpu.memory_space<vmem>>, %arg5: memref<128x2048xbf16, #tpu.memory_space<vmem>>, %arg6: memref<128x128xbf16, #tpu.memory_space<vmem>>, %arg7: memref<128x1xf32, #tpu.memory_space<vmem>>, %arg8: memref<4x128x32xf32, #tpu.memory_space<vmem>>, %arg9: memref<8x128xf32, #tpu.memory_space<vmem>>, %arg10: memref<1x4xf32, #tpu.memory_space<vmem>>, %arg11: memref<1x8x4xf32, #tpu.memory_space<vmem>>) attributes {dimension_semantics = [#tpu.dimension_semantics<parallel>], iteration_bounds = array<i64: 1>, scalar_prefetch = 0 : i64, scratch_operands = 0 : i64, tpu.core_type = #tpu.core_type<tc>, window_params = [{transform_indices = @transform_0, window_bounds = array<i64: 64, 256>}, {pipeline_mode = #tpu.pipeline_mode<synchronous>, transform_indices = @transform_1, window_bounds = array<i64: 128, 64>}, {pipeline_mode = #tpu.pipeline_mode<synchronous>, transform_indices = @transform_2, window_bounds = array<i64: 256, 1024>}, {pipeline_mode = #tpu.pipeline_mode<synchronous>, transform_indices = @transform_3, window_bounds = array<i64: 128, 1>}, {pipeline_mode = #tpu.pipeline_mode<synchronous>, transform_indices = @transform_4, window_bounds = array<i64: 128, 2048>}, {pipeline_mode = #tpu.pipeline_mode<synchronous>, transform_indices = @transform_5, window_bounds = array<i64: 128, 128>}, {pipeline_mode = #tpu.pipeline_mode<synchronous>, transform_indices = @transform_6, window_bounds = array<i64: 128, 1>}, {pipeline_mode = #tpu.pipeline_mode<synchronous>, transform_indices = @transform_7, window_bounds = array<i64: 4, 128, 32>}, {pipeline_mode = #tpu.pipeline_mode<synchronous>, transform_indices = @transform_8, window_bounds = array<i64: 8, 128>}, {pipeline_mode = #tpu.pipeline_mode<synchronous>, transform_indices = @transform_9, window_bounds = array<i64: 1, 4>}, {transform_indices = @transform_10, window_bounds = array<i64: 1, 8, 4>}]} {
    %c0 = arith.constant 0 : index
    %c0_0 = arith.constant 0 : index
    %0 = vector.load %arg2[%c0, %c0_0] : memref<128x64xbf16, #tpu.memory_space<vmem>>, vector<128x64xbf16>
    %c0_1 = arith.constant 0 : index
    %c0_2 = arith.constant 0 : index
    %1 = vector.load %arg1[%c0_1, %c0_2] : memref<64x256xbf16, #tpu.memory_space<vmem>>, vector<64x256xbf16>
    %cst = arith.constant dense<0.000000e+00> : vector<128x256xf32>
    %2 = tpu.matmul %0, %1, %cst {dimension_numbers = #tpu.dot_dimension_numbers<[1], [0], [0], [1], [0, 0, 1, 1], [], []>} : vector<128x64xbf16>, vector<64x256xbf16>, vector<128x256xf32> -> vector<128x256xf32>
    %3 = arith.truncf %2 : vector<128x256xf32> to vector<128x256xbf16>
    %c0_3 = arith.constant 0 : index
    %c0_4 = arith.constant 0 : index
    %4 = vector.load %arg3[%c0_3, %c0_4] : memref<256x1024xbf16, #tpu.memory_space<vmem>>, vector<256x1024xbf16>
    %cst_5 = arith.constant dense<0.000000e+00> : vector<128x1024xf32>
    %5 = tpu.matmul %3, %4, %cst_5 {dimension_numbers = #tpu.dot_dimension_numbers<[1], [0], [0], [1], [0, 0, 1, 1], [], []>} : vector<128x256xbf16>, vector<256x1024xbf16>, vector<128x1024xf32> -> vector<128x1024xf32>
    %6 = vector.extract_strided_slice %5 {offsets = [0, 0], sizes = [16, 128], strides = [1, 1]} : vector<128x1024xf32> to vector<16x128xf32>
    %7 = vector.extract_strided_slice %5 {offsets = [16, 128], sizes = [16, 128], strides = [1, 1]} : vector<128x1024xf32> to vector<16x128xf32>
    %8 = vector.extract_strided_slice %5 {offsets = [32, 256], sizes = [16, 128], strides = [1, 1]} : vector<128x1024xf32> to vector<16x128xf32>
    %9 = vector.extract_strided_slice %5 {offsets = [48, 384], sizes = [16, 128], strides = [1, 1]} : vector<128x1024xf32> to vector<16x128xf32>
    %10 = vector.extract_strided_slice %5 {offsets = [64, 512], sizes = [16, 128], strides = [1, 1]} : vector<128x1024xf32> to vector<16x128xf32>
    %11 = vector.extract_strided_slice %5 {offsets = [80, 640], sizes = [16, 128], strides = [1, 1]} : vector<128x1024xf32> to vector<16x128xf32>
    %12 = vector.extract_strided_slice %5 {offsets = [96, 768], sizes = [16, 128], strides = [1, 1]} : vector<128x1024xf32> to vector<16x128xf32>
    %13 = vector.extract_strided_slice %5 {offsets = [112, 896], sizes = [16, 128], strides = [1, 1]} : vector<128x1024xf32> to vector<16x128xf32>
    %14 = tpu.concatenate %6, %7, %8, %9, %10, %11, %12, %13 in 0 : vector<16x128xf32>, vector<16x128xf32>, vector<16x128xf32>, vector<16x128xf32>, vector<16x128xf32>, vector<16x128xf32>, vector<16x128xf32>, vector<16x128xf32> -> vector<128x128xf32>
    %c0_6 = arith.constant 0 : index
    %c0_7 = arith.constant 0 : index
    %15 = vector.load %arg4[%c0_6, %c0_7] : memref<128x1xf32, #tpu.memory_space<vmem>>, vector<128x1xf32>
    %16 = vector.broadcast %15 : vector<128x1xf32> to vector<128x128xf32>
    %17 = arith.addf %14, %16 : vector<128x128xf32>
    %cst_8 = arith.constant 0.000000e+00 : f32
    %18 = vector.broadcast %cst_8 : f32 to vector<128x128xf32>
    %19 = arith.cmpf ogt, %17, %18 : vector<128x128xf32>
    %cst_9 = arith.constant 0.000000e+00 : f32
    %20 = vector.broadcast %cst_9 : f32 to vector<128x128xf32>
    %21 = arith.minimumf %17, %20 : vector<128x128xf32>
    %22 = math.exp %21 : vector<128x128xf32>
    %cst_10 = arith.constant 1.000000e+00 : f32
    %23 = vector.broadcast %cst_10 : f32 to vector<128x128xf32>
    %24 = arith.subf %22, %23 : vector<128x128xf32>
    %25 = arith.select %19, %17, %24 : vector<128x128xi1>, vector<128x128xf32>
    %26 = arith.truncf %25 : vector<128x128xf32> to vector<128x128xbf16>
    %c0_11 = arith.constant 0 : index
    %c0_12 = arith.constant 0 : index
    %27 = vector.load %arg5[%c0_11, %c0_12] : memref<128x2048xbf16, #tpu.memory_space<vmem>>, vector<128x2048xbf16>
    %cst_13 = arith.constant dense<0.000000e+00> : vector<128x2048xf32>
    %28 = tpu.matmul %26, %27, %cst_13 {dimension_numbers = #tpu.dot_dimension_numbers<[1], [0], [0], [1], [0, 0, 1, 1], [], []>} : vector<128x128xbf16>, vector<128x2048xbf16>, vector<128x2048xf32> -> vector<128x2048xf32>
    %29 = vector.extract_strided_slice %28 {offsets = [0, 0], sizes = [8, 32], strides = [1, 1]} : vector<128x2048xf32> to vector<8x32xf32>
    %30 = vector.extract_strided_slice %28 {offsets = [8, 128], sizes = [8, 32], strides = [1, 1]} : vector<128x2048xf32> to vector<8x32xf32>
    %31 = vector.extract_strided_slice %28 {offsets = [16, 256], sizes = [8, 32], strides = [1, 1]} : vector<128x2048xf32> to vector<8x32xf32>
    %32 = vector.extract_strided_slice %28 {offsets = [24, 384], sizes = [8, 32], strides = [1, 1]} : vector<128x2048xf32> to vector<8x32xf32>
    %33 = vector.extract_strided_slice %28 {offsets = [32, 512], sizes = [8, 32], strides = [1, 1]} : vector<128x2048xf32> to vector<8x32xf32>
    %34 = vector.extract_strided_slice %28 {offsets = [40, 640], sizes = [8, 32], strides = [1, 1]} : vector<128x2048xf32> to vector<8x32xf32>
    %35 = vector.extract_strided_slice %28 {offsets = [48, 768], sizes = [8, 32], strides = [1, 1]} : vector<128x2048xf32> to vector<8x32xf32>
    %36 = vector.extract_strided_slice %28 {offsets = [56, 896], sizes = [8, 32], strides = [1, 1]} : vector<128x2048xf32> to vector<8x32xf32>
    %37 = vector.extract_strided_slice %28 {offsets = [64, 1024], sizes = [8, 32], strides = [1, 1]} : vector<128x2048xf32> to vector<8x32xf32>
    %38 = vector.extract_strided_slice %28 {offsets = [72, 1152], sizes = [8, 32], strides = [1, 1]} : vector<128x2048xf32> to vector<8x32xf32>
    %39 = vector.extract_strided_slice %28 {offsets = [80, 1280], sizes = [8, 32], strides = [1, 1]} : vector<128x2048xf32> to vector<8x32xf32>
    %40 = vector.extract_strided_slice %28 {offsets = [88, 1408], sizes = [8, 32], strides = [1, 1]} : vector<128x2048xf32> to vector<8x32xf32>
    %41 = vector.extract_strided_slice %28 {offsets = [96, 1536], sizes = [8, 32], strides = [1, 1]} : vector<128x2048xf32> to vector<8x32xf32>
    %42 = vector.extract_strided_slice %28 {offsets = [104, 1664], sizes = [8, 32], strides = [1, 1]} : vector<128x2048xf32> to vector<8x32xf32>
    %43 = vector.extract_strided_slice %28 {offsets = [112, 1792], sizes = [8, 32], strides = [1, 1]} : vector<128x2048xf32> to vector<8x32xf32>
    %44 = vector.extract_strided_slice %28 {offsets = [120, 1920], sizes = [8, 32], strides = [1, 1]} : vector<128x2048xf32> to vector<8x32xf32>
    %45 = tpu.concatenate %29, %30, %31, %32, %33, %34, %35, %36, %37, %38, %39, %40, %41, %42, %43, %44 in 0 : vector<8x32xf32>, vector<8x32xf32>, vector<8x32xf32>, vector<8x32xf32>, vector<8x32xf32>, vector<8x32xf32>, vector<8x32xf32>, vector<8x32xf32>, vector<8x32xf32>, vector<8x32xf32>, vector<8x32xf32>, vector<8x32xf32>, vector<8x32xf32>, vector<8x32xf32>, vector<8x32xf32>, vector<8x32xf32> -> vector<128x32xf32>
    %c0_14 = arith.constant 0 : index
    %c0_15 = arith.constant 0 : index
    %46 = vector.load %arg6[%c0_14, %c0_15] : memref<128x128xbf16, #tpu.memory_space<vmem>>, vector<128x128xbf16>
    %47 = arith.truncf %45 : vector<128x32xf32> to vector<128x32xbf16>
    %cst_16 = arith.constant dense<0.000000e+00> : vector<128x32xf32>
    %48 = tpu.matmul %46, %47, %cst_16 {dimension_numbers = #tpu.dot_dimension_numbers<[1], [0], [0], [1], [0, 0, 1, 1], [], []>} : vector<128x128xbf16>, vector<128x32xbf16>, vector<128x32xf32> -> vector<128x32xf32>
    %c0_17 = arith.constant 0 : index
    %c0_18 = arith.constant 0 : index
    %49 = vector.load %arg7[%c0_17, %c0_18] : memref<128x1xf32, #tpu.memory_space<vmem>>, vector<128x1xf32>
    %50 = vector.broadcast %49 : vector<128x1xf32> to vector<128x32xf32>
    %51 = arith.addf %48, %50 : vector<128x32xf32>
    %cst_19 = arith.constant 0.000000e+00 : f32
    %52 = vector.broadcast %cst_19 : f32 to vector<128x32xf32>
    %53 = arith.cmpf ogt, %51, %52 : vector<128x32xf32>
    %cst_20 = arith.constant 0.000000e+00 : f32
    %54 = vector.broadcast %cst_20 : f32 to vector<128x32xf32>
    %55 = arith.minimumf %51, %54 : vector<128x32xf32>
    %56 = math.exp %55 : vector<128x32xf32>
    %cst_21 = arith.constant 1.000000e+00 : f32
    %57 = vector.broadcast %cst_21 : f32 to vector<128x32xf32>
    %58 = arith.subf %56, %57 : vector<128x32xf32>
    %59 = arith.select %53, %51, %58 : vector<128x32xi1>, vector<128x32xf32>
    %c0_22 = arith.constant 0 : index
    %c0_23 = arith.constant 0 : index
    %c0_24 = arith.constant 0 : index
    %60 = vector.load %arg8[%c0_22, %c0_23, %c0_24] : memref<4x128x32xf32, #tpu.memory_space<vmem>>, vector<1x128x32xf32>
    %61 = vector.shape_cast %60 : vector<1x128x32xf32> to vector<128x32xf32>
    %62 = arith.mulf %59, %61 : vector<128x32xf32>
    %cst_25 = arith.constant dense<0.000000e+00> : vector<128xf32>
    %63 = vector.multi_reduction <add>, %62, %cst_25 [1] : vector<128x32xf32> to vector<128xf32>
    %64 = vector.shape_cast %63 : vector<128xf32> to vector<128x1xf32>
    %c1 = arith.constant 1 : index
    %c0_26 = arith.constant 0 : index
    %c0_27 = arith.constant 0 : index
    %65 = vector.load %arg8[%c1, %c0_26, %c0_27] : memref<4x128x32xf32, #tpu.memory_space<vmem>>, vector<1x128x32xf32>
    %66 = vector.shape_cast %65 : vector<1x128x32xf32> to vector<128x32xf32>
    %67 = arith.mulf %59, %66 : vector<128x32xf32>
    %cst_28 = arith.constant dense<0.000000e+00> : vector<128xf32>
    %68 = vector.multi_reduction <add>, %67, %cst_28 [1] : vector<128x32xf32> to vector<128xf32>
    %69 = vector.shape_cast %68 : vector<128xf32> to vector<128x1xf32>
    %c2 = arith.constant 2 : index
    %c0_29 = arith.constant 0 : index
    %c0_30 = arith.constant 0 : index
    %70 = vector.load %arg8[%c2, %c0_29, %c0_30] : memref<4x128x32xf32, #tpu.memory_space<vmem>>, vector<1x128x32xf32>
    %71 = vector.shape_cast %70 : vector<1x128x32xf32> to vector<128x32xf32>
    %72 = arith.mulf %59, %71 : vector<128x32xf32>
    %cst_31 = arith.constant dense<0.000000e+00> : vector<128xf32>
    %73 = vector.multi_reduction <add>, %72, %cst_31 [1] : vector<128x32xf32> to vector<128xf32>
    %74 = vector.shape_cast %73 : vector<128xf32> to vector<128x1xf32>
    %c3 = arith.constant 3 : index
    %c0_32 = arith.constant 0 : index
    %c0_33 = arith.constant 0 : index
    %75 = vector.load %arg8[%c3, %c0_32, %c0_33] : memref<4x128x32xf32, #tpu.memory_space<vmem>>, vector<1x128x32xf32>
    %76 = vector.shape_cast %75 : vector<1x128x32xf32> to vector<128x32xf32>
    %77 = arith.mulf %59, %76 : vector<128x32xf32>
    %cst_34 = arith.constant dense<0.000000e+00> : vector<128xf32>
    %78 = vector.multi_reduction <add>, %77, %cst_34 [1] : vector<128x32xf32> to vector<128xf32>
    %79 = vector.shape_cast %78 : vector<128xf32> to vector<128x1xf32>
    %80 = tpu.concatenate %64, %69, %74, %79 in 1 : vector<128x1xf32>, vector<128x1xf32>, vector<128x1xf32>, vector<128x1xf32> -> vector<128x4xf32>
    %c0_35 = arith.constant 0 : index
    %c0_36 = arith.constant 0 : index
    %81 = vector.load %arg9[%c0_35, %c0_36] : memref<8x128xf32, #tpu.memory_space<vmem>>, vector<8x128xf32>
    %cst_37 = arith.constant dense<0.000000e+00> : vector<8x4xf32>
    %82 = tpu.matmul %81, %80, %cst_37 {dimension_numbers = #tpu.dot_dimension_numbers<[1], [0], [0], [1], [0, 0, 1, 1], [], []>} : vector<8x128xf32>, vector<128x4xf32>, vector<8x4xf32> -> vector<8x4xf32>
    %c0_38 = arith.constant 0 : index
    %c0_39 = arith.constant 0 : index
    %83 = vector.load %arg10[%c0_38, %c0_39] : memref<1x4xf32, #tpu.memory_space<vmem>>, vector<1x4xf32>
    %84 = vector.broadcast %83 : vector<1x4xf32> to vector<8x4xf32>
    %85 = arith.addf %82, %84 : vector<8x4xf32>
    %86 = vector.shape_cast %85 : vector<8x4xf32> to vector<1x8x4xf32>
    %c0_40 = arith.constant 0 : index
    %c0_41 = arith.constant 0 : index
    %c0_42 = arith.constant 0 : index
    %87 = vector.load %arg11[%c0_40, %c0_41, %c0_42] : memref<1x8x4xf32, #tpu.memory_space<vmem>>, vector<1x8x4xf32>
    tpu.vector_store %arg11[%c0_40, %c0_41, %c0_42], %86 {strides = array<i32>} : memref<1x8x4xf32, #tpu.memory_space<vmem>>, vector<1x8x4xf32>,
    return
  }
  func.func @transform_0(%arg0: i32) -> (i32, i32) {
    %c0_i32 = arith.constant 0 : i32
    %c0_i32_0 = arith.constant 0 : i32
    return %arg0, %c0_i32 : i32, i32
  }
  func.func @transform_1(%arg0: i32) -> (i32, i32) {
    %c0_i32 = arith.constant 0 : i32
    %c0_i32_0 = arith.constant 0 : i32
    %c0_i32_1 = arith.constant 0 : i32
    return %c0_i32, %c0_i32_0 : i32, i32
  }
  func.func @transform_2(%arg0: i32) -> (i32, i32) {
    %c0_i32 = arith.constant 0 : i32
    %c0_i32_0 = arith.constant 0 : i32
    %c0_i32_1 = arith.constant 0 : i32
    return %c0_i32, %c0_i32_0 : i32, i32
  }
  func.func @transform_3(%arg0: i32) -> (i32, i32) {
    %c0_i32 = arith.constant 0 : i32
    %c0_i32_0 = arith.constant 0 : i32
    %c0_i32_1 = arith.constant 0 : i32
    return %c0_i32, %c0_i32_0 : i32, i32
  }
  func.func @transform_4(%arg0: i32) -> (i32, i32) {
    %c0_i32 = arith.constant 0 : i32
    %c0_i32_0 = arith.constant 0 : i32
    %c0_i32_1 = arith.constant 0 : i32
    return %c0_i32, %c0_i32_0 : i32, i32
  }
  func.func @transform_5(%arg0: i32) -> (i32, i32) {
    %c0_i32 = arith.constant 0 : i32
    %c0_i32_0 = arith.constant 0 : i32
    %c0_i32_1 = arith.constant 0 : i32
    return %c0_i32, %c0_i32_0 : i32, i32
  }
  func.func @transform_6(%arg0: i32) -> (i32, i32) {
    %c0_i32 = arith.constant 0 : i32
    %c0_i32_0 = arith.constant 0 : i32
    %c0_i32_1 = arith.constant 0 : i32
    return %c0_i32, %c0_i32_0 : i32, i32
  }
  func.func @transform_7(%arg0: i32) -> (i32, i32, i32) {
    %c0_i32 = arith.constant 0 : i32
    %c0_i32_0 = arith.constant 0 : i32
    %c0_i32_1 = arith.constant 0 : i32
    %c0_i32_2 = arith.constant 0 : i32
    return %c0_i32, %c0_i32_0, %c0_i32_1 : i32, i32, i32
  }
  func.func @transform_8(%arg0: i32) -> (i32, i32) {
    %c0_i32 = arith.constant 0 : i32
    %c0_i32_0 = arith.constant 0 : i32
    %c0_i32_1 = arith.constant 0 : i32
    return %c0_i32, %c0_i32_0 : i32, i32
  }
  func.func @transform_9(%arg0: i32) -> (i32, i32) {
    %c0_i32 = arith.constant 0 : i32
    %c0_i32_0 = arith.constant 0 : i32
    %c0_i32_1 = arith.constant 0 : i32
    return %c0_i32, %c0_i32_0 : i32, i32
  }
  func.func @transform_10(%arg0: i32) -> (i32, i32, i32) {
    %c0_i32 = arith.constant 0 : i32
    %c0_i32_0 = arith.constant 0 : i32
    %c0_i32_1 = arith.constant 0 : i32
    return %arg0, %c0_i32, %c0_i32_0 : i32, i32, i32
  }
}

</mosaic_0001>

<llo_original>
// kernel: tile.13
$region0: #{tile.13}
  #allocation0 [shape = 's32[1]{0}', space=sflag, size = 0x4, scoped, tag = 'scoped memory for tile.13']
  %s0 = inlined_call_operand.vmem [shape: f32[16], index: 0, kind: input, shape index: {}]
  %s1 = inlined_call_operand.vmem [shape: f32[8,16], index: 1, kind: output, shape index: {}]
  // Predicated region
  $region2: #{tile.13} parent=0 // pred_check
    _
  $region3: #{tile.13} parent=0 // pred_check_branch
    %3 = sbr.rel (0) target = $region5
  $region4: #{tile.13} parent=0 // pred_region
    _
  $region5: #{tile.13} parent=0 // pred_fallthru
    _
  %v4 = vld [vmem:[%s0] ss:$0 sm:$0xff]
  %5 = vst [vmem:[%s1] sm:$0xff] %v4

// kernel: tile.0
$region0: #{tile.0}
  %s0 = inlined_call_operand.vmem [shape: f32[8,16], index: 0, kind: input, shape index: {}]
  %s1 = inlined_call_operand.vmem [shape: f32[128,1], index: 1, kind: output, shape index: {}]
  %v2 = vld [vmem:[%s0] sm:$0xff]
  %vm3 = vcmask 7168
  %4 = vst.msk [vmem:[%s1] ss:$16 sm:$0x3] %vm3, %v2
  %5 = vst.msk [vmem:[%s1] ss:$16 sm:$0xc] %vm3, %v2
  %6 = vst.msk [vmem:[%s1] ss:$16 sm:$0x30] %vm3, %v2
  %7 = vst.msk [vmem:[%s1] ss:$16 sm:$0xc0] %vm3, %v2
  %v8 = vld [vmem:[%s0] sm:$0xff]
  %9 = vrot.lane.b32.xlu0 %v8, 127
  %v10 = vpop.permute.xlu0 %9
  %vm11 = vcmask 7168
  %s12 = scalar_lea.vmem %s1, 1
  %13 = vst.msk [vmem:[%s12] ss:$16 sm:$0x3] %vm11, %v10
  %s14 = scalar_lea.vmem %s1, 1
  %15 = vst.msk [vmem:[%s14] ss:$16 sm:$0xc] %vm11, %v10
  %s16 = scalar_lea.vmem %s1, 1
  %17 = vst.msk [vmem:[%s16] ss:$16 sm:$0x30] %vm11, %v10
  %s18 = scalar_lea.vmem %s1, 1
  %19 = vst.msk [vmem:[%s18] ss:$16 sm:$0xc0] %vm11, %v10
  %v20 = vld [vmem:[%s0] sm:$0xff]
  %21 = vrot.lane.b32.xlu0 %v20, 126
  %v22 = vpop.permute.xlu0 %21
  %vm23 = vcmask 7168
  %s24 = scalar_lea.vmem %s1, 2
  %25 = vst.msk [vmem:[%s24] ss:$16 sm:$0x3] %vm23, %v22
  %s26 = scalar_lea.vmem %s1, 2
  %27 = vst.msk [vmem:[%s26] ss:$16 sm:$0xc] %vm23, %v22
  %s28 = scalar_lea.vmem %s1, 2
  %29 = vst.msk [vmem:[%s28] ss:$16 sm:$0x30] %vm23, %v22
  %s30 = scalar_lea.vmem %s1, 2
  %31 = vst.msk [vmem:[%s30] ss:$16 sm:$0xc0] %vm23, %v22
  %v32 = vld [vmem:[%s0] sm:$0xff]
  %33 = vrot.lane.b32.xlu0 %v32, 125
  %v34 = vpop.permute.xlu0 %33
  %vm35 = vcmask 7168
  %s36 = scalar_lea.vmem %s1, 3
  %37 = vst.msk [vmem:[%s36] ss:$16 sm:$0x3] %vm35, %v34
  %s38 = scalar_lea.vmem %s1, 3
  %39 = vst.msk [vmem:[%s38] ss:$16 sm:$0xc] %vm35, %v34
  %s40 = scalar_lea.vmem %s1, 3
  %41 = vst.msk [vmem:[%s40] ss:$16 sm:$0x30] %vm35, %v34
  %s42 = scalar_lea.vmem %s1, 3
  %43 = vst.msk [vmem:[%s42] ss:$16 sm:$0xc0] %vm35, %v34
  %v44 = vld [vmem:[%s0] sm:$0xff]
  %45 = vrot.lane.b32.xlu0 %v44, 124
  %v46 = vpop.permute.xlu0 %45
  %vm47 = vcmask 7168
  %s48 = scalar_lea.vmem %s1, 4
  %49 = vst.msk [vmem:[%s48] ss:$16 sm:$0x3] %vm47, %v46
  %s50 = scalar_lea.vmem %s1, 4
  %51 = vst.msk [vmem:[%s50] ss:$16 sm:$0xc] %vm47, %v46
  %s52 = scalar_lea.vmem %s1, 4
  %53 = vst.msk [vmem:[%s52] ss:$16 sm:$0x30] %vm47, %v46
  %s54 = scalar_lea.vmem %s1, 4
  %55 = vst.msk [vmem:[%s54] ss:$16 sm:$0xc0] %vm47, %v46
  %v56 = vld [vmem:[%s0] sm:$0xff]
  %57 = vrot.lane.b32.xlu0 %v56, 123
  %v58 = vpop.permute.xlu0 %57
  %vm59 = vcmask 7168
  %s60 = scalar_lea.vmem %s1, 5
  %61 = vst.msk [vmem:[%s60] ss:$16 sm:$0x3] %vm59, %v58
  %s62 = scalar_lea.vmem %s1, 5
  %63 = vst.msk [vmem:[%s62] ss:$16 sm:$0xc] %vm59, %v58
  %s64 = scalar_lea.vmem %s1, 5
  %65 = vst.msk [vmem:[%s64] ss:$16 sm:$0x30] %vm59, %v58
  %s66 = scalar_lea.vmem %s1, 5
  %67 = vst.msk [vmem:[%s66] ss:$16 sm:$0xc0] %vm59, %v58
  %v68 = vld [vmem:[%s0] sm:$0xff]
  %69 = vrot.lane.b32.xlu0 %v68, 122
  %v70 = vpop.permute.xlu0 %69
  %vm71 = vcmask 7168
  %s72 = scalar_lea.vmem %s1, 6
  %73 = vst.msk [vmem:[%s72] ss:$16 sm:$0x3] %vm71, %v70
  %s74 = scalar_lea.vmem %s1, 6
  %75 = vst.msk [vmem:[%s74] ss:$16 sm:$0xc] %vm71, %v70
  %s76 = scalar_lea.vmem %s1, 6
  %77 = vst.msk [vmem:[%s76] ss:$16 sm:$0x30] %vm71, %v70
  %s78 = scalar_lea.vmem %s1, 6
  %79 = vst.msk [vmem:[%s78] ss:$16 sm:$0xc0] %vm71, %v70
  %v80 = vld [vmem:[%s0] sm:$0xff]
  %81 = vrot.lane.b32.xlu0 %v80, 121
  %v82 = vpop.permute.xlu0 %81
  %vm83 = vcmask 7168
  %s84 = scalar_lea.vmem %s1, 7
  %85 = vst.msk [vmem:[%s84] ss:$16 sm:$0x3] %vm83, %v82
  %s86 = scalar_lea.vmem %s1, 7
  %87 = vst.msk [vmem:[%s86] ss:$16 sm:$0xc] %vm83, %v82
  %s88 = scalar_lea.vmem %s1, 7
  %89 = vst.msk [vmem:[%s88] ss:$16 sm:$0x30] %vm83, %v82
  %s90 = scalar_lea.vmem %s1, 7
  %91 = vst.msk [vmem:[%s90] ss:$16 sm:$0xc0] %vm83, %v82
  %v92 = vld [vmem:[%s0] sm:$0xff]
  %93 = vrot.lane.b32.xlu0 %v92, 120
  %v94 = vpop.permute.xlu0 %93
  %vm95 = vcmask 7168
  %s96 = scalar_lea.vmem %s1, 8
  %97 = vst.msk [vmem:[%s96] ss:$16 sm:$0x3] %vm95, %v94
  %s98 = scalar_lea.vmem %s1, 8
  %99 = vst.msk [vmem:[%s98] ss:$16 sm:$0xc] %vm95, %v94
  %s100 = scalar_lea.vmem %s1, 8
  %101 = vst.msk [vmem:[%s100] ss:$16 sm:$0x30] %vm95, %v94
  %s102 = scalar_lea.vmem %s1, 8
  %103 = vst.msk [vmem:[%s102] ss:$16 sm:$0xc0] %vm95, %v94
  %v104 = vld [vmem:[%s0] sm:$0xff]
  %105 = vrot.lane.b32.xlu0 %v104, 119
  %v106 = vpop.permute.xlu0 %105
  %vm107 = vcmask 7168
  %s108 = scalar_lea.vmem %s1, 9
  %109 = vst.msk [vmem:[%s108] ss:$16 sm:$0x3] %vm107, %v106
  %s110 = scalar_lea.vmem %s1, 9
  %111 = vst.msk [vmem:[%s110] ss:$16 sm:$0xc] %vm107, %v106
  %s112 = scalar_lea.vmem %s1, 9
  %113 = vst.msk [vmem:[%s112] ss:$16 sm:$0x30] %vm107, %v106
  %s114 = scalar_lea.vmem %s1, 9
  %115 = vst.msk [vmem:[%s114] ss:$16 sm:$0xc0] %vm107, %v106
  %v116 = vld [vmem:[%s0] sm:$0xff]
  %117 = vrot.lane.b32.xlu0 %v116, 118
  %v118 = vpop.permute.xlu0 %117
  %vm119 = vcmask 7168
  %s120 = scalar_lea.vmem %s1, 10
  %121 = vst.msk [vmem:[%s120] ss:$16 sm:$0x3] %vm119, %v118
  %s122 = scalar_lea.vmem %s1, 10
  %123 = vst.msk [vmem:[%s122] ss:$16 sm:$0xc] %vm119, %v118
  %s124 = scalar_lea.vmem %s1, 10
  %125 = vst.msk [vmem:[%s124] ss:$16 sm:$0x30] %vm119, %v118
  %s126 = scalar_lea.vmem %s1, 10
  %127 = vst.msk [vmem:[%s126] ss:$16 sm:$0xc0] %vm119, %v118
  %v128 = vld [vmem:[%s0] sm:$0xff]
  %129 = vrot.lane.b32.xlu0 %v128, 117
  %v130 = vpop.permute.xlu0 %129
  %vm131 = vcmask 7168
  %s132 = scalar_lea.vmem %s1, 11
  %133 = vst.msk [vmem:[%s132] ss:$16 sm:$0x3] %vm131, %v130
  %s134 = scalar_lea.vmem %s1, 11
  %135 = vst.msk [vmem:[%s134] ss:$16 sm:$0xc] %vm131, %v130
  %s136 = scalar_lea.vmem %s1, 11
  %137 = vst.msk [vmem:[%s136] ss:$16 sm:$0x30] %vm131, %v130
  %s138 = scalar_lea.vmem %s1, 11
  %139 = vst.msk [vmem:[%s138] ss:$16 sm:$0xc0] %vm131, %v130
  %v140 = vld [vmem:[%s0] sm:$0xff]
  %141 = vrot.lane.b32.xlu0 %v140, 116
  %v142 = vpop.permute.xlu0 %141
  %vm143 = vcmask 7168
  %s144 = scalar_lea.vmem %s1, 12
  %145 = vst.msk [vmem:[%s144] ss:$16 sm:$0x3] %vm143, %v142
  %s146 = scalar_lea.vmem %s1, 12
  %147 = vst.msk [vmem:[%s146] ss:$16 sm:$0xc] %vm143, %v142
  %s148 = scalar_lea.vmem %s1, 12
  %149 = vst.msk [vmem:[%s148] ss:$16 sm:$0x30] %vm143, %v142
  %s150 = scalar_lea.vmem %s1, 12
  %151 = vst.msk [vmem:[%s150] ss:$16 sm:$0xc0] %vm143, %v142
  %v152 = vld [vmem:[%s0] sm:$0xff]
  %153 = vrot.lane.b32.xlu0 %v152, 115
  %v154 = vpop.permute.xlu0 %153
  %vm155 = vcmask 7168
  %s156 = scalar_lea.vmem %s1, 13
  %157 = vst.msk [vmem:[%s156] ss:$16 sm:$0x3] %vm155, %v154
  %s158 = scalar_lea.vmem %s1, 13
  %159 = vst.msk [vmem:[%s158] ss:$16 sm:$0xc] %vm155, %v154
  %s160 = scalar_lea.vmem %s1, 13
  %161 = vst.msk [vmem:[%s160] ss:$16 sm:$0x30] %vm155, %v154
  %s162 = scalar_lea.vmem %s1, 13
  %163 = vst.msk [vmem:[%s162] ss:$16 sm:$0xc0] %vm155, %v154
  %v164 = vld [vmem:[%s0] sm:$0xff]
  %165 = vrot.lane.b32.xlu0 %v164, 114
  %v166 = vpop.permute.xlu0 %165
  %vm167 = vcmask 7168
  %s168 = scalar_lea.vmem %s1, 14
  %169 = vst.msk [vmem:[%s168] ss:$16 sm:$0x3] %vm167, %v166
  %s170 = scalar_lea.vmem %s1, 14
  %171 = vst.msk [vmem:[%s170] ss:$16 sm:$0xc] %vm167, %v166
  %s172 = scalar_lea.vmem %s1, 14
  %173 = vst.msk [vmem:[%s172] ss:$16 sm:$0x30] %vm167, %v166
  %s174 = scalar_lea.vmem %s1, 14
  %175 = vst.msk [vmem:[%s174] ss:$16 sm:$0xc0] %vm167, %v166
  %v176 = vld [vmem:[%s0] sm:$0xff]
  %177 = vrot.lane.b32.xlu0 %v176, 113
  %v178 = vpop.permute.xlu0 %177
  %vm179 = vcmask 7168
  %s180 = scalar_lea.vmem %s1, 15
  %181 = vst.msk [vmem:[%s180] ss:$16 sm:$0x3] %vm179, %v178
  %s182 = scalar_lea.vmem %s1, 15
  %183 = vst.msk [vmem:[%s182] ss:$16 sm:$0xc] %vm179, %v178
  %s184 = scalar_lea.vmem %s1, 15
  %185 = vst.msk [vmem:[%s184] ss:$16 sm:$0x30] %vm179, %v178
  %s186 = scalar_lea.vmem %s1, 15
  %187 = vst.msk [vmem:[%s186] ss:$16 sm:$0xc0] %vm179, %v178

// kernel: eegnet_forward.1
$region0: #{eegnet_forward.1}
  #allocation0 [shape = 'u32[]', space=smem, size = 0x4, offset = 0x4, fixed_abs, tag = 'smem constant byte address 0x4 - core index']
  #allocation1 [shape = 'u32[144,128]{1,0:T(1,128)}', space=vmem, size = 0x12000, scoped, tag = 'internal scratch']
  %s0 = inlined_call_operand.vmem [shape: bf16[64,256], index: 0, kind: input, shape index: {}]
  %s1 = inlined_call_operand.vmem [shape: bf16[128,64], index: 1, kind: input, shape index: {}]
  %s2 = inlined_call_operand.vmem [shape: bf16[256,1024], index: 2, kind: input, shape index: {}]
  %s3 = inlined_call_operand.vmem [shape: f32[128,1], index: 3, kind: input, shape index: {}]
  %s4 = inlined_call_operand.vmem [shape: bf16[128,2048], index: 4, kind: input, shape index: {}]
  %s5 = inlined_call_operand.vmem [shape: bf16[128,128], index: 5, kind: input, shape index: {}]
  %s6 = inlined_call_operand.vmem [shape: f32[128,1], index: 6, kind: input, shape index: {}]
  %s7 = inlined_call_operand.vmem [shape: f32[4,128,32], index: 7, kind: input, shape index: {}]
  %s8 = inlined_call_operand.vmem [shape: f32[8,128], index: 8, kind: input, shape index: {}]
  %s9 = inlined_call_operand.vmem [shape: f32[1,4], index: 9, kind: input, shape index: {}]
  %s10 = inlined_call_operand.vmem [shape: f32[1,8,4], index: 10, kind: output, shape index: {}]
  %s11 = sld [smem:[#allocation0]]
  $region50: #{eegnet_forward.1} parent=0
    _
  %s13 = ssub.s32 1, %s11
  %s14 = scalar_select 0, %s13, %s11
  // Predicated region
  $region2: #{eegnet_forward.1} parent=0 // pred_check
    _
  $region3: #{eegnet_forward.1} parent=0 // pred_check_branch
    %16 = sbr.rel (0) target = $region5
  $region4: #{eegnet_forward.1} parent=0 // pred_region
    _
  $region5: #{eegnet_forward.1} parent=0 // pred_fallthru
    _
  // Predicated region
  $region6: #{eegnet_forward.1} parent=0 // pred_check
    _
  $region7: #{eegnet_forward.1} parent=0 // pred_check_branch
    %18 = sbr.rel (0) target = $region9
  $region8: #{eegnet_forward.1} parent=0 // pred_region
    _
  $region9: #{eegnet_forward.1} parent=0 // pred_fallthru
    _
  // Predicated region
  $region10: #{eegnet_forward.1} parent=0 // pred_check
    _
  $region11: #{eegnet_forward.1} parent=0 // pred_check_branch
    %20 = sbr.rel (0) target = $region13
  $region12: #{eegnet_forward.1} parent=0 // pred_region
    _
  $region13: #{eegnet_forward.1} parent=0 // pred_fallthru
    _
  // Predicated region
  $region14: #{eegnet_forward.1} parent=0 // pred_check
    _
  $region15: #{eegnet_forward.1} parent=0 // pred_check_branch
    %22 = sbr.rel (0) target = $region17
  $region16: #{eegnet_forward.1} parent=0 // pred_region
    _
  $region17: #{eegnet_forward.1} parent=0 // pred_fallthru
    _
  // Predicated region
  $region18: #{eegnet_forward.1} parent=0 // pred_check
    _
  $region19: #{eegnet_forward.1} parent=0 // pred_check_branch
    %24 = sbr.rel (0) target = $region21
  $region20: #{eegnet_forward.1} parent=0 // pred_region
    _
  $region21: #{eegnet_forward.1} parent=0 // pred_fallthru
    _
  // Predicated region
  $region22: #{eegnet_forward.1} parent=0 // pred_check
    _
  $region23: #{eegnet_forward.1} parent=0 // pred_check_branch
    %26 = sbr.rel (0) target = $region25
  $region24: #{eegnet_forward.1} parent=0 // pred_region
    _
  $region25: #{eegnet_forward.1} parent=0 // pred_fallthru
    _
  // Predicated region
  $region26: #{eegnet_forward.1} parent=0 // pred_check
    _
  $region27: #{eegnet_forward.1} parent=0 // pred_check_branch
    %28 = sbr.rel (0) target = $region29
  $region28: #{eegnet_forward.1} parent=0 // pred_region
    _
  $region29: #{eegnet_forward.1} parent=0 // pred_fallthru
    _
  // Predicated region
  $region30: #{eegnet_forward.1} parent=0 // pred_check
    _
  $region31: #{eegnet_forward.1} parent=0 // pred_check_branch
    %30 = sbr.rel (0) target = $region33
  $region32: #{eegnet_forward.1} parent=0 // pred_region
    _
  $region33: #{eegnet_forward.1} parent=0 // pred_fallthru
    _
  // Predicated region
  $region34: #{eegnet_forward.1} parent=0 // pred_check
    _
  $region35: #{eegnet_forward.1} parent=0 // pred_check_branch
    %32 = sbr.rel (0) target = $region37
  $region36: #{eegnet_forward.1} parent=0 // pred_region
    _
  $region37: #{eegnet_forward.1} parent=0 // pred_fallthru
    _
  // Predicated region
  $region38: #{eegnet_forward.1} parent=0 // pred_check
    _
  $region39: #{eegnet_forward.1} parent=0 // pred_check_branch
    %34 = sbr.rel (0) target = $region41
  $region40: #{eegnet_forward.1} parent=0 // pred_region
    _
  $region41: #{eegnet_forward.1} parent=0 // pred_fallthru
    _
  %v36 = vld [vmem:[%s1] sm:$0xf]
  %v37 = vld [vmem:[%s1 + $0x4] sm:$0xf]
  %v38 = vld [vmem:[%s1 + $0x8] sm:$0xf]
  %v39 = vld [vmem:[%s1 + $0xc] sm:$0xf]
  %v40 = vld [vmem:[%s1 + $0x10] sm:$0xf]
  %v41 = vld [vmem:[%s1 + $0x14] sm:$0xf]
  %v42 = vld [vmem:[%s1 + $0x18] sm:$0xf]
  %v43 = vld [vmem:[%s1 + $0x1c] sm:$0xf]
  %v44 = vld [vmem:[%s1 + $0x20] sm:$0xf]
  %v45 = vld [vmem:[%s1 + $0x24] sm:$0xf]
  %v46 = vld [vmem:[%s1 + $0x28] sm:$0xf]
  %v47 = vld [vmem:[%s1 + $0x2c] sm:$0xf]
  %v48 = vld [vmem:[%s1 + $0x30] sm:$0xf]
  %v49 = vld [vmem:[%s1 + $0x34] sm:$0xf]
  %v50 = vld [vmem:[%s1 + $0x38] sm:$0xf]
  %v51 = vld [vmem:[%s1 + $0x3c] sm:$0xf]
  %v52 = vld [vmem:[%s0] sm:$0xff]
  %v53 = vld [vmem:[%s0 + $0x8] sm:$0xff]
  %v54 = vld [vmem:[%s0 + $0x10] sm:$0xff]
  %v55 = vld [vmem:[%s0 + $0x18] sm:$0xff]
  %v56 = vld [vmem:[%s0 + $0x20] sm:$0xff]
  %v57 = vld [vmem:[%s0 + $0x28] sm:$0xff]
  %v58 = vld [vmem:[%s0 + $0x30] sm:$0xff]
  %v59 = vld [vmem:[%s0 + $0x38] sm:$0xff]
  %v76 = vunpack.c.l.b16 %v36
  %v77 = vunpack.c.l.b16 %v37
  %v78 = vunpack.c.l.b16 %v38
  %v79 = vunpack.c.l.b16 %v39
  %v80 = vunpack.c.l.b16 %v40
  %v81 = vunpack.c.l.b16 %v41
  %v82 = vunpack.c.l.b16 %v42
  %v83 = vunpack.c.l.b16 %v43
  %v84 = vunpack.c.l.b16 %v44
  %v85 = vunpack.c.l.b16 %v45
  %v86 = vunpack.c.l.b16 %v46
  %v87 = vunpack.c.l.b16 %v47
  %v88 = vunpack.c.l.b16 %v48
  %v89 = vunpack.c.l.b16 %v49
  %v90 = vunpack.c.l.b16 %v50
  %v91 = vunpack.c.l.b16 %v51
  %v92 = vpack.c.b16 %v77, %v76
  %v93 = vpack.c.b16 %v79, %v78
  %v94 = vpack.c.b16 %v81, %v80
  %v95 = vpack.c.b16 %v83, %v82
  %v96 = vpack.c.b16 %v85, %v84
  %v97 = vpack.c.b16 %v87, %v86
  %v98 = vpack.c.b16 %v89, %v88
  %v99 = vpack.c.b16 %v91, %v90
  %v108 = vunpack.c.l.b16 %v52
  %v109 = vunpack.c.h.b16 %v52
  %v110 = vunpack.c.l.b16 %v53
  %v111 = vunpack.c.h.b16 %v53
  %v112 = vunpack.c.l.b16 %v54
  %v113 = vunpack.c.h.b16 %v54
  %v114 = vunpack.c.l.b16 %v55
  %v115 = vunpack.c.h.b16 %v55
  %v116 = vunpack.c.l.b16 %v56
  %v117 = vunpack.c.h.b16 %v56
  %v118 = vunpack.c.l.b16 %v57
  %v119 = vunpack.c.h.b16 %v57
  %v120 = vunpack.c.l.b16 %v58
  %v121 = vunpack.c.h.b16 %v58
  %v122 = vunpack.c.l.b16 %v59
  %v123 = vunpack.c.h.b16 %v59
  %v124 = vpack.c.b16 %v110, %v108
  %v125 = vpack.c.b16 %v111, %v109
  %v126 = vpack.c.b16 %v114, %v112
  %v127 = vpack.c.b16 %v115, %v113
  %v128 = vpack.c.b16 %v118, %v116
  %v129 = vpack.c.b16 %v119, %v117
  %v130 = vpack.c.b16 %v122, %v120
  %v131 = vpack.c.b16 %v123, %v121
  %vm140 = vcmask 523264
  %v142 = vsel %vm140, %v92, 0
  %v145 = vsel %vm140, %v93, 0
  %v148 = vsel %vm140, %v94, 0
  %v151 = vsel %vm140, %v95, 0
  %v154 = vsel %vm140, %v96, 0
  %v157 = vsel %vm140, %v97, 0
  %v160 = vsel %vm140, %v98, 0
  %v163 = vsel %vm140, %v99, 0
  %165 = vmatprep.subr.bf16.mxu0 %v125
  %166 = vmatpush1.bf16.msra.mxu0 %v124
  %167 = vmatprep.subr.bf16.mxu0 %v127
  %168 = vmatpush1.bf16.msra.mxu0 %v126
  %169 = vmatprep.subr.bf16.mxu0 %v129
  %170 = vmatpush1.bf16.msra.mxu0 %v128
  %171 = vmatprep.subr.bf16.mxu0 %v131
  %172 = vmatpush1.bf16.msra.mxu0 %v130
  %173 = vmatprep.subr.bf16.mxu0 0
  %174 = vmatpush1.bf16.msra.mxu0 0
  %175 = vmatprep.subr.bf16.mxu0 0
  %176 = vmatpush1.bf16.msra.mxu0 0
  %177 = vmatprep.subr.bf16.mxu0 0
  %178 = vmatpush1.bf16.msra.mxu0 0
  %179 = vmatprep.subr.bf16.mxu0 0
  %180 = vmatpush1.bf16.msra.mxu0 0
  %181 = vmatprep.subr.bf16.mxu0 0
  %182 = vmatpush1.bf16.msra.mxu0 0
  %183 = vmatprep.subr.bf16.mxu0 0
  %184 = vmatpush1.bf16.msra.mxu0 0
  %185 = vmatprep.subr.bf16.mxu0 0
  %186 = vmatpush1.bf16.msra.mxu0 0
  %187 = vmatprep.subr.bf16.mxu0 0
  %188 = vmatpush1.bf16.msra.mxu0 0
  %189 = vmatprep.subr.bf16.mxu0 0
  %190 = vmatpush1.bf16.msra.mxu0 0
  %191 = vmatprep.subr.bf16.mxu0 0
  %192 = vmatpush1.bf16.msra.mxu0 0
  %193 = vmatprep.subr.bf16.mxu0 0
  %194 = vmatpush1.bf16.msra.mxu0 0
  %195 = vmatprep.subr.bf16.mxu0 0
  %196 = vmatpush1.bf16.msra.mxu0 0
  %197 = vmatprep.mubr.bf16.mxu0 0
  %198 = vmatmul.mubr.bf16.gmra.mrb[0].mxu0 %v142
  %v199 = vpop.f32.mrb[0].mxu0
  %v200 = vadd.f32 0.0, %v199
  %v201 = vpop.f32.mrb[0].mxu0
  %v202 = vadd.f32 0.0, %v201
  %v203 = vpop.f32.mrb[0].mxu0
  %v204 = vadd.f32 0.0, %v203
  %v205 = vpop.f32.mrb[0].mxu0
  %v206 = vadd.f32 0.0, %v205
  %207 = vmatprep.mubr.bf16.mxu0 0
  %208 = vmatmul.mubr.bf16.gmra.mrb[0].mxu0 %v145
  %v209 = vpop.f32.mrb[0].mxu0
  %v210 = vadd.f32 0.0, %v209
  %v211 = vpop.f32.mrb[0].mxu0
  %v212 = vadd.f32 0.0, %v211
  %v213 = vpop.f32.mrb[0].mxu0
  %v214 = vadd.f32 0.0, %v213
  %v215 = vpop.f32.mrb[0].mxu0
  %v216 = vadd.f32 0.0, %v215
  %217 = vmatprep.mubr.bf16.mxu0 0
  %218 = vmatmul.mubr.bf16.gmra.mrb[0].mxu0 %v148
  %v219 = vpop.f32.mrb[0].mxu0
  %v220 = vadd.f32 0.0, %v219
  %v221 = vpop.f32.mrb[0].mxu0
  %v222 = vadd.f32 0.0, %v221
  %v223 = vpop.f32.mrb[0].mxu0
  %v224 = vadd.f32 0.0, %v223
  %v225 = vpop.f32.mrb[0].mxu0
  %v226 = vadd.f32 0.0, %v225
  %227 = vmatprep.mubr.bf16.mxu0 0
  %228 = vmatmul.mubr.bf16.gmra.mrb[0].mxu0 %v151
  %v229 = vpop.f32.mrb[0].mxu0
  %v230 = vadd.f32 0.0, %v229
  %v231 = vpop.f32.mrb[0].mxu0
  %v232 = vadd.f32 0.0, %v231
  %v233 = vpop.f32.mrb[0].mxu0
  %v234 = vadd.f32 0.0, %v233
  %v235 = vpop.f32.mrb[0].mxu0
  %v236 = vadd.f32 0.0, %v235
  %237 = vmatprep.mubr.bf16.mxu0 0
  %238 = vmatmul.mubr.bf16.gmra.mrb[0].mxu0 %v154
  %v239 = vpop.f32.mrb[0].mxu0
  %v240 = vadd.f32 0.0, %v239
  %v241 = vpop.f32.mrb[0].mxu0
  %v242 = vadd.f32 0.0, %v241
  %v243 = vpop.f32.mrb[0].mxu0
  %v244 = vadd.f32 0.0, %v243
  %v245 = vpop.f32.mrb[0].mxu0
  %v246 = vadd.f32 0.0, %v245
  %247 = vmatprep.mubr.bf16.mxu0 0
  %248 = vmatmul.mubr.bf16.gmra.mrb[0].mxu0 %v157
  %v249 = vpop.f32.mrb[0].mxu0
  %v250 = vadd.f32 0.0, %v249
  %v251 = vpop.f32.mrb[0].mxu0
  %v252 = vadd.f32 0.0, %v251
  %v253 = vpop.f32.mrb[0].mxu0
  %v254 = vadd.f32 0.0, %v253
  %v255 = vpop.f32.mrb[0].mxu0
  %v256 = vadd.f32 0.0, %v255
  %257 = vmatprep.mubr.bf16.mxu0 0
  %258 = vmatmul.mubr.bf16.gmra.mrb[0].mxu0 %v160
  %v259 = vpop.f32.mrb[0].mxu0
  %v260 = vadd.f32 0.0, %v259
  %v261 = vpop.f32.mrb[0].mxu0
  %v262 = vadd.f32 0.0, %v261
  %v263 = vpop.f32.mrb[0].mxu0
  %v264 = vadd.f32 0.0, %v263
  %v265 = vpop.f32.mrb[0].mxu0
  %v266 = vadd.f32 0.0, %v265
  %267 = vmatprep.mubr.bf16.mxu0 0
  %268 = vmatmul.mubr.bf16.gmra.mrb[0].mxu0 %v163
  %v269 = vpop.f32.mrb[0].mxu0
  %v270 = vadd.f32 0.0, %v269
  %v271 = vpop.f32.mrb[0].mxu0
  %v272 = vadd.f32 0.0, %v271
  %v273 = vpop.f32.mrb[0].mxu0
  %v274 = vadd.f32 0.0, %v273
  %v275 = vpop.f32.mrb[0].mxu0
  %v276 = vadd.f32 0.0, %v275
  %277 = vdwg.mxu0
  %v278 = vpack.c.bf16 %v204, %v200
  %v279 = vpack.c.bf16 %v206, %v202
  %v280 = vpack.c.bf16 %v214, %v210
  %v281 = vpack.c.bf16 %v216, %v212
  %v282 = vpack.c.bf16 %v224, %v220
  %v283 = vpack.c.bf16 %v226, %v222
  %v284 = vpack.c.bf16 %v234, %v230
  %v285 = vpack.c.bf16 %v236, %v232
  %v286 = vpack.c.bf16 %v244, %v240
  %v287 = vpack.c.bf16 %v246, %v242
  %v288 = vpack.c.bf16 %v254, %v250
  %v289 = vpack.c.bf16 %v256, %v252
  %v290 = vpack.c.bf16 %v264, %v260
  %v291 = vpack.c.bf16 %v266, %v262
  %v292 = vpack.c.bf16 %v274, %v270
  %v293 = vpack.c.bf16 %v276, %v272
  %v294 = vld [vmem:[%s2] sm:$0xff]
  %v295 = vld [vmem:[%s2 + $0x8] sm:$0xff]
  %v296 = vld [vmem:[%s2 + $0x10] sm:$0xff]
  %v297 = vld [vmem:[%s2 + $0x18] sm:$0xff]
  %v298 = vld [vmem:[%s2 + $0x20] sm:$0xff]
  %v299 = vld [vmem:[%s2 + $0x28] sm:$0xff]
  %v300 = vld [vmem:[%s2 + $0x30] sm:$0xff]
  %v301 = vld [vmem:[%s2 + $0x38] sm:$0xff]
  %v302 = vld [vmem:[%s2 + $0x40] sm:$0xff]
  %v303 = vld [vmem:[%s2 + $0x48] sm:$0xff]
  %v304 = vld [vmem:[%s2 + $0x50] sm:$0xff]
  %v305 = vld [vmem:[%s2 + $0x58] sm:$0xff]
  %v306 = vld [vmem:[%s2 + $0x60] sm:$0xff]
  %v307 = vld [vmem:[%s2 + $0x68] sm:$0xff]
  %v308 = vld [vmem:[%s2 + $0x70] sm:$0xff]
  %v309 = vld [vmem:[%s2 + $0x78] sm:$0xff]
  %v310 = vld [vmem:[%s2 + $0x80] sm:$0xff]
  %v311 = vld [vmem:[%s2 + $0x88] sm:$0xff]
  %v312 = vld [vmem:[%s2 + $0x90] sm:$0xff]
  %v313 = vld [vmem:[%s2 + $0x98] sm:$0xff]
  %v314 = vld [vmem:[%s2 + $0xa0] sm:$0xff]
  %v315 = vld [vmem:[%s2 + $0xa8] sm:$0xff]
  %v316 = vld [vmem:[%s2 + $0xb0] sm:$0xff]
  %v317 = vld [vmem:[%s2 + $0xb8] sm:$0xff]
  %v318 = vld [vmem:[%s2 + $0xc0] sm:$0xff]
  %v319 = vld [vmem:[%s2 + $0xc8] sm:$0xff]
  %v320 = vld [vmem:[%s2 + $0xd0] sm:$0xff]
  %v321 = vld [vmem:[%s2 + $0xd8] sm:$0xff]
  %v322 = vld [vmem:[%s2 + $0xe0] sm:$0xff]
  %v323 = vld [vmem:[%s2 + $0xe8] sm:$0xff]
  %v324 = vld [vmem:[%s2 + $0xf0] sm:$0xff]
  %v325 = vld [vmem:[%s2 + $0xf8] sm:$0xff]
  %v326 = vld [vmem:[%s2 + $0x100] sm:$0xff]
  %v327 = vld [vmem:[%s2 + $0x108] sm:$0xff]
  %v328 = vld [vmem:[%s2 + $0x110] sm:$0xff]
  %v329 = vld [vmem:[%s2 + $0x118] sm:$0xff]
  %v330 = vld [vmem:[%s2 + $0x120] sm:$0xff]
  %v331 = vld [vmem:[%s2 + $0x128] sm:$0xff]
  %v332 = vld [vmem:[%s2 + $0x130] sm:$0xff]
  %v333 = vld [vmem:[%s2 + $0x138] sm:$0xff]
  %v334 = vld [vmem:[%s2 + $0x140] sm:$0xff]
  %v335 = vld [vmem:[%s2 + $0x148] sm:$0xff]
  %v336 = vld [vmem:[%s2 + $0x150] sm:$0xff]
  %v337 = vld [vmem:[%s2 + $0x158] sm:$0xff]
  %v338 = vld [vmem:[%s2 + $0x160] sm:$0xff]
  %v339 = vld [vmem:[%s2 + $0x168] sm:$0xff]
  %v340 = vld [vmem:[%s2 + $0x170] sm:$0xff]
  %v341 = vld [vmem:[%s2 + $0x178] sm:$0xff]
  %v342 = vld [vmem:[%s2 + $0x180] sm:$0xff]
  %v343 = vld [vmem:[%s2 + $0x188] sm:$0xff]
  %v344 = vld [vmem:[%s2 + $0x190] sm:$0xff]
  %v345 = vld [vmem:[%s2 + $0x198] sm:$0xff]
  %v346 = vld [vmem:[%s2 + $0x1a0] sm:$0xff]
  %v347 = vld [vmem:[%s2 + $0x1a8] sm:$0xff]
  %v348 = vld [vmem:[%s2 + $0x1b0] sm:$0xff]
  %v349 = vld [vmem:[%s2 + $0x1b8] sm:$0xff]
  %v350 = vld [vmem:[%s2 + $0x1c0] sm:$0xff]
  %v351 = vld [vmem:[%s2 + $0x1c8] sm:$0xff]
  %v352 = vld [vmem:[%s2 + $0x1d0] sm:$0xff]
  %v353 = vld [vmem:[%s2 + $0x1d8] sm:$0xff]
  %v354 = vld [vmem:[%s2 + $0x1e0] sm:$0xff]
  %v355 = vld [vmem:[%s2 + $0x1e8] sm:$0xff]
  %v356 = vld [vmem:[%s2 + $0x1f0] sm:$0xff]
  %v357 = vld [vmem:[%s2 + $0x1f8] sm:$0xff]
  %v358 = vld [vmem:[%s2 + $0x200] sm:$0xff]
  %v359 = vld [vmem:[%s2 + $0x208] sm:$0xff]
  %v360 = vld [vmem:[%s2 + $0x210] sm:$0xff]
  %v361 = vld [vmem:[%s2 + $0x218] sm:$0xff]
  %v362 = vld [vmem:[%s2 + $0x220] sm:$0xff]
  %v363 = vld [vmem:[%s2 + $0x228] sm:$0xff]
  %v364 = vld [vmem:[%s2 + $0x230] sm:$0xff]
  %v365 = vld [vmem:[%s2 + $0x238] sm:$0xff]
  %v366 = vld [vmem:[%s2 + $0x240] sm:$0xff]
  %v367 = vld [vmem:[%s2 + $0x248] sm:$0xff]
  %v368 = vld [vmem:[%s2 + $0x250] sm:$0xff]
  %v369 = vld [vmem:[%s2 + $0x258] sm:$0xff]
  %v370 = vld [vmem:[%s2 + $0x260] sm:$0xff]
  %v371 = vld [vmem:[%s2 + $0x268] sm:$0xff]
  %v372 = vld [vmem:[%s2 + $0x270] sm:$0xff]
  %v373 = vld [vmem:[%s2 + $0x278] sm:$0xff]
  %v374 = vld [vmem:[%s2 + $0x280] sm:$0xff]
  %v375 = vld [vmem:[%s2 + $0x288] sm:$0xff]
  %v376 = vld [vmem:[%s2 + $0x290] sm:$0xff]
  %v377 = vld [vmem:[%s2 + $0x298] sm:$0xff]
  %v378 = vld [vmem:[%s2 + $0x2a0] sm:$0xff]
  %v379 = vld [vmem:[%s2 + $0x2a8] sm:$0xff]
  %v380 = vld [vmem:[%s2 + $0x2b0] sm:$0xff]
  %v381 = vld [vmem:[%s2 + $0x2b8] sm:$0xff]
  %v382 = vld [vmem:[%s2 + $0x2c0] sm:$0xff]
  %v383 = vld [vmem:[%s2 + $0x2c8] sm:$0xff]
  %v384 = vld [vmem:[%s2 + $0x2d0] sm:$0xff]
  %v385 = vld [vmem:[%s2 + $0x2d8] sm:$0xff]
  %v386 = vld [vmem:[%s2 + $0x2e0] sm:$0xff]
  %v387 = vld [vmem:[%s2 + $0x2e8] sm:$0xff]
  %v388 = vld [vmem:[%s2 + $0x2f0] sm:$0xff]
  %v389 = vld [vmem:[%s2 + $0x2f8] sm:$0xff]
  %v390 = vld [vmem:[%s2 + $0x300] sm:$0xff]
  %v391 = vld [vmem:[%s2 + $0x308] sm:$0xff]
  %v392 = vld [vmem:[%s2 + $0x310] sm:$0xff]
  %v393 = vld [vmem:[%s2 + $0x318] sm:$0xff]
  %v394 = vld [vmem:[%s2 + $0x320] sm:$0xff]
  %v395 = vld [vmem:[%s2 + $0x328] sm:$0xff]
  %v396 = vld [vmem:[%s2 + $0x330] sm:$0xff]
  %v397 = vld [vmem:[%s2 + $0x338] sm:$0xff]
  %v398 = vld [vmem:[%s2 + $0x340] sm:$0xff]
  %v399 = vld [vmem:[%s2 + $0x348] sm:$0xff]
  %v400 = vld [vmem:[%s2 + $0x350] sm:$0xff]
  %v401 = vld [vmem:[%s2 + $0x358] sm:$0xff]
  %v402 = vld [vmem:[%s2 + $0x360] sm:$0xff]
  %v403 = vld [vmem:[%s2 + $0x368] sm:$0xff]
  %v404 = vld [vmem:[%s2 + $0x370] sm:$0xff]
  %v405 = vld [vmem:[%s2 + $0x378] sm:$0xff]
  %v406 = vld [vmem:[%s2 + $0x380] sm:$0xff]
  %v407 = vld [vmem:[%s2 + $0x388] sm:$0xff]
  %v408 = vld [vmem:[%s2 + $0x390] sm:$0xff]
  %v409 = vld [vmem:[%s2 + $0x398] sm:$0xff]
  %v410 = vld [vmem:[%s2 + $0x3a0] sm:$0xff]
  %v411 = vld [vmem:[%s2 + $0x3a8] sm:$0xff]
  %v412 = vld [vmem:[%s2 + $0x3b0] sm:$0xff]
  %v413 = vld [vmem:[%s2 + $0x3b8] sm:$0xff]
  %v414 = vld [vmem:[%s2 + $0x3c0] sm:$0xff]
  %v415 = vld [vmem:[%s2 + $0x3c8] sm:$0xff]
  %v416 = vld [vmem:[%s2 + $0x3d0] sm:$0xff]
  %v417 = vld [vmem:[%s2 + $0x3d8] sm:$0xff]
  %v418 = vld [vmem:[%s2 + $0x3e0] sm:$0xff]
  %v419 = vld [vmem:[%s2 + $0x3e8] sm:$0xff]
  %v420 = vld [vmem:[%s2 + $0x3f0] sm:$0xff]
  %v421 = vld [vmem:[%s2 + $0x3f8] sm:$0xff]
  %v550 = vunpack.c.l.b16 %v294
  %v551 = vunpack.c.h.b16 %v294
  %v552 = vunpack.c.l.b16 %v295
  %v553 = vunpack.c.h.b16 %v295
  %v554 = vunpack.c.l.b16 %v296
  %v555 = vunpack.c.h.b16 %v296
  %v556 = vunpack.c.l.b16 %v297
  %v557 = vunpack.c.h.b16 %v297
  %v558 = vunpack.c.l.b16 %v298
  %v559 = vunpack.c.h.b16 %v298
  %v560 = vunpack.c.l.b16 %v299
  %v561 = vunpack.c.h.b16 %v299
  %v562 = vunpack.c.l.b16 %v300
  %v563 = vunpack.c.h.b16 %v300
  %v564 = vunpack.c.l.b16 %v301
  %v565 = vunpack.c.h.b16 %v301
  %v566 = vunpack.c.l.b16 %v302
  %v567 = vunpack.c.h.b16 %v302
  %v568 = vunpack.c.l.b16 %v303
  %v569 = vunpack.c.h.b16 %v303
  %v570 = vunpack.c.l.b16 %v304
  %v571 = vunpack.c.h.b16 %v304
  %v572 = vunpack.c.l.b16 %v305
  %v573 = vunpack.c.h.b16 %v305
  %v574 = vunpack.c.l.b16 %v306
  %v575 = vunpack.c.h.b16 %v306
  %v576 = vunpack.c.l.b16 %v307
  %v577 = vunpack.c.h.b16 %v307
  %v578 = vunpack.c.l.b16 %v308
  %v579 = vunpack.c.h.b16 %v308
  %v580 = vunpack.c.l.b16 %v309
  %v581 = vunpack.c.h.b16 %v309
  %v582 = vunpack.c.l.b16 %v310
  %v583 = vunpack.c.h.b16 %v310
  %v584 = vunpack.c.l.b16 %v311
  %v585 = vunpack.c.h.b16 %v311
  %v586 = vunpack.c.l.b16 %v312
  %v587 = vunpack.c.h.b16 %v312
  %v588 = vunpack.c.l.b16 %v313
  %v589 = vunpack.c.h.b16 %v313
  %v590 = vunpack.c.l.b16 %v314
  %v591 = vunpack.c.h.b16 %v314
  %v592 = vunpack.c.l.b16 %v315
  %v593 = vunpack.c.h.b16 %v315
  %v594 = vunpack.c.l.b16 %v316
  %v595 = vunpack.c.h.b16 %v316
  %v596 = vunpack.c.l.b16 %v317
  %v597 = vunpack.c.h.b16 %v317
  %v598 = vunpack.c.l.b16 %v318
  %v599 = vunpack.c.h.b16 %v318
  %v600 = vunpack.c.l.b16 %v319
  %v601 = vunpack.c.h.b16 %v319
  %v602 = vunpack.c.l.b16 %v320
  %v603 = vunpack.c.h.b16 %v320
  %v604 = vunpack.c.l.b16 %v321
  %v605 = vunpack.c.h.b16 %v321
  %v606 = vunpack.c.l.b16 %v322
  %v607 = vunpack.c.h.b16 %v322
  %v608 = vunpack.c.l.b16 %v323
  %v609 = vunpack.c.h.b16 %v323
  %v610 = vunpack.c.l.b16 %v324
  %v611 = vunpack.c.h.b16 %v324
  %v612 = vunpack.c.l.b16 %v325
  %v613 = vunpack.c.h.b16 %v325
  %v614 = vunpack.c.l.b16 %v326
  %v615 = vunpack.c.h.b16 %v326
  %v616 = vunpack.c.l.b16 %v327
  %v617 = vunpack.c.h.b16 %v327
  %v618 = vunpack.c.l.b16 %v328
  %v619 = vunpack.c.h.b16 %v328
  %v620 = vunpack.c.l.b16 %v329
  %v621 = vunpack.c.h.b16 %v329
  %v622 = vunpack.c.l.b16 %v330
  %v623 = vunpack.c.h.b16 %v330
  %v624 = vunpack.c.l.b16 %v331
  %v625 = vunpack.c.h.b16 %v331
  %v626 = vunpack.c.l.b16 %v332
  %v627 = vunpack.c.h.b16 %v332
  %v628 = vunpack.c.l.b16 %v333
  %v629 = vunpack.c.h.b16 %v333
  %v630 = vunpack.c.l.b16 %v334
  %v631 = vunpack.c.h.b16 %v334
  %v632 = vunpack.c.l.b16 %v335
  %v633 = vunpack.c.h.b16 %v335
  %v634 = vunpack.c.l.b16 %v336
  %v635 = vunpack.c.h.b16 %v336
  %v636 = vunpack.c.l.b16 %v337
  %v637 = vunpack.c.h.b16 %v337
  %v638 = vunpack.c.l.b16 %v338
  %v639 = vunpack.c.h.b16 %v338
  %v640 = vunpack.c.l.b16 %v339
  %v641 = vunpack.c.h.b16 %v339
  %v642 = vunpack.c.l.b16 %v340
  %v643 = vunpack.c.h.b16 %v340
  %v644 = vunpack.c.l.b16 %v341
  %v645 = vunpack.c.h.b16 %v341
  %v646 = vunpack.c.l.b16 %v342
  %v647 = vunpack.c.h.b16 %v342
  %v648 = vunpack.c.l.b16 %v343
  %v649 = vunpack.c.h.b16 %v343
  %v650 = vunpack.c.l.b16 %v344
  %v651 = vunpack.c.h.b16 %v344
  %v652 = vunpack.c.l.b16 %v345
  %v653 = vunpack.c.h.b16 %v345
  %v654 = vunpack.c.l.b16 %v346
  %v655 = vunpack.c.h.b16 %v346
  %v656 = vunpack.c.l.b16 %v347
  %v657 = vunpack.c.h.b16 %v347
  %v658 = vunpack.c.l.b16 %v348
  %v659 = vunpack.c.h.b16 %v348
  %v660 = vunpack.c.l.b16 %v349
  %v661 = vunpack.c.h.b16 %v349
  %v662 = vunpack.c.l.b16 %v350
  %v663 = vunpack.c.h.b16 %v350
  %v664 = vunpack.c.l.b16 %v351
  %v665 = vunpack.c.h.b16 %v351
  %v666 = vunpack.c.l.b16 %v352
  %v667 = vunpack.c.h.b16 %v352
  %v668 = vunpack.c.l.b16 %v353
  %v669 = vunpack.c.h.b16 %v353
  %v670 = vunpack.c.l.b16 %v354
  %v671 = vunpack.c.h.b16 %v354
  %v672 = vunpack.c.l.b16 %v355
  %v673 = vunpack.c.h.b16 %v355
  %v674 = vunpack.c.l.b16 %v356
  %v675 = vunpack.c.h.b16 %v356
  %v676 = vunpack.c.l.b16 %v357
  %v677 = vunpack.c.h.b16 %v357
  %v678 = vunpack.c.l.b16 %v358
  %v679 = vunpack.c.h.b16 %v358
  %v680 = vunpack.c.l.b16 %v359
  %v681 = vunpack.c.h.b16 %v359
  %v682 = vunpack.c.l.b16 %v360
  %v683 = vunpack.c.h.b16 %v360
  %v684 = vunpack.c.l.b16 %v361
  %v685 = vunpack.c.h.b16 %v361
  %v686 = vunpack.c.l.b16 %v362
  %v687 = vunpack.c.h.b16 %v362
  %v688 = vunpack.c.l.b16 %v363
  %v689 = vunpack.c.h.b16 %v363
  %v690 = vunpack.c.l.b16 %v364
  %v691 = vunpack.c.h.b16 %v364
  %v692 = vunpack.c.l.b16 %v365
  %v693 = vunpack.c.h.b16 %v365
  %v694 = vunpack.c.l.b16 %v366
  %v695 = vunpack.c.h.b16 %v366
  %v696 = vunpack.c.l.b16 %v367
  %v697 = vunpack.c.h.b16 %v367
  %v698 = vunpack.c.l.b16 %v368
  %v699 = vunpack.c.h.b16 %v368
  %v700 = vunpack.c.l.b16 %v369
  %v701 = vunpack.c.h.b16 %v369
  %v702 = vunpack.c.l.b16 %v370
  %v703 = vunpack.c.h.b16 %v370
  %v704 = vunpack.c.l.b16 %v371
  %v705 = vunpack.c.h.b16 %v371
  %v706 = vunpack.c.l.b16 %v372
  %v707 = vunpack.c.h.b16 %v372
  %v708 = vunpack.c.l.b16 %v373
  %v709 = vunpack.c.h.b16 %v373
  %v710 = vunpack.c.l.b16 %v374
  %v711 = vunpack.c.h.b16 %v374
  %v712 = vunpack.c.l.b16 %v375
  %v713 = vunpack.c.h.b16 %v375
  %v714 = vunpack.c.l.b16 %v376
  %v715 = vunpack.c.h.b16 %v376
  %v716 = vunpack.c.l.b16 %v377
  %v717 = vunpack.c.h.b16 %v377
  %v718 = vunpack.c.l.b16 %v378
  %v719 = vunpack.c.h.b16 %v378
  %v720 = vunpack.c.l.b16 %v379
  %v721 = vunpack.c.h.b16 %v379
  %v722 = vunpack.c.l.b16 %v380
  %v723 = vunpack.c.h.b16 %v380
  %v724 = vunpack.c.l.b16 %v381
  %v725 = vunpack.c.h.b16 %v381
  %v726 = vunpack.c.l.b16 %v382
  %v727 = vunpack.c.h.b16 %v382
  %v728 = vunpack.c.l.b16 %v383
  %v729 = vunpack.c.h.b16 %v383
  %v730 = vunpack.c.l.b16 %v384
  %v731 = vunpack.c.h.b16 %v384
  %v732 = vunpack.c.l.b16 %v385
  %v733 = vunpack.c.h.b16 %v385
  %v734 = vunpack.c.l.b16 %v386
  %v735 = vunpack.c.h.b16 %v386
  %v736 = vunpack.c.l.b16 %v387
  %v737 = vunpack.c.h.b16 %v387
  %v738 = vunpack.c.l.b16 %v388
  %v739 = vunpack.c.h.b16 %v388
  %v740 = vunpack.c.l.b16 %v389
  %v741 = vunpack.c.h.b16 %v389
  %v742 = vunpack.c.l.b16 %v390
  %v743 = vunpack.c.h.b16 %v390
  %v744 = vunpack.c.l.b16 %v391
  %v745 = vunpack.c.h.b16 %v391
  %v746 = vunpack.c.l.b16 %v392
  %v747 = vunpack.c.h.b16 %v392
  %v748 = vunpack.c.l.b16 %v393
  %v749 = vunpack.c.h.b16 %v393
  %v750 = vunpack.c.l.b16 %v394
  %v751 = vunpack.c.h.b16 %v394
  %v752 = vunpack.c.l.b16 %v395
  %v753 = vunpack.c.h.b16 %v395
  %v754 = vunpack.c.l.b16 %v396
  %v755 = vunpack.c.h.b16 %v396
  %v756 = vunpack.c.l.b16 %v397
  %v757 = vunpack.c.h.b16 %v397
  %v758 = vunpack.c.l.b16 %v398
  %v759 = vunpack.c.h.b16 %v398
  %v760 = vunpack.c.l.b16 %v399
  %v761 = vunpack.c.h.b16 %v399
  %v762 = vunpack.c.l.b16 %v400
  %v763 = vunpack.c.h.b16 %v400
  %v764 = vunpack.c.l.b16 %v401
  %v765 = vunpack.c.h.b16 %v401
  %v766 = vunpack.c.l.b16 %v402
  %v767 = vunpack.c.h.b16 %v402
  %v768 = vunpack.c.l.b16 %v403
  %v769 = vunpack.c.h.b16 %v403
  %v770 = vunpack.c.l.b16 %v404
  %v771 = vunpack.c.h.b16 %v404
  %v772 = vunpack.c.l.b16 %v405
  %v773 = vunpack.c.h.b16 %v405
  %v774 = vunpack.c.l.b16 %v406
  %v775 = vunpack.c.h.b16 %v406
  %v776 = vunpack.c.l.b16 %v407
  %v777 = vunpack.c.h.b16 %v407
  %v778 = vunpack.c.l.b16 %v408
  %v779 = vunpack.c.h.b16 %v408
  %v780 = vunpack.c.l.b16 %v409
  %v781 = vunpack.c.h.b16 %v409
  %v782 = vunpack.c.l.b16 %v410
  %v783 = vunpack.c.h.b16 %v410
  %v784 = vunpack.c.l.b16 %v411
  %v785 = vunpack.c.h.b16 %v411
  %v786 = vunpack.c.l.b16 %v412
  %v787 = vunpack.c.h.b16 %v412
  %v788 = vunpack.c.l.b16 %v413
  %v789 = vunpack.c.h.b16 %v413
  %v790 = vunpack.c.l.b16 %v414
  %v791 = vunpack.c.h.b16 %v414
  %v792 = vunpack.c.l.b16 %v415
  %v793 = vunpack.c.h.b16 %v415
  %v794 = vunpack.c.l.b16 %v416
  %v795 = vunpack.c.h.b16 %v416
  %v796 = vunpack.c.l.b16 %v417
  %v797 = vunpack.c.h.b16 %v417
  %v798 = vunpack.c.l.b16 %v418
  %v799 = vunpack.c.h.b16 %v418
  %v800 = vunpack.c.l.b16 %v419
  %v801 = vunpack.c.h.b16 %v419
  %v802 = vunpack.c.l.b16 %v420
  %v803 = vunpack.c.h.b16 %v420
  %v804 = vunpack.c.l.b16 %v421
  %v805 = vunpack.c.h.b16 %v421
  %v806 = vpack.c.b16 %v558, %v550
  %v807 = vpack.c.b16 %v559, %v551
  %v808 = vpack.c.b16 %v560, %v552
  %v809 = vpack.c.b16 %v561, %v553
  %v810 = vpack.c.b16 %v562, %v554
  %v811 = vpack.c.b16 %v563, %v555
  %v812 = vpack.c.b16 %v564, %v556
  %v813 = vpack.c.b16 %v565, %v557
  %v814 = vpack.c.b16 %v574, %v566
  %v815 = vpack.c.b16 %v575, %v567
  %v816 = vpack.c.b16 %v576, %v568
  %v817 = vpack.c.b16 %v577, %v569
  %v818 = vpack.c.b16 %v578, %v570
  %v819 = vpack.c.b16 %v579, %v571
  %v820 = vpack.c.b16 %v580, %v572
  %v821 = vpack.c.b16 %v581, %v573
  %v822 = vpack.c.b16 %v590, %v582
  %v823 = vpack.c.b16 %v591, %v583
  %v824 = vpack.c.b16 %v592, %v584
  %v825 = vpack.c.b16 %v593, %v585
  %v826 = vpack.c.b16 %v594, %v586
  %v827 = vpack.c.b16 %v595, %v587
  %v828 = vpack.c.b16 %v596, %v588
  %v829 = vpack.c.b16 %v597, %v589
  %v830 = vpack.c.b16 %v606, %v598
  %v831 = vpack.c.b16 %v607, %v599
  %v832 = vpack.c.b16 %v608, %v600
  %v833 = vpack.c.b16 %v609, %v601
  %v834 = vpack.c.b16 %v610, %v602
  %v835 = vpack.c.b16 %v611, %v603
  %v836 = vpack.c.b16 %v612, %v604
  %v837 = vpack.c.b16 %v613, %v605
  %v838 = vpack.c.b16 %v622, %v614
  %v839 = vpack.c.b16 %v623, %v615
  %v840 = vpack.c.b16 %v624, %v616
  %v841 = vpack.c.b16 %v625, %v617
  %v842 = vpack.c.b16 %v626, %v618
  %v843 = vpack.c.b16 %v627, %v619
  %v844 = vpack.c.b16 %v628, %v620
  %v845 = vpack.c.b16 %v629, %v621
  %v846 = vpack.c.b16 %v638, %v630
  %v847 = vpack.c.b16 %v639, %v631
  %v848 = vpack.c.b16 %v640, %v632
  %v849 = vpack.c.b16 %v641, %v633
  %v850 = vpack.c.b16 %v642, %v634
  %v851 = vpack.c.b16 %v643, %v635
  %v852 = vpack.c.b16 %v644, %v636
  %v853 = vpack.c.b16 %v645, %v637
  %v854 = vpack.c.b16 %v654, %v646
  %v855 = vpack.c.b16 %v655, %v647
  %v856 = vpack.c.b16 %v656, %v648
  %v857 = vpack.c.b16 %v657, %v649
  %v858 = vpack.c.b16 %v658, %v650
  %v859 = vpack.c.b16 %v659, %v651
  %v860 = vpack.c.b16 %v660, %v652
  %v861 = vpack.c.b16 %v661, %v653
  %v862 = vpack.c.b16 %v670, %v662
  %v863 = vpack.c.b16 %v671, %v663
  %v864 = vpack.c.b16 %v672, %v664
  %v865 = vpack.c.b16 %v673, %v665
  %v866 = vpack.c.b16 %v674, %v666
  %v867 = vpack.c.b16 %v675, %v667
  %v868 = vpack.c.b16 %v676, %v668
  %v869 = vpack.c.b16 %v677, %v669
  %v870 = vpack.c.b16 %v686, %v678
  %v871 = vpack.c.b16 %v687, %v679
  %v872 = vpack.c.b16 %v688, %v680
  %v873 = vpack.c.b16 %v689, %v681
  %v874 = vpack.c.b16 %v690, %v682
  %v875 = vpack.c.b16 %v691, %v683
  %v876 = vpack.c.b16 %v692, %v684
  %v877 = vpack.c.b16 %v693, %v685
  %v878 = vpack.c.b16 %v702, %v694
  %v879 = vpack.c.b16 %v703, %v695
  %v880 = vpack.c.b16 %v704, %v696
  %v881 = vpack.c.b16 %v705, %v697
  %v882 = vpack.c.b16 %v706, %v698
  %v883 = vpack.c.b16 %v707, %v699
  %v884 = vpack.c.b16 %v708, %v700
  %v885 = vpack.c.b16 %v709, %v701
  %v886 = vpack.c.b16 %v718, %v710
  %v887 = vpack.c.b16 %v719, %v711
  %v888 = vpack.c.b16 %v720, %v712
  %v889 = vpack.c.b16 %v721, %v713
  %v890 = vpack.c.b16 %v722, %v714
  %v891 = vpack.c.b16 %v723, %v715
  %v892 = vpack.c.b16 %v724, %v716
  %v893 = vpack.c.b16 %v725, %v717
  %v894 = vpack.c.b16 %v734, %v726
  %v895 = vpack.c.b16 %v735, %v727
  %v896 = vpack.c.b16 %v736, %v728
  %v897 = vpack.c.b16 %v737, %v729
  %v898 = vpack.c.b16 %v738, %v730
  %v899 = vpack.c.b16 %v739, %v731
  %v900 = vpack.c.b16 %v740, %v732
  %v901 = vpack.c.b16 %v741, %v733
  %v902 = vpack.c.b16 %v750, %v742
  %v903 = vpack.c.b16 %v751, %v743
  %v904 = vpack.c.b16 %v752, %v744
  %v905 = vpack.c.b16 %v753, %v745
  %v906 = vpack.c.b16 %v754, %v746
  %v907 = vpack.c.b16 %v755, %v747
  %v908 = vpack.c.b16 %v756, %v748
  %v909 = vpack.c.b16 %v757, %v749
  %v910 = vpack.c.b16 %v766, %v758
  %v911 = vpack.c.b16 %v767, %v759
  %v912 = vpack.c.b16 %v768, %v760
  %v913 = vpack.c.b16 %v769, %v761
  %v914 = vpack.c.b16 %v770, %v762
  %v915 = vpack.c.b16 %v771, %v763
  %v916 = vpack.c.b16 %v772, %v764
  %v917 = vpack.c.b16 %v773, %v765
  %v918 = vpack.c.b16 %v782, %v774
  %v919 = vpack.c.b16 %v783, %v775
  %v920 = vpack.c.b16 %v784, %v776
  %v921 = vpack.c.b16 %v785, %v777
  %v922 = vpack.c.b16 %v786, %v778
  %v923 = vpack.c.b16 %v787, %v779
  %v924 = vpack.c.b16 %v788, %v780
  %v925 = vpack.c.b16 %v789, %v781
  %v926 = vpack.c.b16 %v798, %v790
  %v927 = vpack.c.b16 %v799, %v791
  %v928 = vpack.c.b16 %v800, %v792
  %v929 = vpack.c.b16 %v801, %v793
  %v930 = vpack.c.b16 %v802, %v794
  %v931 = vpack.c.b16 %v803, %v795
  %v932 = vpack.c.b16 %v804, %v796
  %v933 = vpack.c.b16 %v805, %v797
  %1062 = vmatprep.subr.bf16.mxu0 %v807
  %1063 = vmatpush1.bf16.msra.mxu0 %v806
  %1064 = vmatprep.subr.bf16.mxu0 %v815
  %1065 = vmatpush1.bf16.msra.mxu0 %v814
  %1066 = vmatprep.subr.bf16.mxu0 %v823
  %1067 = vmatpush1.bf16.msra.mxu0 %v822
  %1068 = vmatprep.subr.bf16.mxu0 %v831
  %1069 = vmatpush1.bf16.msra.mxu0 %v830
  %1070 = vmatprep.subr.bf16.mxu0 %v839
  %1071 = vmatpush1.bf16.msra.mxu0 %v838
  %1072 = vmatprep.subr.bf16.mxu0 %v847
  %1073 = vmatpush1.bf16.msra.mxu0 %v846
  %1074 = vmatprep.subr.bf16.mxu0 %v855
  %1075 = vmatpush1.bf16.msra.mxu0 %v854
  %1076 = vmatprep.subr.bf16.mxu0 %v863
  %1077 = vmatpush1.bf16.msra.mxu0 %v862
  %1078 = vmatprep.subr.bf16.mxu0 %v871
  %1079 = vmatpush1.bf16.msra.mxu0 %v870
  %1080 = vmatprep.subr.bf16.mxu0 %v879
  %1081 = vmatpush1.bf16.msra.mxu0 %v878
  %1082 = vmatprep.subr.bf16.mxu0 %v887
  %1083 = vmatpush1.bf16.msra.mxu0 %v886
  %1084 = vmatprep.subr.bf16.mxu0 %v895
  %1085 = vmatpush1.bf16.msra.mxu0 %v894
  %1086 = vmatprep.subr.bf16.mxu0 %v903
  %1087 = vmatpush1.bf16.msra.mxu0 %v902
  %1088 = vmatprep.subr.bf16.mxu0 %v911
  %1089 = vmatpush1.bf16.msra.mxu0 %v910
  %1090 = vmatprep.subr.bf16.mxu0 %v919
  %1091 = vmatpush1.bf16.msra.mxu0 %v918
  %1092 = vmatprep.subr.bf16.mxu0 %v927
  %1093 = vmatpush1.bf16.msra.mxu0 %v926
  %1094 = vmatprep.mubr.bf16.mxu0 %v279
  %1095 = vmatmul.mubr.bf16.gmra.mrb[0].mxu0 %v278
  %v1096 = vpop.f32.mrb[0].mxu0
  %v1097 = vadd.f32 0.0, %v1096
  %v1098 = vpop.f32.mrb[0].mxu0
  %v1099 = vpop.f32.mrb[0].mxu0
  %v1100 = vadd.f32 0.0, %v1099
  %v1101 = vpop.f32.mrb[0].mxu0
  %1102 = vmatprep.mubr.bf16.mxu0 %v281
  %1103 = vmatmul.mubr.bf16.gmra.mrb[0].mxu0 %v280
  %v1104 = vpop.f32.mrb[0].mxu0
  %v1105 = vpop.f32.mrb[0].mxu0
  %v1106 = vadd.f32 0.0, %v1105
  %v1107 = vpop.f32.mrb[0].mxu0
  %v1108 = vpop.f32.mrb[0].mxu0
  %v1109 = vadd.f32 0.0, %v1108
  %1110 = vmatprep.mubr.bf16.mxu0 %v283
  %1111 = vmatmul.mubr.bf16.gmra.mrb[0].mxu0 %v282
  %v1112 = vpop.f32.mrb[0].mxu0
  %v1113 = vpop.f32.mrb[0].mxu0
  %v1114 = vpop.f32.mrb[0].mxu0
  %v1115 = vpop.f32.mrb[0].mxu0
  %1116 = vmatprep.mubr.bf16.mxu0 %v285
  %1117 = vmatmul.mubr.bf16.gmra.mrb[0].mxu0 %v284
  %v1118 = vpop.f32.mrb[0].mxu0
  %v1119 = vpop.f32.mrb[0].mxu0
  %v1120 = vpop.f32.mrb[0].mxu0
  %v1121 = vpop.f32.mrb[0].mxu0
  %1122 = vmatprep.mubr.bf16.mxu0 %v287
  %1123 = vmatmul.mubr.bf16.gmra.mrb[0].mxu0 %v286
  %v1124 = vpop.f32.mrb[0].mxu0
  %v1125 = vpop.f32.mrb[0].mxu0
  %v1126 = vpop.f32.mrb[0].mxu0
  %v1127 = vpop.f32.mrb[0].mxu0
  %1128 = vmatprep.mubr.bf16.mxu0 %v289
  %1129 = vmatmul.mubr.bf16.gmra.mrb[0].mxu0 %v288
  %v1130 = vpop.f32.mrb[0].mxu0
  %v1131 = vpop.f32.mrb[0].mxu0
  %v1132 = vpop.f32.mrb[0].mxu0
  %v1133 = vpop.f32.mrb[0].mxu0
  %1134 = vmatprep.mubr.bf16.mxu0 %v291
  %1135 = vmatmul.mubr.bf16.gmra.mrb[0].mxu0 %v290
  %v1136 = vpop.f32.mrb[0].mxu0
  %v1137 = vpop.f32.mrb[0].mxu0
  %v1138 = vpop.f32.mrb[0].mxu0
  %v1139 = vpop.f32.mrb[0].mxu0
  %1140 = vmatprep.mubr.bf16.mxu0 %v293
  %1141 = vmatmul.mubr.bf16.gmra.mrb[0].mxu0 %v292
  %v1142 = vpop.f32.mrb[0].mxu0
  %v1143 = vpop.f32.mrb[0].mxu0
  %v1144 = vpop.f32.mrb[0].mxu0
  %v1145 = vpop.f32.mrb[0].mxu0
  %1146 = vdwg.mxu0
  %1147 = vmatprep.subr.bf16.mxu0 %v809
  %1148 = vmatpush1.bf16.msra.mxu0 %v808
  %1149 = vmatprep.subr.bf16.mxu0 %v817
  %1150 = vmatpush1.bf16.msra.mxu0 %v816
  %1151 = vmatprep.subr.bf16.mxu0 %v825
  %1152 = vmatpush1.bf16.msra.mxu0 %v824
  %1153 = vmatprep.subr.bf16.mxu0 %v833
  %1154 = vmatpush1.bf16.msra.mxu0 %v832
  %1155 = vmatprep.subr.bf16.mxu0 %v841
  %1156 = vmatpush1.bf16.msra.mxu0 %v840
  %1157 = vmatprep.subr.bf16.mxu0 %v849
  %1158 = vmatpush1.bf16.msra.mxu0 %v848
  %1159 = vmatprep.subr.bf16.mxu0 %v857
  %1160 = vmatpush1.bf16.msra.mxu0 %v856
  %1161 = vmatprep.subr.bf16.mxu0 %v865
  %1162 = vmatpush1.bf16.msra.mxu0 %v864
  %1163 = vmatprep.subr.bf16.mxu0 %v873
  %1164 = vmatpush1.bf16.msra.mxu0 %v872
  %1165 = vmatprep.subr.bf16.mxu0 %v881
  %1166 = vmatpush1.bf16.msra.mxu0 %v880
  %1167 = vmatprep.subr.bf16.mxu0 %v889
  %1168 = vmatpush1.bf16.msra.mxu0 %v888
  %1169 = vmatprep.subr.bf16.mxu0 %v897
  %1170 = vmatpush1.bf16.msra.mxu0 %v896
  %1171 = vmatprep.subr.bf16.mxu0 %v905
  %1172 = vmatpush1.bf16.msra.mxu0 %v904
  %1173 = vmatprep.subr.bf16.mxu0 %v913
  %1174 = vmatpush1.bf16.msra.mxu0 %v912
  %1175 = vmatprep.subr.bf16.mxu0 %v921
  %1176 = vmatpush1.bf16.msra.mxu0 %v920
  %1177 = vmatprep.subr.bf16.mxu0 %v929
  %1178 = vmatpush1.bf16.msra.mxu0 %v928
  %1179 = vmatprep.mubr.bf16.mxu0 %v279
  %1180 = vmatmul.mubr.bf16.gmra.mrb[0].mxu0 %v278
  %v1181 = vpop.f32.mrb[0].mxu0
  %v1182 = vpop.f32.mrb[0].mxu0
  %v1183 = vpop.f32.mrb[0].mxu0
  %v1184 = vpop.f32.mrb[0].mxu0
  %1185 = vmatprep.mubr.bf16.mxu0 %v281
  %1186 = vmatmul.mubr.bf16.gmra.mrb[0].mxu0 %v280
  %v1187 = vpop.f32.mrb[0].mxu0
  %v1188 = vpop.f32.mrb[0].mxu0
  %v1189 = vpop.f32.mrb[0].mxu0
  %v1190 = vpop.f32.mrb[0].mxu0
  %1191 = vmatprep.mubr.bf16.mxu0 %v283
  %1192 = vmatmul.mubr.bf16.gmra.mrb[0].mxu0 %v282
  %v1193 = vpop.f32.mrb[0].mxu0
  %v1194 = vadd.f32 0.0, %v1193
  %v1195 = vpop.f32.mrb[0].mxu0
  %v1196 = vpop.f32.mrb[0].mxu0
  %v1197 = vadd.f32 0.0, %v1196
  %v1198 = vpop.f32.mrb[0].mxu0
  %1199 = vmatprep.mubr.bf16.mxu0 %v285
  %1200 = vmatmul.mubr.bf16.gmra.mrb[0].mxu0 %v284
  %v1201 = vpop.f32.mrb[0].mxu0
  %v1202 = vpop.f32.mrb[0].mxu0
  %v1203 = vadd.f32 0.0, %v1202
  %v1204 = vpop.f32.mrb[0].mxu0
  %v1205 = vpop.f32.mrb[0].mxu0
  %v1206 = vadd.f32 0.0, %v1205
  %1207 = vmatprep.mubr.bf16.mxu0 %v287
  %1208 = vmatmul.mubr.bf16.gmra.mrb[0].mxu0 %v286
  %v1209 = vpop.f32.mrb[0].mxu0
  %v1210 = vpop.f32.mrb[0].mxu0
  %v1211 = vpop.f32.mrb[0].mxu0
  %v1212 = vpop.f32.mrb[0].mxu0
  %1213 = vmatprep.mubr.bf16.mxu0 %v289
  %1214 = vmatmul.mubr.bf16.gmra.mrb[0].mxu0 %v288
  %v1215 = vpop.f32.mrb[0].mxu0
  %v1216 = vpop.f32.mrb[0].mxu0
  %v1217 = vpop.f32.mrb[0].mxu0
  %v1218 = vpop.f32.mrb[0].mxu0
  %1219 = vmatprep.mubr.bf16.mxu0 %v291
  %1220 = vmatmul.mubr.bf16.gmra.mrb[0].mxu0 %v290
  %v1221 = vpop.f32.mrb[0].mxu0
  %v1222 = vpop.f32.mrb[0].mxu0
  %v1223 = vpop.f32.mrb[0].mxu0
  %v1224 = vpop.f32.mrb[0].mxu0
  %1225 = vmatprep.mubr.bf16.mxu0 %v293
  %1226 = vmatmul.mubr.bf16.gmra.mrb[0].mxu0 %v292
  %v1227 = vpop.f32.mrb[0].mxu0
  %v1228 = vpop.f32.mrb[0].mxu0
  %v1229 = vpop.f32.mrb[0].mxu0
  %v1230 = vpop.f32.mrb[0].mxu0
  %1231 = vdwg.mxu0
  %1232 = vmatprep.subr.bf16.mxu0 %v811
  %1233 = vmatpush1.bf16.msra.mxu0 %v810
  %1234 = vmatprep.subr.bf16.mxu0 %v819
  %1235 = vmatpush1.bf16.msra.mxu0 %v818
  %1236 = vmatprep.subr.bf16.mxu0 %v827
  %1237 = vmatpush1.bf16.msra.mxu0 %v826
  %1238 = vmatprep.subr.bf16.mxu0 %v835
  %1239 = vmatpush1.bf16.msra.mxu0 %v834
  %1240 = vmatprep.subr.bf16.mxu0 %v843
  %1241 = vmatpush1.bf16.msra.mxu0 %v842
  %1242 = vmatprep.subr.bf16.mxu0 %v851
  %1243 = vmatpush1.bf16.msra.mxu0 %v850
  %1244 = vmatprep.subr.bf16.mxu0 %v859
  %1245 = vmatpush1.bf16.msra.mxu0 %v858
  %1246 = vmatprep.subr.bf16.mxu0 %v867
  %1247 = vmatpush1.bf16.msra.mxu0 %v866
  %1248 = vmatprep.subr.bf16.mxu0 %v875
  %1249 = vmatpush1.bf16.msra.mxu0 %v874
  %1250 = vmatprep.subr.bf16.mxu0 %v883
  %1251 = vmatpush1.bf16.msra.mxu0 %v882
  %1252 = vmatprep.subr.bf16.mxu0 %v891
  %1253 = vmatpush1.bf16.msra.mxu0 %v890
  %1254 = vmatprep.subr.bf16.mxu0 %v899
  %1255 = vmatpush1.bf16.msra.mxu0 %v898
  %1256 = vmatprep.subr.bf16.mxu0 %v907
  %1257 = vmatpush1.bf16.msra.mxu0 %v906
  %1258 = vmatprep.subr.bf16.mxu0 %v915
  %1259 = vmatpush1.bf16.msra.mxu0 %v914
  %1260 = vmatprep.subr.bf16.mxu0 %v923
  %1261 = vmatpush1.bf16.msra.mxu0 %v922
  %1262 = vmatprep.subr.bf16.mxu0 %v931
  %1263 = vmatpush1.bf16.msra.mxu0 %v930
  %1264 = vmatprep.mubr.bf16.mxu0 %v279
  %1265 = vmatmul.mubr.bf16.gmra.mrb[0].mxu0 %v278
  %v1266 = vpop.f32.mrb[0].mxu0
  %v1267 = vpop.f32.mrb[0].mxu0
  %v1268 = vpop.f32.mrb[0].mxu0
  %v1269 = vpop.f32.mrb[0].mxu0
  %1270 = vmatprep.mubr.bf16.mxu0 %v281
  %1271 = vmatmul.mubr.bf16.gmra.mrb[0].mxu0 %v280
  %v1272 = vpop.f32.mrb[0].mxu0
  %v1273 = vpop.f32.mrb[0].mxu0
  %v1274 = vpop.f32.mrb[0].mxu0
  %v1275 = vpop.f32.mrb[0].mxu0
  %1276 = vmatprep.mubr.bf16.mxu0 %v283
  %1277 = vmatmul.mubr.bf16.gmra.mrb[0].mxu0 %v282
  %v1278 = vpop.f32.mrb[0].mxu0
  %v1279 = vpop.f32.mrb[0].mxu0
  %v1280 = vpop.f32.mrb[0].mxu0
  %v1281 = vpop.f32.mrb[0].mxu0
  %1282 = vmatprep.mubr.bf16.mxu0 %v285
  %1283 = vmatmul.mubr.bf16.gmra.mrb[0].mxu0 %v284
  %v1284 = vpop.f32.mrb[0].mxu0
  %v1285 = vpop.f32.mrb[0].mxu0
  %v1286 = vpop.f32.mrb[0].mxu0
  %v1287 = vpop.f32.mrb[0].mxu0
  %1288 = vmatprep.mubr.bf16.mxu0 %v287
  %1289 = vmatmul.mubr.bf16.gmra.mrb[0].mxu0 %v286
  %v1290 = vpop.f32.mrb[0].mxu0
  %v1291 = vadd.f32 0.0, %v1290
  %v1292 = vpop.f32.mrb[0].mxu0
  %v1293 = vpop.f32.mrb[0].mxu0
  %v1294 = vadd.f32 0.0, %v1293
  %v1295 = vpop.f32.mrb[0].mxu0
  %1296 = vmatprep.mubr.bf16.mxu0 %v289
  %1297 = vmatmul.mubr.bf16.gmra.mrb[0].mxu0 %v288
  %v1298 = vpop.f32.mrb[0].mxu0
  %v1299 = vpop.f32.mrb[0].mxu0
  %v1300 = vadd.f32 0.0, %v1299
  %v1301 = vpop.f32.mrb[0].mxu0
  %v1302 = vpop.f32.mrb[0].mxu0
  %v1303 = vadd.f32 0.0, %v1302
  %1304 = vmatprep.mubr.bf16.mxu0 %v291
  %1305 = vmatmul.mubr.bf16.gmra.mrb[0].mxu0 %v290
  %v1306 = vpop.f32.mrb[0].mxu0
  %v1307 = vpop.f32.mrb[0].mxu0
  %v1308 = vpop.f32.mrb[0].mxu0
  %v1309 = vpop.f32.mrb[0].mxu0
  %1310 = vmatprep.mubr.bf16.mxu0 %v293
  %1311 = vmatmul.mubr.bf16.gmra.mrb[0].mxu0 %v292
  %v1312 = vpop.f32.mrb[0].mxu0
  %v1313 = vpop.f32.mrb[0].mxu0
  %v1314 = vpop.f32.mrb[0].mxu0
  %v1315 = vpop.f32.mrb[0].mxu0
  %1316 = vdwg.mxu0
  %1317 = vmatprep.subr.bf16.mxu0 %v813
  %1318 = vmatpush1.bf16.msra.mxu0 %v812
  %1319 = vmatprep.subr.bf16.mxu0 %v821
  %1320 = vmatpush1.bf16.msra.mxu0 %v820
  %1321 = vmatprep.subr.bf16.mxu0 %v829
  %1322 = vmatpush1.bf16.msra.mxu0 %v828
  %1323 = vmatprep.subr.bf16.mxu0 %v837
  %1324 = vmatpush1.bf16.msra.mxu0 %v836
  %1325 = vmatprep.subr.bf16.mxu0 %v845
  %1326 = vmatpush1.bf16.msra.mxu0 %v844
  %1327 = vmatprep.subr.bf16.mxu0 %v853
  %1328 = vmatpush1.bf16.msra.mxu0 %v852
  %1329 = vmatprep.subr.bf16.mxu0 %v861
  %1330 = vmatpush1.bf16.msra.mxu0 %v860
  %1331 = vmatprep.subr.bf16.mxu0 %v869
  %1332 = vmatpush1.bf16.msra.mxu0 %v868
  %1333 = vmatprep.subr.bf16.mxu0 %v877
  %1334 = vmatpush1.bf16.msra.mxu0 %v876
  %1335 = vmatprep.subr.bf16.mxu0 %v885
  %1336 = vmatpush1.bf16.msra.mxu0 %v884
  %1337 = vmatprep.subr.bf16.mxu0 %v893
  %1338 = vmatpush1.bf16.msra.mxu0 %v892
  %1339 = vmatprep.subr.bf16.mxu0 %v901
  %1340 = vmatpush1.bf16.msra.mxu0 %v900
  %1341 = vmatprep.subr.bf16.mxu0 %v909
  %1342 = vmatpush1.bf16.msra.mxu0 %v908
  %1343 = vmatprep.subr.bf16.mxu0 %v917
  %1344 = vmatpush1.bf16.msra.mxu0 %v916
  %1345 = vmatprep.subr.bf16.mxu0 %v925
  %1346 = vmatpush1.bf16.msra.mxu0 %v924
  %1347 = vmatprep.subr.bf16.mxu0 %v933
  %1348 = vmatpush1.bf16.msra.mxu0 %v932
  %1349 = vmatprep.mubr.bf16.mxu0 %v279
  %1350 = vmatmul.mubr.bf16.gmra.mrb[0].mxu0 %v278
  %v1351 = vpop.f32.mrb[0].mxu0
  %v1352 = vpop.f32.mrb[0].mxu0
  %v1353 = vpop.f32.mrb[0].mxu0
  %v1354 = vpop.f32.mrb[0].mxu0
  %1355 = vmatprep.mubr.bf16.mxu0 %v281
  %1356 = vmatmul.mubr.bf16.gmra.mrb[0].mxu0 %v280
  %v1357 = vpop.f32.mrb[0].mxu0
  %v1358 = vpop.f32.mrb[0].mxu0
  %v1359 = vpop.f32.mrb[0].mxu0
  %v1360 = vpop.f32.mrb[0].mxu0
  %1361 = vmatprep.mubr.bf16.mxu0 %v283
  %1362 = vmatmul.mubr.bf16.gmra.mrb[0].mxu0 %v282
  %v1363 = vpop.f32.mrb[0].mxu0
  %v1364 = vpop.f32.mrb[0].mxu0
  %v1365 = vpop.f32.mrb[0].mxu0
  %v1366 = vpop.f32.mrb[0].mxu0
  %1367 = vmatprep.mubr.bf16.mxu0 %v285
  %1368 = vmatmul.mubr.bf16.gmra.mrb[0].mxu0 %v284
  %v1369 = vpop.f32.mrb[0].mxu0
  %v1370 = vpop.f32.mrb[0].mxu0
  %v1371 = vpop.f32.mrb[0].mxu0
  %v1372 = vpop.f32.mrb[0].mxu0
  %1373 = vmatprep.mubr.bf16.mxu0 %v287
  %1374 = vmatmul.mubr.bf16.gmra.mrb[0].mxu0 %v286
  %v1375 = vpop.f32.mrb[0].mxu0
  %v1376 = vpop.f32.mrb[0].mxu0
  %v1377 = vpop.f32.mrb[0].mxu0
  %v1378 = vpop.f32.mrb[0].mxu0
  %1379 = vmatprep.mubr.bf16.mxu0 %v289
  %1380 = vmatmul.mubr.bf16.gmra.mrb[0].mxu0 %v288
  %v1381 = vpop.f32.mrb[0].mxu0
  %v1382 = vpop.f32.mrb[0].mxu0
  %v1383 = vpop.f32.mrb[0].mxu0
  %v1384 = vpop.f32.mrb[0].mxu0
  %1385 = vmatprep.mubr.bf16.mxu0 %v291
  %1386 = vmatmul.mubr.bf16.gmra.mrb[0].mxu0 %v290
  %v1387 = vpop.f32.mrb[0].mxu0
  %v1388 = vadd.f32 0.0, %v1387
  %v1389 = vpop.f32.mrb[0].mxu0
  %v1390 = vpop.f32.mrb[0].mxu0
  %v1391 = vadd.f32 0.0, %v1390
  %v1392 = vpop.f32.mrb[0].mxu0
  %1393 = vmatprep.mubr.bf16.mxu0 %v293
  %1394 = vmatmul.mubr.bf16.gmra.mrb[0].mxu0 %v292
  %v1395 = vpop.f32.mrb[0].mxu0
  %v1396 = vpop.f32.mrb[0].mxu0
  %v1397 = vadd.f32 0.0, %v1396
  %v1398 = vpop.f32.mrb[0].mxu0
  %v1399 = vpop.f32.mrb[0].mxu0
  %v1400 = vadd.f32 0.0, %v1399
  %1401 = vdwg.mxu0
  %v1402 = vld [vmem:[%s3] sm:$0xff]
  %v1403 = vld [vmem:[%s3 + $0x8] sm:$0xff]
  %v1404 = vld [vmem:[%s3 + $0x10] sm:$0xff]
  %v1405 = vld [vmem:[%s3 + $0x18] sm:$0xff]
  %v1406 = vld [vmem:[%s3 + $0x20] sm:$0xff]
  %v1407 = vld [vmem:[%s3 + $0x28] sm:$0xff]
  %v1408 = vld [vmem:[%s3 + $0x30] sm:$0xff]
  %v1409 = vld [vmem:[%s3 + $0x38] sm:$0xff]
  %v1410 = vld [vmem:[%s3 + $0x40] sm:$0xff]
  %v1411 = vld [vmem:[%s3 + $0x48] sm:$0xff]
  %v1412 = vld [vmem:[%s3 + $0x50] sm:$0xff]
  %v1413 = vld [vmem:[%s3 + $0x58] sm:$0xff]
  %v1414 = vld [vmem:[%s3 + $0x60] sm:$0xff]
  %v1415 = vld [vmem:[%s3 + $0x68] sm:$0xff]
  %v1416 = vld [vmem:[%s3 + $0x70] sm:$0xff]
  %v1417 = vld [vmem:[%s3 + $0x78] sm:$0xff]
  %1419 = vset.pattern.permute.xlu0 0
  %1420 = vperm.xlu0 %1419, %v1402
  %v1421 = vpop.permute.xlu0 %1420
  %1424 = vset.pattern.permute.xlu0 0
  %1425 = vperm.xlu0 %1424, %v1403
  %v1426 = vpop.permute.xlu0 %1425
  %1429 = vset.pattern.permute.xlu0 0
  %1430 = vperm.xlu0 %1429, %v1404
  %v1431 = vpop.permute.xlu0 %1430
  %1434 = vset.pattern.permute.xlu0 0
  %1435 = vperm.xlu0 %1434, %v1405
  %v1436 = vpop.permute.xlu0 %1435
  %1439 = vset.pattern.permute.xlu0 0
  %1440 = vperm.xlu0 %1439, %v1406
  %v1441 = vpop.permute.xlu0 %1440
  %1444 = vset.pattern.permute.xlu0 0
  %1445 = vperm.xlu0 %1444, %v1407
  %v1446 = vpop.permute.xlu0 %1445
  %1449 = vset.pattern.permute.xlu0 0
  %1450 = vperm.xlu0 %1449, %v1408
  %v1451 = vpop.permute.xlu0 %1450
  %1454 = vset.pattern.permute.xlu0 0
  %1455 = vperm.xlu0 %1454, %v1409
  %v1456 = vpop.permute.xlu0 %1455
  %1459 = vset.pattern.permute.xlu0 0
  %1460 = vperm.xlu0 %1459, %v1410
  %v1461 = vpop.permute.xlu0 %1460
  %1464 = vset.pattern.permute.xlu0 0
  %1465 = vperm.xlu0 %1464, %v1411
  %v1466 = vpop.permute.xlu0 %1465
  %1469 = vset.pattern.permute.xlu0 0
  %1470 = vperm.xlu0 %1469, %v1412
  %v1471 = vpop.permute.xlu0 %1470
  %1474 = vset.pattern.permute.xlu0 0
  %1475 = vperm.xlu0 %1474, %v1413
  %v1476 = vpop.permute.xlu0 %1475
  %1479 = vset.pattern.permute.xlu0 0
  %1480 = vperm.xlu0 %1479, %v1414
  %v1481 = vpop.permute.xlu0 %1480
  %1484 = vset.pattern.permute.xlu0 0
  %1485 = vperm.xlu0 %1484, %v1415
  %v1486 = vpop.permute.xlu0 %1485
  %1489 = vset.pattern.permute.xlu0 0
  %1490 = vperm.xlu0 %1489, %v1416
  %v1491 = vpop.permute.xlu0 %1490
  %1494 = vset.pattern.permute.xlu0 0
  %1495 = vperm.xlu0 %1494, %v1417
  %v1496 = vpop.permute.xlu0 %1495
  %v1498 = vadd.f32 %v1097, %v1421
  %v1499 = vadd.f32 %v1100, %v1426
  %v1500 = vadd.f32 %v1106, %v1431
  %v1501 = vadd.f32 %v1109, %v1436
  %v1502 = vadd.f32 %v1194, %v1441
  %v1503 = vadd.f32 %v1197, %v1446
  %v1504 = vadd.f32 %v1203, %v1451
  %v1505 = vadd.f32 %v1206, %v1456
  %v1506 = vadd.f32 %v1291, %v1461
  %v1507 = vadd.f32 %v1294, %v1466
  %v1508 = vadd.f32 %v1300, %v1471
  %v1509 = vadd.f32 %v1303, %v1476
  %v1510 = vadd.f32 %v1388, %v1481
  %v1511 = vadd.f32 %v1391, %v1486
  %v1512 = vadd.f32 %v1397, %v1491
  %v1513 = vadd.f32 %v1400, %v1496
  %vm1514 = vcmp.gt.f32.partialorder %v1498, 0.0
  %vm1515 = vcmp.gt.f32.partialorder %v1499, 0.0
  %vm1516 = vcmp.gt.f32.partialorder %v1500, 0.0
  %vm1517 = vcmp.gt.f32.partialorder %v1501, 0.0
  %vm1518 = vcmp.gt.f32.partialorder %v1502, 0.0
  %vm1519 = vcmp.gt.f32.partialorder %v1503, 0.0
  %vm1520 = vcmp.gt.f32.partialorder %v1504, 0.0
  %vm1521 = vcmp.gt.f32.partialorder %v1505, 0.0
  %vm1522 = vcmp.gt.f32.partialorder %v1506, 0.0
  %vm1523 = vcmp.gt.f32.partialorder %v1507, 0.0
  %vm1524 = vcmp.gt.f32.partialorder %v1508, 0.0
  %vm1525 = vcmp.gt.f32.partialorder %v1509, 0.0
  %vm1526 = vcmp.gt.f32.partialorder %v1510, 0.0
  %vm1527 = vcmp.gt.f32.partialorder %v1511, 0.0
  %vm1528 = vcmp.gt.f32.partialorder %v1512, 0.0
  %vm1529 = vcmp.gt.f32.partialorder %v1513, 0.0
  %v1530 = vmin.f32 %v1498, 0.0
  %v1531 = vmin.f32 %v1499, 0.0
  %v1532 = vmin.f32 %v1500, 0.0
  %v1533 = vmin.f32 %v1501, 0.0
  %v1534 = vmin.f32 %v1502, 0.0
  %v1535 = vmin.f32 %v1503, 0.0
  %v1536 = vmin.f32 %v1504, 0.0
  %v1537 = vmin.f32 %v1505, 0.0
  %v1538 = vmin.f32 %v1506, 0.0
  %v1539 = vmin.f32 %v1507, 0.0
  %v1540 = vmin.f32 %v1508, 0.0
  %v1541 = vmin.f32 %v1509, 0.0
  %v1542 = vmin.f32 %v1510, 0.0
  %v1543 = vmin.f32 %v1511, 0.0
  %v1544 = vmin.f32 %v1512, 0.0
  %v1545 = vmin.f32 %v1513, 0.0
  %v1546 = vmul.f32 %v1530, 1.442695
  %v1547 = vpow.pop %v1546
  %v1548 = vmul.f32 %v1531, 1.442695
  %v1549 = vpow.pop %v1548
  %v1550 = vmul.f32 %v1532, 1.442695
  %v1551 = vpow.pop %v1550
  %v1552 = vmul.f32 %v1533, 1.442695
  %v1553 = vpow.pop %v1552
  %v1554 = vmul.f32 %v1534, 1.442695
  %v1555 = vpow.pop %v1554
  %v1556 = vmul.f32 %v1535, 1.442695
  %v1557 = vpow.pop %v1556
  %v1558 = vmul.f32 %v1536, 1.442695
  %v1559 = vpow.pop %v1558
  %v1560 = vmul.f32 %v1537, 1.442695
  %v1561 = vpow.pop %v1560
  %v1562 = vmul.f32 %v1538, 1.442695
  %v1563 = vpow.pop %v1562
  %v1564 = vmul.f32 %v1539, 1.442695
  %v1565 = vpow.pop %v1564
  %v1566 = vmul.f32 %v1540, 1.442695
  %v1567 = vpow.pop %v1566
  %v1568 = vmul.f32 %v1541, 1.442695
  %v1569 = vpow.pop %v1568
  %v1570 = vmul.f32 %v1542, 1.442695
  %v1571 = vpow.pop %v1570
  %v1572 = vmul.f32 %v1543, 1.442695
  %v1573 = vpow.pop %v1572
  %v1574 = vmul.f32 %v1544, 1.442695
  %v1575 = vpow.pop %v1574
  %v1576 = vmul.f32 %v1545, 1.442695
  %v1577 = vpow.pop %v1576
  %v1578 = vsub.f32 %v1547, 1.0
  %v1579 = vsub.f32 %v1549, 1.0
  %v1580 = vsub.f32 %v1551, 1.0
  %v1581 = vsub.f32 %v1553, 1.0
  %v1582 = vsub.f32 %v1555, 1.0
  %v1583 = vsub.f32 %v1557, 1.0
  %v1584 = vsub.f32 %v1559, 1.0
  %v1585 = vsub.f32 %v1561, 1.0
  %v1586 = vsub.f32 %v1563, 1.0
  %v1587 = vsub.f32 %v1565, 1.0
  %v1588 = vsub.f32 %v1567, 1.0
  %v1589 = vsub.f32 %v1569, 1.0
  %v1590 = vsub.f32 %v1571, 1.0
  %v1591 = vsub.f32 %v1573, 1.0
  %v1592 = vsub.f32 %v1575, 1.0
  %v1593 = vsub.f32 %v1577, 1.0
  %v1594 = vsel %vm1514, %v1498, %v1578
  %v1595 = vsel %vm1515, %v1499, %v1579
  %v1596 = vsel %vm1516, %v1500, %v1580
  %v1597 = vsel %vm1517, %v1501, %v1581
  %v1598 = vsel %vm1518, %v1502, %v1582
  %v1599 = vsel %vm1519, %v1503, %v1583
  %v1600 = vsel %vm1520, %v1504, %v1584
  %v1601 = vsel %vm1521, %v1505, %v1585
  %v1602 = vsel %vm1522, %v1506, %v1586
  %v1603 = vsel %vm1523, %v1507, %v1587
  %v1604 = vsel %vm1524, %v1508, %v1588
  %v1605 = vsel %vm1525, %v1509, %v1589
  %v1606 = vsel %vm1526, %v1510, %v1590
  %v1607 = vsel %vm1527, %v1511, %v1591
  %v1608 = vsel %vm1528, %v1512, %v1592
  %v1609 = vsel %vm1529, %v1513, %v1593
  %v1610 = vpack.c.bf16 %v1595, %v1594
  %v1611 = vpack.c.bf16 %v1597, %v1596
  %v1612 = vpack.c.bf16 %v1599, %v1598
  %v1613 = vpack.c.bf16 %v1601, %v1600
  %v1614 = vpack.c.bf16 %v1603, %v1602
  %v1615 = vpack.c.bf16 %v1605, %v1604
  %v1616 = vpack.c.bf16 %v1607, %v1606
  %v1617 = vpack.c.bf16 %v1609, %v1608
  %v1618 = vld [vmem:[%s4] sm:$0xff]
  %v1619 = vld [vmem:[%s4 + $0x8] sm:$0xff]
  %v1620 = vld [vmem:[%s4 + $0x10] sm:$0xff]
  %v1621 = vld [vmem:[%s4 + $0x18] sm:$0xff]
  %v1622 = vld [vmem:[%s4 + $0x20] sm:$0xff]
  %v1623 = vld [vmem:[%s4 + $0x28] sm:$0xff]
  %v1624 = vld [vmem:[%s4 + $0x30] sm:$0xff]
  %v1625 = vld [vmem:[%s4 + $0x38] sm:$0xff]
  %v1626 = vld [vmem:[%s4 + $0x40] sm:$0xff]
  %v1627 = vld [vmem:[%s4 + $0x48] sm:$0xff]
  %v1628 = vld [vmem:[%s4 + $0x50] sm:$0xff]
  %v1629 = vld [vmem:[%s4 + $0x58] sm:$0xff]
  %v1630 = vld [vmem:[%s4 + $0x60] sm:$0xff]
  %v1631 = vld [vmem:[%s4 + $0x68] sm:$0xff]
  %v1632 = vld [vmem:[%s4 + $0x70] sm:$0xff]
  %v1633 = vld [vmem:[%s4 + $0x78] sm:$0xff]
  %v1634 = vld [vmem:[%s4 + $0x80] sm:$0xff]
  %v1635 = vld [vmem:[%s4 + $0x88] sm:$0xff]
  %v1636 = vld [vmem:[%s4 + $0x90] sm:$0xff]
  %v1637 = vld [vmem:[%s4 + $0x98] sm:$0xff]
  %v1638 = vld [vmem:[%s4 + $0xa0] sm:$0xff]
  %v1639 = vld [vmem:[%s4 + $0xa8] sm:$0xff]
  %v1640 = vld [vmem:[%s4 + $0xb0] sm:$0xff]
  %v1641 = vld [vmem:[%s4 + $0xb8] sm:$0xff]
  %v1642 = vld [vmem:[%s4 + $0xc0] sm:$0xff]
  %v1643 = vld [vmem:[%s4 + $0xc8] sm:$0xff]
  %v1644 = vld [vmem:[%s4 + $0xd0] sm:$0xff]
  %v1645 = vld [vmem:[%s4 + $0xd8] sm:$0xff]
  %v1646 = vld [vmem:[%s4 + $0xe0] sm:$0xff]
  %v1647 = vld [vmem:[%s4 + $0xe8] sm:$0xff]
  %v1648 = vld [vmem:[%s4 + $0xf0] sm:$0xff]
  %v1649 = vld [vmem:[%s4 + $0xf8] sm:$0xff]
  %v1650 = vld [vmem:[%s4 + $0x100] sm:$0xff]
  %v1651 = vld [vmem:[%s4 + $0x108] sm:$0xff]
  %v1652 = vld [vmem:[%s4 + $0x110] sm:$0xff]
  %v1653 = vld [vmem:[%s4 + $0x118] sm:$0xff]
  %v1654 = vld [vmem:[%s4 + $0x120] sm:$0xff]
  %v1655 = vld [vmem:[%s4 + $0x128] sm:$0xff]
  %v1656 = vld [vmem:[%s4 + $0x130] sm:$0xff]
  %v1657 = vld [vmem:[%s4 + $0x138] sm:$0xff]
  %v1658 = vld [vmem:[%s4 + $0x140] sm:$0xff]
  %v1659 = vld [vmem:[%s4 + $0x148] sm:$0xff]
  %v1660 = vld [vmem:[%s4 + $0x150] sm:$0xff]
  %v1661 = vld [vmem:[%s4 + $0x158] sm:$0xff]
  %v1662 = vld [vmem:[%s4 + $0x160] sm:$0xff]
  %v1663 = vld [vmem:[%s4 + $0x168] sm:$0xff]
  %v1664 = vld [vmem:[%s4 + $0x170] sm:$0xff]
  %v1665 = vld [vmem:[%s4 + $0x178] sm:$0xff]
  %v1666 = vld [vmem:[%s4 + $0x180] sm:$0xff]
  %v1667 = vld [vmem:[%s4 + $0x188] sm:$0xff]
  %v1668 = vld [vmem:[%s4 + $0x190] sm:$0xff]
  %v1669 = vld [vmem:[%s4 + $0x198] sm:$0xff]
  %v1670 = vld [vmem:[%s4 + $0x1a0] sm:$0xff]
  %v1671 = vld [vmem:[%s4 + $0x1a8] sm:$0xff]
  %v1672 = vld [vmem:[%s4 + $0x1b0] sm:$0xff]
  %v1673 = vld [vmem:[%s4 + $0x1b8] sm:$0xff]
  %v1674 = vld [vmem:[%s4 + $0x1c0] sm:$0xff]
  %v1675 = vld [vmem:[%s4 + $0x1c8] sm:$0xff]
  %v1676 = vld [vmem:[%s4 + $0x1d0] sm:$0xff]
  %v1677 = vld [vmem:[%s4 + $0x1d8] sm:$0xff]
  %v1678 = vld [vmem:[%s4 + $0x1e0] sm:$0xff]
  %v1679 = vld [vmem:[%s4 + $0x1e8] sm:$0xff]
  %v1680 = vld [vmem:[%s4 + $0x1f0] sm:$0xff]
  %v1681 = vld [vmem:[%s4 + $0x1f8] sm:$0xff]
  %v1682 = vld [vmem:[%s4 + $0x200] sm:$0xff]
  %v1683 = vld [vmem:[%s4 + $0x208] sm:$0xff]
  %v1684 = vld [vmem:[%s4 + $0x210] sm:$0xff]
  %v1685 = vld [vmem:[%s4 + $0x218] sm:$0xff]
  %v1686 = vld [vmem:[%s4 + $0x220] sm:$0xff]
  %v1687 = vld [vmem:[%s4 + $0x228] sm:$0xff]
  %v1688 = vld [vmem:[%s4 + $0x230] sm:$0xff]
  %v1689 = vld [vmem:[%s4 + $0x238] sm:$0xff]
  %v1690 = vld [vmem:[%s4 + $0x240] sm:$0xff]
  %v1691 = vld [vmem:[%s4 + $0x248] sm:$0xff]
  %v1692 = vld [vmem:[%s4 + $0x250] sm:$0xff]
  %v1693 = vld [vmem:[%s4 + $0x258] sm:$0xff]
  %v1694 = vld [vmem:[%s4 + $0x260] sm:$0xff]
  %v1695 = vld [vmem:[%s4 + $0x268] sm:$0xff]
  %v1696 = vld [vmem:[%s4 + $0x270] sm:$0xff]
  %v1697 = vld [vmem:[%s4 + $0x278] sm:$0xff]
  %v1698 = vld [vmem:[%s4 + $0x280] sm:$0xff]
  %v1699 = vld [vmem:[%s4 + $0x288] sm:$0xff]
  %v1700 = vld [vmem:[%s4 + $0x290] sm:$0xff]
  %v1701 = vld [vmem:[%s4 + $0x298] sm:$0xff]
  %v1702 = vld [vmem:[%s4 + $0x2a0] sm:$0xff]
  %v1703 = vld [vmem:[%s4 + $0x2a8] sm:$0xff]
  %v1704 = vld [vmem:[%s4 + $0x2b0] sm:$0xff]
  %v1705 = vld [vmem:[%s4 + $0x2b8] sm:$0xff]
  %v1706 = vld [vmem:[%s4 + $0x2c0] sm:$0xff]
  %v1707 = vld [vmem:[%s4 + $0x2c8] sm:$0xff]
  %v1708 = vld [vmem:[%s4 + $0x2d0] sm:$0xff]
  %v1709 = vld [vmem:[%s4 + $0x2d8] sm:$0xff]
  %v1710 = vld [vmem:[%s4 + $0x2e0] sm:$0xff]
  %v1711 = vld [vmem:[%s4 + $0x2e8] sm:$0xff]
  %v1712 = vld [vmem:[%s4 + $0x2f0] sm:$0xff]
  %v1713 = vld [vmem:[%s4 + $0x2f8] sm:$0xff]
  %v1714 = vld [vmem:[%s4 + $0x300] sm:$0xff]
  %v1715 = vld [vmem:[%s4 + $0x308] sm:$0xff]
  %v1716 = vld [vmem:[%s4 + $0x310] sm:$0xff]
  %v1717 = vld [vmem:[%s4 + $0x318] sm:$0xff]
  %v1718 = vld [vmem:[%s4 + $0x320] sm:$0xff]
  %v1719 = vld [vmem:[%s4 + $0x328] sm:$0xff]
  %v1720 = vld [vmem:[%s4 + $0x330] sm:$0xff]
  %v1721 = vld [vmem:[%s4 + $0x338] sm:$0xff]
  %v1722 = vld [vmem:[%s4 + $0x340] sm:$0xff]
  %v1723 = vld [vmem:[%s4 + $0x348] sm:$0xff]
  %v1724 = vld [vmem:[%s4 + $0x350] sm:$0xff]
  %v1725 = vld [vmem:[%s4 + $0x358] sm:$0xff]
  %v1726 = vld [vmem:[%s4 + $0x360] sm:$0xff]
  %v1727 = vld [vmem:[%s4 + $0x368] sm:$0xff]
  %v1728 = vld [vmem:[%s4 + $0x370] sm:$0xff]
  %v1729 = vld [vmem:[%s4 + $0x378] sm:$0xff]
  %v1730 = vld [vmem:[%s4 + $0x380] sm:$0xff]
  %v1731 = vld [vmem:[%s4 + $0x388] sm:$0xff]
  %v1732 = vld [vmem:[%s4 + $0x390] sm:$0xff]
  %v1733 = vld [vmem:[%s4 + $0x398] sm:$0xff]
  %v1734 = vld [vmem:[%s4 + $0x3a0] sm:$0xff]
  %v1735 = vld [vmem:[%s4 + $0x3a8] sm:$0xff]
  %v1736 = vld [vmem:[%s4 + $0x3b0] sm:$0xff]
  %v1737 = vld [vmem:[%s4 + $0x3b8] sm:$0xff]
  %v1738 = vld [vmem:[%s4 + $0x3c0] sm:$0xff]
  %v1739 = vld [vmem:[%s4 + $0x3c8] sm:$0xff]
  %v1740 = vld [vmem:[%s4 + $0x3d0] sm:$0xff]
  %v1741 = vld [vmem:[%s4 + $0x3d8] sm:$0xff]
  %v1742 = vld [vmem:[%s4 + $0x3e0] sm:$0xff]
  %v1743 = vld [vmem:[%s4 + $0x3e8] sm:$0xff]
  %v1744 = vld [vmem:[%s4 + $0x3f0] sm:$0xff]
  %v1745 = vld [vmem:[%s4 + $0x3f8] sm:$0xff]
  %v1874 = vunpack.c.l.b16 %v1618
  %v1875 = vunpack.c.h.b16 %v1618
  %v1876 = vunpack.c.l.b16 %v1619
  %v1877 = vunpack.c.h.b16 %v1619
  %v1878 = vunpack.c.l.b16 %v1620
  %v1879 = vunpack.c.h.b16 %v1620
  %v1880 = vunpack.c.l.b16 %v1621
  %v1881 = vunpack.c.h.b16 %v1621
  %v1882 = vunpack.c.l.b16 %v1622
  %v1883 = vunpack.c.h.b16 %v1622
  %v1884 = vunpack.c.l.b16 %v1623
  %v1885 = vunpack.c.h.b16 %v1623
  %v1886 = vunpack.c.l.b16 %v1624
  %v1887 = vunpack.c.h.b16 %v1624
  %v1888 = vunpack.c.l.b16 %v1625
  %v1889 = vunpack.c.h.b16 %v1625
  %v1890 = vunpack.c.l.b16 %v1626
  %v1891 = vunpack.c.h.b16 %v1626
  %v1892 = vunpack.c.l.b16 %v1627
  %v1893 = vunpack.c.h.b16 %v1627
  %v1894 = vunpack.c.l.b16 %v1628
  %v1895 = vunpack.c.h.b16 %v1628
  %v1896 = vunpack.c.l.b16 %v1629
  %v1897 = vunpack.c.h.b16 %v1629
  %v1898 = vunpack.c.l.b16 %v1630
  %v1899 = vunpack.c.h.b16 %v1630
  %v1900 = vunpack.c.l.b16 %v1631
  %v1901 = vunpack.c.h.b16 %v1631
  %v1902 = vunpack.c.l.b16 %v1632
  %v1903 = vunpack.c.h.b16 %v1632
  %v1904 = vunpack.c.l.b16 %v1633
  %v1905 = vunpack.c.h.b16 %v1633
  %v1906 = vunpack.c.l.b16 %v1634
  %v1907 = vunpack.c.h.b16 %v1634
  %v1908 = vunpack.c.l.b16 %v1635
  %v1909 = vunpack.c.h.b16 %v1635
  %v1910 = vunpack.c.l.b16 %v1636
  %v1911 = vunpack.c.h.b16 %v1636
  %v1912 = vunpack.c.l.b16 %v1637
  %v1913 = vunpack.c.h.b16 %v1637
  %v1914 = vunpack.c.l.b16 %v1638
  %v1915 = vunpack.c.h.b16 %v1638
  %v1916 = vunpack.c.l.b16 %v1639
  %v1917 = vunpack.c.h.b16 %v1639
  %v1918 = vunpack.c.l.b16 %v1640
  %v1919 = vunpack.c.h.b16 %v1640
  %v1920 = vunpack.c.l.b16 %v1641
  %v1921 = vunpack.c.h.b16 %v1641
  %v1922 = vunpack.c.l.b16 %v1642
  %v1923 = vunpack.c.h.b16 %v1642
  %v1924 = vunpack.c.l.b16 %v1643
  %v1925 = vunpack.c.h.b16 %v1643
  %v1926 = vunpack.c.l.b16 %v1644
  %v1927 = vunpack.c.h.b16 %v1644
  %v1928 = vunpack.c.l.b16 %v1645
  %v1929 = vunpack.c.h.b16 %v1645
  %v1930 = vunpack.c.l.b16 %v1646
  %v1931 = vunpack.c.h.b16 %v1646
  %v1932 = vunpack.c.l.b16 %v1647
  %v1933 = vunpack.c.h.b16 %v1647
  %v1934 = vunpack.c.l.b16 %v1648
  %v1935 = vunpack.c.h.b16 %v1648
  %v1936 = vunpack.c.l.b16 %v1649
  %v1937 = vunpack.c.h.b16 %v1649
  %v1938 = vunpack.c.l.b16 %v1650
  %v1939 = vunpack.c.h.b16 %v1650
  %v1940 = vunpack.c.l.b16 %v1651
  %v1941 = vunpack.c.h.b16 %v1651
  %v1942 = vunpack.c.l.b16 %v1652
  %v1943 = vunpack.c.h.b16 %v1652
  %v1944 = vunpack.c.l.b16 %v1653
  %v1945 = vunpack.c.h.b16 %v1653
  %v1946 = vunpack.c.l.b16 %v1654
  %v1947 = vunpack.c.h.b16 %v1654
  %v1948 = vunpack.c.l.b16 %v1655
  %v1949 = vunpack.c.h.b16 %v1655
  %v1950 = vunpack.c.l.b16 %v1656
  %v1951 = vunpack.c.h.b16 %v1656
  %v1952 = vunpack.c.l.b16 %v1657
  %v1953 = vunpack.c.h.b16 %v1657
  %v1954 = vunpack.c.l.b16 %v1658
  %v1955 = vunpack.c.h.b16 %v1658
  %v1956 = vunpack.c.l.b16 %v1659
  %v1957 = vunpack.c.h.b16 %v1659
  %v1958 = vunpack.c.l.b16 %v1660
  %v1959 = vunpack.c.h.b16 %v1660
  %v1960 = vunpack.c.l.b16 %v1661
  %v1961 = vunpack.c.h.b16 %v1661
  %v1962 = vunpack.c.l.b16 %v1662
  %v1963 = vunpack.c.h.b16 %v1662
  %v1964 = vunpack.c.l.b16 %v1663
  %v1965 = vunpack.c.h.b16 %v1663
  %v1966 = vunpack.c.l.b16 %v1664
  %v1967 = vunpack.c.h.b16 %v1664
  %v1968 = vunpack.c.l.b16 %v1665
  %v1969 = vunpack.c.h.b16 %v1665
  %v1970 = vunpack.c.l.b16 %v1666
  %v1971 = vunpack.c.h.b16 %v1666
  %v1972 = vunpack.c.l.b16 %v1667
  %v1973 = vunpack.c.h.b16 %v1667
  %v1974 = vunpack.c.l.b16 %v1668
  %v1975 = vunpack.c.h.b16 %v1668
  %v1976 = vunpack.c.l.b16 %v1669
  %v1977 = vunpack.c.h.b16 %v1669
  %v1978 = vunpack.c.l.b16 %v1670
  %v1979 = vunpack.c.h.b16 %v1670
  %v1980 = vunpack.c.l.b16 %v1671
  %v1981 = vunpack.c.h.b16 %v1671
  %v1982 = vunpack.c.l.b16 %v1672
  %v1983 = vunpack.c.h.b16 %v1672
  %v1984 = vunpack.c.l.b16 %v1673
  %v1985 = vunpack.c.h.b16 %v1673
  %v1986 = vunpack.c.l.b16 %v1674
  %v1987 = vunpack.c.h.b16 %v1674
  %v1988 = vunpack.c.l.b16 %v1675
  %v1989 = vunpack.c.h.b16 %v1675
  %v1990 = vunpack.c.l.b16 %v1676
  %v1991 = vunpack.c.h.b16 %v1676
  %v1992 = vunpack.c.l.b16 %v1677
  %v1993 = vunpack.c.h.b16 %v1677
  %v1994 = vunpack.c.l.b16 %v1678
  %v1995 = vunpack.c.h.b16 %v1678
  %v1996 = vunpack.c.l.b16 %v1679
  %v1997 = vunpack.c.h.b16 %v1679
  %v1998 = vunpack.c.l.b16 %v1680
  %v1999 = vunpack.c.h.b16 %v1680
  %v2000 = vunpack.c.l.b16 %v1681
  %v2001 = vunpack.c.h.b16 %v1681
  %v2002 = vunpack.c.l.b16 %v1682
  %v2003 = vunpack.c.h.b16 %v1682
  %v2004 = vunpack.c.l.b16 %v1683
  %v2005 = vunpack.c.h.b16 %v1683
  %v2006 = vunpack.c.l.b16 %v1684
  %v2007 = vunpack.c.h.b16 %v1684
  %v2008 = vunpack.c.l.b16 %v1685
  %v2009 = vunpack.c.h.b16 %v1685
  %v2010 = vunpack.c.l.b16 %v1686
  %v2011 = vunpack.c.h.b16 %v1686
  %v2012 = vunpack.c.l.b16 %v1687
  %v2013 = vunpack.c.h.b16 %v1687
  %v2014 = vunpack.c.l.b16 %v1688
  %v2015 = vunpack.c.h.b16 %v1688
  %v2016 = vunpack.c.l.b16 %v1689
  %v2017 = vunpack.c.h.b16 %v1689
  %v2018 = vunpack.c.l.b16 %v1690
  %v2019 = vunpack.c.h.b16 %v1690
  %v2020 = vunpack.c.l.b16 %v1691
  %v2021 = vunpack.c.h.b16 %v1691
  %v2022 = vunpack.c.l.b16 %v1692
  %v2023 = vunpack.c.h.b16 %v1692
  %v2024 = vunpack.c.l.b16 %v1693
  %v2025 = vunpack.c.h.b16 %v1693
  %v2026 = vunpack.c.l.b16 %v1694
  %v2027 = vunpack.c.h.b16 %v1694
  %v2028 = vunpack.c.l.b16 %v1695
  %v2029 = vunpack.c.h.b16 %v1695
  %v2030 = vunpack.c.l.b16 %v1696
  %v2031 = vunpack.c.h.b16 %v1696
  %v2032 = vunpack.c.l.b16 %v1697
  %v2033 = vunpack.c.h.b16 %v1697
  %v2034 = vunpack.c.l.b16 %v1698
  %v2035 = vunpack.c.h.b16 %v1698
  %v2036 = vunpack.c.l.b16 %v1699
  %v2037 = vunpack.c.h.b16 %v1699
  %v2038 = vunpack.c.l.b16 %v1700
  %v2039 = vunpack.c.h.b16 %v1700
  %v2040 = vunpack.c.l.b16 %v1701
  %v2041 = vunpack.c.h.b16 %v1701
  %v2042 = vunpack.c.l.b16 %v1702
  %v2043 = vunpack.c.h.b16 %v1702
  %v2044 = vunpack.c.l.b16 %v1703
  %v2045 = vunpack.c.h.b16 %v1703
  %v2046 = vunpack.c.l.b16 %v1704
  %v2047 = vunpack.c.h.b16 %v1704
  %v2048 = vunpack.c.l.b16 %v1705
  %v2049 = vunpack.c.h.b16 %v1705
  %v2050 = vunpack.c.l.b16 %v1706
  %v2051 = vunpack.c.h.b16 %v1706
  %v2052 = vunpack.c.l.b16 %v1707
  %v2053 = vunpack.c.h.b16 %v1707
  %v2054 = vunpack.c.l.b16 %v1708
  %v2055 = vunpack.c.h.b16 %v1708
  %v2056 = vunpack.c.l.b16 %v1709
  %v2057 = vunpack.c.h.b16 %v1709
  %v2058 = vunpack.c.l.b16 %v1710
  %v2059 = vunpack.c.h.b16 %v1710
  %v2060 = vunpack.c.l.b16 %v1711
  %v2061 = vunpack.c.h.b16 %v1711
  %v2062 = vunpack.c.l.b16 %v1712
  %v2063 = vunpack.c.h.b16 %v1712
  %v2064 = vunpack.c.l.b16 %v1713
  %v2065 = vunpack.c.h.b16 %v1713
  %v2066 = vunpack.c.l.b16 %v1714
  %v2067 = vunpack.c.h.b16 %v1714
  %v2068 = vunpack.c.l.b16 %v1715
  %v2069 = vunpack.c.h.b16 %v1715
  %v2070 = vunpack.c.l.b16 %v1716
  %v2071 = vunpack.c.h.b16 %v1716
  %v2072 = vunpack.c.l.b16 %v1717
  %v2073 = vunpack.c.h.b16 %v1717
  %v2074 = vunpack.c.l.b16 %v1718
  %v2075 = vunpack.c.h.b16 %v1718
  %v2076 = vunpack.c.l.b16 %v1719
  %v2077 = vunpack.c.h.b16 %v1719
  %v2078 = vunpack.c.l.b16 %v1720
  %v2079 = vunpack.c.h.b16 %v1720
  %v2080 = vunpack.c.l.b16 %v1721
  %v2081 = vunpack.c.h.b16 %v1721
  %v2082 = vunpack.c.l.b16 %v1722
  %v2083 = vunpack.c.h.b16 %v1722
  %v2084 = vunpack.c.l.b16 %v1723
  %v2085 = vunpack.c.h.b16 %v1723
  %v2086 = vunpack.c.l.b16 %v1724
  %v2087 = vunpack.c.h.b16 %v1724
  %v2088 = vunpack.c.l.b16 %v1725
  %v2089 = vunpack.c.h.b16 %v1725
  %v2090 = vunpack.c.l.b16 %v1726
  %v2091 = vunpack.c.h.b16 %v1726
  %v2092 = vunpack.c.l.b16 %v1727
  %v2093 = vunpack.c.h.b16 %v1727
  %v2094 = vunpack.c.l.b16 %v1728
  %v2095 = vunpack.c.h.b16 %v1728
  %v2096 = vunpack.c.l.b16 %v1729
  %v2097 = vunpack.c.h.b16 %v1729
  %v2098 = vunpack.c.l.b16 %v1730
  %v2099 = vunpack.c.h.b16 %v1730
  %v2100 = vunpack.c.l.b16 %v1731
  %v2101 = vunpack.c.h.b16 %v1731
  %v2102 = vunpack.c.l.b16 %v1732
  %v2103 = vunpack.c.h.b16 %v1732
  %v2104 = vunpack.c.l.b16 %v1733
  %v2105 = vunpack.c.h.b16 %v1733
  %v2106 = vunpack.c.l.b16 %v1734
  %v2107 = vunpack.c.h.b16 %v1734
  %v2108 = vunpack.c.l.b16 %v1735
  %v2109 = vunpack.c.h.b16 %v1735
  %v2110 = vunpack.c.l.b16 %v1736
  %v2111 = vunpack.c.h.b16 %v1736
  %v2112 = vunpack.c.l.b16 %v1737
  %v2113 = vunpack.c.h.b16 %v1737
  %v2114 = vunpack.c.l.b16 %v1738
  %v2115 = vunpack.c.h.b16 %v1738
  %v2116 = vunpack.c.l.b16 %v1739
  %v2117 = vunpack.c.h.b16 %v1739
  %v2118 = vunpack.c.l.b16 %v1740
  %v2119 = vunpack.c.h.b16 %v1740
  %v2120 = vunpack.c.l.b16 %v1741
  %v2121 = vunpack.c.h.b16 %v1741
  %v2122 = vunpack.c.l.b16 %v1742
  %v2123 = vunpack.c.h.b16 %v1742
  %v2124 = vunpack.c.l.b16 %v1743
  %v2125 = vunpack.c.h.b16 %v1743
  %v2126 = vunpack.c.l.b16 %v1744
  %v2127 = vunpack.c.h.b16 %v1744
  %v2128 = vunpack.c.l.b16 %v1745
  %v2129 = vunpack.c.h.b16 %v1745
  %v2130 = vpack.c.b16 %v1890, %v1874
  %v2131 = vpack.c.b16 %v1891, %v1875
  %v2132 = vpack.c.b16 %v1892, %v1876
  %v2133 = vpack.c.b16 %v1893, %v1877
  %v2134 = vpack.c.b16 %v1894, %v1878
  %v2135 = vpack.c.b16 %v1895, %v1879
  %v2136 = vpack.c.b16 %v1896, %v1880
  %v2137 = vpack.c.b16 %v1897, %v1881
  %v2138 = vpack.c.b16 %v1898, %v1882
  %v2139 = vpack.c.b16 %v1899, %v1883
  %v2140 = vpack.c.b16 %v1900, %v1884
  %v2141 = vpack.c.b16 %v1901, %v1885
  %v2142 = vpack.c.b16 %v1902, %v1886
  %v2143 = vpack.c.b16 %v1903, %v1887
  %v2144 = vpack.c.b16 %v1904, %v1888
  %v2145 = vpack.c.b16 %v1905, %v1889
  %v2146 = vpack.c.b16 %v1922, %v1906
  %v2147 = vpack.c.b16 %v1923, %v1907
  %v2148 = vpack.c.b16 %v1924, %v1908
  %v2149 = vpack.c.b16 %v1925, %v1909
  %v2150 = vpack.c.b16 %v1926, %v1910
  %v2151 = vpack.c.b16 %v1927, %v1911
  %v2152 = vpack.c.b16 %v1928, %v1912
  %v2153 = vpack.c.b16 %v1929, %v1913
  %v2154 = vpack.c.b16 %v1930, %v1914
  %v2155 = vpack.c.b16 %v1931, %v1915
  %v2156 = vpack.c.b16 %v1932, %v1916
  %v2157 = vpack.c.b16 %v1933, %v1917
  %v2158 = vpack.c.b16 %v1934, %v1918
  %v2159 = vpack.c.b16 %v1935, %v1919
  %v2160 = vpack.c.b16 %v1936, %v1920
  %v2161 = vpack.c.b16 %v1937, %v1921
  %v2162 = vpack.c.b16 %v1954, %v1938
  %v2163 = vpack.c.b16 %v1955, %v1939
  %v2164 = vpack.c.b16 %v1956, %v1940
  %v2165 = vpack.c.b16 %v1957, %v1941
  %v2166 = vpack.c.b16 %v1958, %v1942
  %v2167 = vpack.c.b16 %v1959, %v1943
  %v2168 = vpack.c.b16 %v1960, %v1944
  %v2169 = vpack.c.b16 %v1961, %v1945
  %v2170 = vpack.c.b16 %v1962, %v1946
  %v2171 = vpack.c.b16 %v1963, %v1947
  %v2172 = vpack.c.b16 %v1964, %v1948
  %v2173 = vpack.c.b16 %v1965, %v1949
  %v2174 = vpack.c.b16 %v1966, %v1950
  %v2175 = vpack.c.b16 %v1967, %v1951
  %v2176 = vpack.c.b16 %v1968, %v1952
  %v2177 = vpack.c.b16 %v1969, %v1953
  %v2178 = vpack.c.b16 %v1986, %v1970
  %v2179 = vpack.c.b16 %v1987, %v1971
  %v2180 = vpack.c.b16 %v1988, %v1972
  %v2181 = vpack.c.b16 %v1989, %v1973
  %v2182 = vpack.c.b16 %v1990, %v1974
  %v2183 = vpack.c.b16 %v1991, %v1975
  %v2184 = vpack.c.b16 %v1992, %v1976
  %v2185 = vpack.c.b16 %v1993, %v1977
  %v2186 = vpack.c.b16 %v1994, %v1978
  %v2187 = vpack.c.b16 %v1995, %v1979
  %v2188 = vpack.c.b16 %v1996, %v1980
  %v2189 = vpack.c.b16 %v1997, %v1981
  %v2190 = vpack.c.b16 %v1998, %v1982
  %v2191 = vpack.c.b16 %v1999, %v1983
  %v2192 = vpack.c.b16 %v2000, %v1984
  %v2193 = vpack.c.b16 %v2001, %v1985
  %v2194 = vpack.c.b16 %v2018, %v2002
  %v2195 = vpack.c.b16 %v2019, %v2003
  %v2196 = vpack.c.b16 %v2020, %v2004
  %v2197 = vpack.c.b16 %v2021, %v2005
  %v2198 = vpack.c.b16 %v2022, %v2006
  %v2199 = vpack.c.b16 %v2023, %v2007
  %v2200 = vpack.c.b16 %v2024, %v2008
  %v2201 = vpack.c.b16 %v2025, %v2009
  %v2202 = vpack.c.b16 %v2026, %v2010
  %v2203 = vpack.c.b16 %v2027, %v2011
  %v2204 = vpack.c.b16 %v2028, %v2012
  %v2205 = vpack.c.b16 %v2029, %v2013
  %v2206 = vpack.c.b16 %v2030, %v2014
  %v2207 = vpack.c.b16 %v2031, %v2015
  %v2208 = vpack.c.b16 %v2032, %v2016
  %v2209 = vpack.c.b16 %v2033, %v2017
  %v2210 = vpack.c.b16 %v2050, %v2034
  %v2211 = vpack.c.b16 %v2051, %v2035
  %v2212 = vpack.c.b16 %v2052, %v2036
  %v2213 = vpack.c.b16 %v2053, %v2037
  %v2214 = vpack.c.b16 %v2054, %v2038
  %v2215 = vpack.c.b16 %v2055, %v2039
  %v2216 = vpack.c.b16 %v2056, %v2040
  %v2217 = vpack.c.b16 %v2057, %v2041
  %v2218 = vpack.c.b16 %v2058, %v2042
  %v2219 = vpack.c.b16 %v2059, %v2043
  %v2220 = vpack.c.b16 %v2060, %v2044
  %v2221 = vpack.c.b16 %v2061, %v2045
  %v2222 = vpack.c.b16 %v2062, %v2046
  %v2223 = vpack.c.b16 %v2063, %v2047
  %v2224 = vpack.c.b16 %v2064, %v2048
  %v2225 = vpack.c.b16 %v2065, %v2049
  %v2226 = vpack.c.b16 %v2082, %v2066
  %v2227 = vpack.c.b16 %v2083, %v2067
  %v2228 = vpack.c.b16 %v2084, %v2068
  %v2229 = vpack.c.b16 %v2085, %v2069
  %v2230 = vpack.c.b16 %v2086, %v2070
  %v2231 = vpack.c.b16 %v2087, %v2071
  %v2232 = vpack.c.b16 %v2088, %v2072
  %v2233 = vpack.c.b16 %v2089, %v2073
  %v2234 = vpack.c.b16 %v2090, %v2074
  %v2235 = vpack.c.b16 %v2091, %v2075
  %v2236 = vpack.c.b16 %v2092, %v2076
  %v2237 = vpack.c.b16 %v2093, %v2077
  %v2238 = vpack.c.b16 %v2094, %v2078
  %v2239 = vpack.c.b16 %v2095, %v2079
  %v2240 = vpack.c.b16 %v2096, %v2080
  %v2241 = vpack.c.b16 %v2097, %v2081
  %v2242 = vpack.c.b16 %v2114, %v2098
  %v2243 = vpack.c.b16 %v2115, %v2099
  %v2244 = vpack.c.b16 %v2116, %v2100
  %v2245 = vpack.c.b16 %v2117, %v2101
  %v2246 = vpack.c.b16 %v2118, %v2102
  %v2247 = vpack.c.b16 %v2119, %v2103
  %v2248 = vpack.c.b16 %v2120, %v2104
  %v2249 = vpack.c.b16 %v2121, %v2105
  %v2250 = vpack.c.b16 %v2122, %v2106
  %v2251 = vpack.c.b16 %v2123, %v2107
  %v2252 = vpack.c.b16 %v2124, %v2108
  %v2253 = vpack.c.b16 %v2125, %v2109
  %v2254 = vpack.c.b16 %v2126, %v2110
  %v2255 = vpack.c.b16 %v2127, %v2111
  %v2256 = vpack.c.b16 %v2128, %v2112
  %v2257 = vpack.c.b16 %v2129, %v2113
  %2386 = vmatprep.subr.bf16.mxu0 %v2131
  %2387 = vmatpush1.bf16.msra.mxu0 %v2130
  %2388 = vmatprep.subr.bf16.mxu0 %v2147
  %2389 = vmatpush1.bf16.msra.mxu0 %v2146
  %2390 = vmatprep.subr.bf16.mxu0 %v2163
  %2391 = vmatpush1.bf16.msra.mxu0 %v2162
  %2392 = vmatprep.subr.bf16.mxu0 %v2179
  %2393 = vmatpush1.bf16.msra.mxu0 %v2178
  %2394 = vmatprep.subr.bf16.mxu0 %v2195
  %2395 = vmatpush1.bf16.msra.mxu0 %v2194
  %2396 = vmatprep.subr.bf16.mxu0 %v2211
  %2397 = vmatpush1.bf16.msra.mxu0 %v2210
  %2398 = vmatprep.subr.bf16.mxu0 %v2227
  %2399 = vmatpush1.bf16.msra.mxu0 %v2226
  %2400 = vmatprep.subr.bf16.mxu0 %v2243
  %2401 = vmatpush1.bf16.msra.mxu0 %v2242
  %2402 = vmatprep.subr.bf16.mxu0 0
  %2403 = vmatpush1.bf16.msra.mxu0 0
  %2404 = vmatprep.subr.bf16.mxu0 0
  %2405 = vmatpush1.bf16.msra.mxu0 0
  %2406 = vmatprep.subr.bf16.mxu0 0
  %2407 = vmatpush1.bf16.msra.mxu0 0
  %2408 = vmatprep.subr.bf16.mxu0 0
  %2409 = vmatpush1.bf16.msra.mxu0 0
  %2410 = vmatprep.subr.bf16.mxu0 0
  %2411 = vmatpush1.bf16.msra.mxu0 0
  %2412 = vmatprep.subr.bf16.mxu0 0
  %2413 = vmatpush1.bf16.msra.mxu0 0
  %2414 = vmatprep.subr.bf16.mxu0 0
  %2415 = vmatpush1.bf16.msra.mxu0 0
  %2416 = vmatprep.subr.bf16.mxu0 0
  %2417 = vmatpush1.bf16.msra.mxu0 0
  %2418 = vmatprep.mubr.bf16.mxu0 0
  %2419 = vmatmul.mubr.bf16.gmra.mrb[0].mxu0 %v1610
  %v2420 = vpop.f32.mrb[0].mxu0
  %v2421 = vadd.f32 0.0, %v2420
  %v2422 = vpop.f32.mrb[0].mxu0
  %v2423 = vpop.f32.mrb[0].mxu0
  %v2424 = vpop.f32.mrb[0].mxu0
  %v2425 = vadd.f32 0.0, %v2424
  %2426 = vmatprep.mubr.bf16.mxu0 0
  %2427 = vmatmul.mubr.bf16.gmra.mrb[0].mxu0 %v1611
  %v2428 = vpop.f32.mrb[0].mxu0
  %v2429 = vpop.f32.mrb[0].mxu0
  %v2430 = vpop.f32.mrb[0].mxu0
  %v2431 = vpop.f32.mrb[0].mxu0
  %2432 = vmatprep.mubr.bf16.mxu0 0
  %2433 = vmatmul.mubr.bf16.gmra.mrb[0].mxu0 %v1612
  %v2434 = vpop.f32.mrb[0].mxu0
  %v2435 = vpop.f32.mrb[0].mxu0
  %v2436 = vpop.f32.mrb[0].mxu0
  %v2437 = vpop.f32.mrb[0].mxu0
  %2438 = vmatprep.mubr.bf16.mxu0 0
  %2439 = vmatmul.mubr.bf16.gmra.mrb[0].mxu0 %v1613
  %v2440 = vpop.f32.mrb[0].mxu0
  %v2441 = vpop.f32.mrb[0].mxu0
  %v2442 = vpop.f32.mrb[0].mxu0
  %v2443 = vpop.f32.mrb[0].mxu0
  %2444 = vmatprep.mubr.bf16.mxu0 0
  %2445 = vmatmul.mubr.bf16.gmra.mrb[0].mxu0 %v1614
  %v2446 = vpop.f32.mrb[0].mxu0
  %v2447 = vpop.f32.mrb[0].mxu0
  %v2448 = vpop.f32.mrb[0].mxu0
  %v2449 = vpop.f32.mrb[0].mxu0
  %2450 = vmatprep.mubr.bf16.mxu0 0
  %2451 = vmatmul.mubr.bf16.gmra.mrb[0].mxu0 %v1615
  %v2452 = vpop.f32.mrb[0].mxu0
  %v2453 = vpop.f32.mrb[0].mxu0
  %v2454 = vpop.f32.mrb[0].mxu0
  %v2455 = vpop.f32.mrb[0].mxu0
  %2456 = vmatprep.mubr.bf16.mxu0 0
  %2457 = vmatmul.mubr.bf16.gmra.mrb[0].mxu0 %v1616
  %v2458 = vpop.f32.mrb[0].mxu0
  %v2459 = vpop.f32.mrb[0].mxu0
  %v2460 = vpop.f32.mrb[0].mxu0
  %v2461 = vpop.f32.mrb[0].mxu0
  %2462 = vmatprep.mubr.bf16.mxu0 0
  %2463 = vmatmul.mubr.bf16.gmra.mrb[0].mxu0 %v1617
  %v2464 = vpop.f32.mrb[0].mxu0
  %v2465 = vpop.f32.mrb[0].mxu0
  %v2466 = vpop.f32.mrb[0].mxu0
  %v2467 = vpop.f32.mrb[0].mxu0
  %2468 = vdwg.mxu0
  %2469 = vmatprep.subr.bf16.mxu0 %v2133
  %2470 = vmatpush1.bf16.msra.mxu0 %v2132
  %2471 = vmatprep.subr.bf16.mxu0 %v2149
  %2472 = vmatpush1.bf16.msra.mxu0 %v2148
  %2473 = vmatprep.subr.bf16.mxu0 %v2165
  %2474 = vmatpush1.bf16.msra.mxu0 %v2164
  %2475 = vmatprep.subr.bf16.mxu0 %v2181
  %2476 = vmatpush1.bf16.msra.mxu0 %v2180
  %2477 = vmatprep.subr.bf16.mxu0 %v2197
  %2478 = vmatpush1.bf16.msra.mxu0 %v2196
  %2479 = vmatprep.subr.bf16.mxu0 %v2213
  %2480 = vmatpush1.bf16.msra.mxu0 %v2212
  %2481 = vmatprep.subr.bf16.mxu0 %v2229
  %2482 = vmatpush1.bf16.msra.mxu0 %v2228
  %2483 = vmatprep.subr.bf16.mxu0 %v2245
  %2484 = vmatpush1.bf16.msra.mxu0 %v2244
  %2485 = vmatprep.subr.bf16.mxu0 0
  %2486 = vmatpush1.bf16.msra.mxu0 0
  %2487 = vmatprep.subr.bf16.mxu0 0
  %2488 = vmatpush1.bf16.msra.mxu0 0
  %2489 = vmatprep.subr.bf16.mxu0 0
  %2490 = vmatpush1.bf16.msra.mxu0 0
  %2491 = vmatprep.subr.bf16.mxu0 0
  %2492 = vmatpush1.bf16.msra.mxu0 0
  %2493 = vmatprep.subr.bf16.mxu0 0
  %2494 = vmatpush1.bf16.msra.mxu0 0
  %2495 = vmatprep.subr.bf16.mxu0 0
  %2496 = vmatpush1.bf16.msra.mxu0 0
  %2497 = vmatprep.subr.bf16.mxu0 0
  %2498 = vmatpush1.bf16.msra.mxu0 0
  %2499 = vmatprep.subr.bf16.mxu0 0
  %2500 = vmatpush1.bf16.msra.mxu0 0
  %2501 = vmatprep.mubr.bf16.mxu0 0
  %2502 = vmatmul.mubr.bf16.gmra.mrb[0].mxu0 %v1610
  %v2503 = vpop.f32.mrb[0].mxu0
  %v2504 = vpop.f32.mrb[0].mxu0
  %v2505 = vpop.f32.mrb[0].mxu0
  %v2506 = vpop.f32.mrb[0].mxu0
  %2507 = vmatprep.mubr.bf16.mxu0 0
  %2508 = vmatmul.mubr.bf16.gmra.mrb[0].mxu0 %v1611
  %v2509 = vpop.f32.mrb[0].mxu0
  %v2510 = vadd.f32 0.0, %v2509
  %v2511 = vpop.f32.mrb[0].mxu0
  %v2512 = vpop.f32.mrb[0].mxu0
  %v2513 = vpop.f32.mrb[0].mxu0
  %v2514 = vadd.f32 0.0, %v2513
  %2515 = vmatprep.mubr.bf16.mxu0 0
  %2516 = vmatmul.mubr.bf16.gmra.mrb[0].mxu0 %v1612
  %v2517 = vpop.f32.mrb[0].mxu0
  %v2518 = vpop.f32.mrb[0].mxu0
  %v2519 = vpop.f32.mrb[0].mxu0
  %v2520 = vpop.f32.mrb[0].mxu0
  %2521 = vmatprep.mubr.bf16.mxu0 0
  %2522 = vmatmul.mubr.bf16.gmra.mrb[0].mxu0 %v1613
  %v2523 = vpop.f32.mrb[0].mxu0
  %v2524 = vpop.f32.mrb[0].mxu0
  %v2525 = vpop.f32.mrb[0].mxu0
  %v2526 = vpop.f32.mrb[0].mxu0
  %2527 = vmatprep.mubr.bf16.mxu0 0
  %2528 = vmatmul.mubr.bf16.gmra.mrb[0].mxu0 %v1614
  %v2529 = vpop.f32.mrb[0].mxu0
  %v2530 = vpop.f32.mrb[0].mxu0
  %v2531 = vpop.f32.mrb[0].mxu0
  %v2532 = vpop.f32.mrb[0].mxu0
  %2533 = vmatprep.mubr.bf16.mxu0 0
  %2534 = vmatmul.mubr.bf16.gmra.mrb[0].mxu0 %v1615
  %v2535 = vpop.f32.mrb[0].mxu0
  %v2536 = vpop.f32.mrb[0].mxu0
  %v2537 = vpop.f32.mrb[0].mxu0
  %v2538 = vpop.f32.mrb[0].mxu0
  %2539 = vmatprep.mubr.bf16.mxu0 0
  %2540 = vmatmul.mubr.bf16.gmra.mrb[0].mxu0 %v1616
  %v2541 = vpop.f32.mrb[0].mxu0
  %v2542 = vpop.f32.mrb[0].mxu0
  %v2543 = vpop.f32.mrb[0].mxu0
  %v2544 = vpop.f32.mrb[0].mxu0
  %2545 = vmatprep.mubr.bf16.mxu0 0
  %2546 = vmatmul.mubr.bf16.gmra.mrb[0].mxu0 %v1617
  %v2547 = vpop.f32.mrb[0].mxu0
  %v2548 = vpop.f32.mrb[0].mxu0
  %v2549 = vpop.f32.mrb[0].mxu0
  %v2550 = vpop.f32.mrb[0].mxu0
  %2551 = vdwg.mxu0
  %2552 = vmatprep.subr.bf16.mxu0 %v2135
  %2553 = vmatpush1.bf16.msra.mxu0 %v2134
  %2554 = vmatprep.subr.bf16.mxu0 %v2151
  %2555 = vmatpush1.bf16.msra.mxu0 %v2150
  %2556 = vmatprep.subr.bf16.mxu0 %v2167
  %2557 = vmatpush1.bf16.msra.mxu0 %v2166
  %2558 = vmatprep.subr.bf16.mxu0 %v2183
  %2559 = vmatpush1.bf16.msra.mxu0 %v2182
  %2560 = vmatprep.subr.bf16.mxu0 %v2199
  %2561 = vmatpush1.bf16.msra.mxu0 %v2198
  %2562 = vmatprep.subr.bf16.mxu0 %v2215
  %2563 = vmatpush1.bf16.msra.mxu0 %v2214
  %2564 = vmatprep.subr.bf16.mxu0 %v2231
  %2565 = vmatpush1.bf16.msra.mxu0 %v2230
  %2566 = vmatprep.subr.bf16.mxu0 %v2247
  %2567 = vmatpush1.bf16.msra.mxu0 %v2246
  %2568 = vmatprep.subr.bf16.mxu0 0
  %2569 = vmatpush1.bf16.msra.mxu0 0
  %2570 = vmatprep.subr.bf16.mxu0 0
  %2571 = vmatpush1.bf16.msra.mxu0 0
  %2572 = vmatprep.subr.bf16.mxu0 0
  %2573 = vmatpush1.bf16.msra.mxu0 0
  %2574 = vmatprep.subr.bf16.mxu0 0
  %2575 = vmatpush1.bf16.msra.mxu0 0
  %2576 = vmatprep.subr.bf16.mxu0 0
  %2577 = vmatpush1.bf16.msra.mxu0 0
  %2578 = vmatprep.subr.bf16.mxu0 0
  %2579 = vmatpush1.bf16.msra.mxu0 0
  %2580 = vmatprep.subr.bf16.mxu0 0
  %2581 = vmatpush1.bf16.msra.mxu0 0
  %2582 = vmatprep.subr.bf16.mxu0 0
  %2583 = vmatpush1.bf16.msra.mxu0 0
  %2584 = vmatprep.mubr.bf16.mxu0 0
  %2585 = vmatmul.mubr.bf16.gmra.mrb[0].mxu0 %v1610
  %v2586 = vpop.f32.mrb[0].mxu0
  %v2587 = vpop.f32.mrb[0].mxu0
  %v2588 = vpop.f32.mrb[0].mxu0
  %v2589 = vpop.f32.mrb[0].mxu0
  %2590 = vmatprep.mubr.bf16.mxu0 0
  %2591 = vmatmul.mubr.bf16.gmra.mrb[0].mxu0 %v1611
  %v2592 = vpop.f32.mrb[0].mxu0
  %v2593 = vpop.f32.mrb[0].mxu0
  %v2594 = vpop.f32.mrb[0].mxu0
  %v2595 = vpop.f32.mrb[0].mxu0
  %2596 = vmatprep.mubr.bf16.mxu0 0
  %2597 = vmatmul.mubr.bf16.gmra.mrb[0].mxu0 %v1612
  %v2598 = vpop.f32.mrb[0].mxu0
  %v2599 = vadd.f32 0.0, %v2598
  %v2600 = vpop.f32.mrb[0].mxu0
  %v2601 = vpop.f32.mrb[0].mxu0
  %v2602 = vpop.f32.mrb[0].mxu0
  %v2603 = vadd.f32 0.0, %v2602
  %2604 = vmatprep.mubr.bf16.mxu0 0
  %2605 = vmatmul.mubr.bf16.gmra.mrb[0].mxu0 %v1613
  %v2606 = vpop.f32.mrb[0].mxu0
  %v2607 = vpop.f32.mrb[0].mxu0
  %v2608 = vpop.f32.mrb[0].mxu0
  %v2609 = vpop.f32.mrb[0].mxu0
  %2610 = vmatprep.mubr.bf16.mxu0 0
  %2611 = vmatmul.mubr.bf16.gmra.mrb[0].mxu0 %v1614
  %v2612 = vpop.f32.mrb[0].mxu0
  %v2613 = vpop.f32.mrb[0].mxu0
  %v2614 = vpop.f32.mrb[0].mxu0
  %v2615 = vpop.f32.mrb[0].mxu0
  %2616 = vmatprep.mubr.bf16.mxu0 0
  %2617 = vmatmul.mubr.bf16.gmra.mrb[0].mxu0 %v1615
  %v2618 = vpop.f32.mrb[0].mxu0
  %v2619 = vpop.f32.mrb[0].mxu0
  %v2620 = vpop.f32.mrb[0].mxu0
  %v2621 = vpop.f32.mrb[0].mxu0
  %2622 = vmatprep.mubr.bf16.mxu0 0
  %2623 = vmatmul.mubr.bf16.gmra.mrb[0].mxu0 %v1616
  %v2624 = vpop.f32.mrb[0].mxu0
  %v2625 = vpop.f32.mrb[0].mxu0
  %v2626 = vpop.f32.mrb[0].mxu0
  %v2627 = vpop.f32.mrb[0].mxu0
  %2628 = vmatprep.mubr.bf16.mxu0 0
  %2629 = vmatmul.mubr.bf16.gmra.mrb[0].mxu0 %v1617
  %v2630 = vpop.f32.mrb[0].mxu0
  %v2631 = vpop.f32.mrb[0].mxu0
  %v2632 = vpop.f32.mrb[0].mxu0
  %v2633 = vpop.f32.mrb[0].mxu0
  %2634 = vdwg.mxu0
  %2635 = vmatprep.subr.bf16.mxu0 %v2137
  %2636 = vmatpush1.bf16.msra.mxu0 %v2136
  %2637 = vmatprep.subr.bf16.mxu0 %v2153
  %2638 = vmatpush1.bf16.msra.mxu0 %v2152
  %2639 = vmatprep.subr.bf16.mxu0 %v2169
  %2640 = vmatpush1.bf16.msra.mxu0 %v2168
  %2641 = vmatprep.subr.bf16.mxu0 %v2185
  %2642 = vmatpush1.bf16.msra.mxu0 %v2184
  %2643 = vmatprep.subr.bf16.mxu0 %v2201
  %2644 = vmatpush1.bf16.msra.mxu0 %v2200
  %2645 = vmatprep.subr.bf16.mxu0 %v2217
  %2646 = vmatpush1.bf16.msra.mxu0 %v2216
  %2647 = vmatprep.subr.bf16.mxu0 %v2233
  %2648 = vmatpush1.bf16.msra.mxu0 %v2232
  %2649 = vmatprep.subr.bf16.mxu0 %v2249
  %2650 = vmatpush1.bf16.msra.mxu0 %v2248
  %2651 = vmatprep.subr.bf16.mxu0 0
  %2652 = vmatpush1.bf16.msra.mxu0 0
  %2653 = vmatprep.subr.bf16.mxu0 0
  %2654 = vmatpush1.bf16.msra.mxu0 0
  %2655 = vmatprep.subr.bf16.mxu0 0
  %2656 = vmatpush1.bf16.msra.mxu0 0
  %2657 = vmatprep.subr.bf16.mxu0 0
  %2658 = vmatpush1.bf16.msra.mxu0 0
  %2659 = vmatprep.subr.bf16.mxu0 0
  %2660 = vmatpush1.bf16.msra.mxu0 0
  %2661 = vmatprep.subr.bf16.mxu0 0
  %2662 = vmatpush1.bf16.msra.mxu0 0
  %2663 = vmatprep.subr.bf16.mxu0 0
  %2664 = vmatpush1.bf16.msra.mxu0 0
  %2665 = vmatprep.subr.bf16.mxu0 0
  %2666 = vmatpush1.bf16.msra.mxu0 0
  %2667 = vmatprep.mubr.bf16.mxu0 0
  %2668 = vmatmul.mubr.bf16.gmra.mrb[0].mxu0 %v1610
  %v2669 = vpop.f32.mrb[0].mxu0
  %v2670 = vpop.f32.mrb[0].mxu0
  %v2671 = vpop.f32.mrb[0].mxu0
  %v2672 = vpop.f32.mrb[0].mxu0
  %2673 = vmatprep.mubr.bf16.mxu0 0
  %2674 = vmatmul.mubr.bf16.gmra.mrb[0].mxu0 %v1611
  %v2675 = vpop.f32.mrb[0].mxu0
  %v2676 = vpop.f32.mrb[0].mxu0
  %v2677 = vpop.f32.mrb[0].mxu0
  %v2678 = vpop.f32.mrb[0].mxu0
  %2679 = vmatprep.mubr.bf16.mxu0 0
  %2680 = vmatmul.mubr.bf16.gmra.mrb[0].mxu0 %v1612
  %v2681 = vpop.f32.mrb[0].mxu0
  %v2682 = vpop.f32.mrb[0].mxu0
  %v2683 = vpop.f32.mrb[0].mxu0
  %v2684 = vpop.f32.mrb[0].mxu0
  %2685 = vmatprep.mubr.bf16.mxu0 0
  %2686 = vmatmul.mubr.bf16.gmra.mrb[0].mxu0 %v1613
  %v2687 = vpop.f32.mrb[0].mxu0
  %v2688 = vadd.f32 0.0, %v2687
  %v2689 = vpop.f32.mrb[0].mxu0
  %v2690 = vpop.f32.mrb[0].mxu0
  %v2691 = vpop.f32.mrb[0].mxu0
  %v2692 = vadd.f32 0.0, %v2691
  %2693 = vmatprep.mubr.bf16.mxu0 0
  %2694 = vmatmul.mubr.bf16.gmra.mrb[0].mxu0 %v1614
  %v2695 = vpop.f32.mrb[0].mxu0
  %v2696 = vpop.f32.mrb[0].mxu0
  %v2697 = vpop.f32.mrb[0].mxu0
  %v2698 = vpop.f32.mrb[0].mxu0
  %2699 = vmatprep.mubr.bf16.mxu0 0
  %2700 = vmatmul.mubr.bf16.gmra.mrb[0].mxu0 %v1615
  %v2701 = vpop.f32.mrb[0].mxu0
  %v2702 = vpop.f32.mrb[0].mxu0
  %v2703 = vpop.f32.mrb[0].mxu0
  %v2704 = vpop.f32.mrb[0].mxu0
  %2705 = vmatprep.mubr.bf16.mxu0 0
  %2706 = vmatmul.mubr.bf16.gmra.mrb[0].mxu0 %v1616
  %v2707 = vpop.f32.mrb[0].mxu0
  %v2708 = vpop.f32.mrb[0].mxu0
  %v2709 = vpop.f32.mrb[0].mxu0
  %v2710 = vpop.f32.mrb[0].mxu0
  %2711 = vmatprep.mubr.bf16.mxu0 0
  %2712 = vmatmul.mubr.bf16.gmra.mrb[0].mxu0 %v1617
  %v2713 = vpop.f32.mrb[0].mxu0
  %v2714 = vpop.f32.mrb[0].mxu0
  %v2715 = vpop.f32.mrb[0].mxu0
  %v2716 = vpop.f32.mrb[0].mxu0
  %2717 = vdwg.mxu0
  %2718 = vmatprep.subr.bf16.mxu0 %v2139
  %2719 = vmatpush1.bf16.msra.mxu0 %v2138
  %2720 = vmatprep.subr.bf16.mxu0 %v2155
  %2721 = vmatpush1.bf16.msra.mxu0 %v2154
  %2722 = vmatprep.subr.bf16.mxu0 %v2171
  %2723 = vmatpush1.bf16.msra.mxu0 %v2170
  %2724 = vmatprep.subr.bf16.mxu0 %v2187
  %2725 = vmatpush1.bf16.msra.mxu0 %v2186
  %2726 = vmatprep.subr.bf16.mxu0 %v2203
  %2727 = vmatpush1.bf16.msra.mxu0 %v2202
  %2728 = vmatprep.subr.bf16.mxu0 %v2219
  %2729 = vmatpush1.bf16.msra.mxu0 %v2218
  %2730 = vmatprep.subr.bf16.mxu0 %v2235
  %2731 = vmatpush1.bf16.msra.mxu0 %v2234
  %2732 = vmatprep.subr.bf16.mxu0 %v2251
  %2733 = vmatpush1.bf16.msra.mxu0 %v2250
  %2734 = vmatprep.subr.bf16.mxu0 0
  %2735 = vmatpush1.bf16.msra.mxu0 0
  %2736 = vmatprep.subr.bf16.mxu0 0
  %2737 = vmatpush1.bf16.msra.mxu0 0
  %2738 = vmatprep.subr.bf16.mxu0 0
  %2739 = vmatpush1.bf16.msra.mxu0 0
  %2740 = vmatprep.subr.bf16.mxu0 0
  %2741 = vmatpush1.bf16.msra.mxu0 0
  %2742 = vmatprep.subr.bf16.mxu0 0
  %2743 = vmatpush1.bf16.msra.mxu0 0
  %2744 = vmatprep.subr.bf16.mxu0 0
  %2745 = vmatpush1.bf16.msra.mxu0 0
  %2746 = vmatprep.subr.bf16.mxu0 0
  %2747 = vmatpush1.bf16.msra.mxu0 0
  %2748 = vmatprep.subr.bf16.mxu0 0
  %2749 = vmatpush1.bf16.msra.mxu0 0
  %2750 = vmatprep.mubr.bf16.mxu0 0
  %2751 = vmatmul.mubr.bf16.gmra.mrb[0].mxu0 %v1610
  %v2752 = vpop.f32.mrb[0].mxu0
  %v2753 = vpop.f32.mrb[0].mxu0
  %v2754 = vpop.f32.mrb[0].mxu0
  %v2755 = vpop.f32.mrb[0].mxu0
  %2756 = vmatprep.mubr.bf16.mxu0 0
  %2757 = vmatmul.mubr.bf16.gmra.mrb[0].mxu0 %v1611
  %v2758 = vpop.f32.mrb[0].mxu0
  %v2759 = vpop.f32.mrb[0].mxu0
  %v2760 = vpop.f32.mrb[0].mxu0
  %v2761 = vpop.f32.mrb[0].mxu0
  %2762 = vmatprep.mubr.bf16.mxu0 0
  %2763 = vmatmul.mubr.bf16.gmra.mrb[0].mxu0 %v1612
  %v2764 = vpop.f32.mrb[0].mxu0
  %v2765 = vpop.f32.mrb[0].mxu0
  %v2766 = vpop.f32.mrb[0].mxu0
  %v2767 = vpop.f32.mrb[0].mxu0
  %2768 = vmatprep.mubr.bf16.mxu0 0
  %2769 = vmatmul.mubr.bf16.gmra.mrb[0].mxu0 %v1613
  %v2770 = vpop.f32.mrb[0].mxu0
  %v2771 = vpop.f32.mrb[0].mxu0
  %v2772 = vpop.f32.mrb[0].mxu0
  %v2773 = vpop.f32.mrb[0].mxu0
  %2774 = vmatprep.mubr.bf16.mxu0 0
  %2775 = vmatmul.mubr.bf16.gmra.mrb[0].mxu0 %v1614
  %v2776 = vpop.f32.mrb[0].mxu0
  %v2777 = vadd.f32 0.0, %v2776
  %v2778 = vpop.f32.mrb[0].mxu0
  %v2779 = vpop.f32.mrb[0].mxu0
  %v2780 = vpop.f32.mrb[0].mxu0
  %v2781 = vadd.f32 0.0, %v2780
  %2782 = vmatprep.mubr.bf16.mxu0 0
  %2783 = vmatmul.mubr.bf16.gmra.mrb[0].mxu0 %v1615
  %v2784 = vpop.f32.mrb[0].mxu0
  %v2785 = vpop.f32.mrb[0].mxu0
  %v2786 = vpop.f32.mrb[0].mxu0
  %v2787 = vpop.f32.mrb[0].mxu0
  %2788 = vmatprep.mubr.bf16.mxu0 0
  %2789 = vmatmul.mubr.bf16.gmra.mrb[0].mxu0 %v1616
  %v2790 = vpop.f32.mrb[0].mxu0
  %v2791 = vpop.f32.mrb[0].mxu0
  %v2792 = vpop.f32.mrb[0].mxu0
  %v2793 = vpop.f32.mrb[0].mxu0
  %2794 = vmatprep.mubr.bf16.mxu0 0
  %2795 = vmatmul.mubr.bf16.gmra.mrb[0].mxu0 %v1617
  %v2796 = vpop.f32.mrb[0].mxu0
  %v2797 = vpop.f32.mrb[0].mxu0
  %v2798 = vpop.f32.mrb[0].mxu0
  %v2799 = vpop.f32.mrb[0].mxu0
  %2800 = vdwg.mxu0
  %2801 = vmatprep.subr.bf16.mxu0 %v2141
  %2802 = vmatpush1.bf16.msra.mxu0 %v2140
  %2803 = vmatprep.subr.bf16.mxu0 %v2157
  %2804 = vmatpush1.bf16.msra.mxu0 %v2156
  %2805 = vmatprep.subr.bf16.mxu0 %v2173
  %2806 = vmatpush1.bf16.msra.mxu0 %v2172
  %2807 = vmatprep.subr.bf16.mxu0 %v2189
  %2808 = vmatpush1.bf16.msra.mxu0 %v2188
  %2809 = vmatprep.subr.bf16.mxu0 %v2205
  %2810 = vmatpush1.bf16.msra.mxu0 %v2204
  %2811 = vmatprep.subr.bf16.mxu0 %v2221
  %2812 = vmatpush1.bf16.msra.mxu0 %v2220
  %2813 = vmatprep.subr.bf16.mxu0 %v2237
  %2814 = vmatpush1.bf16.msra.mxu0 %v2236
  %2815 = vmatprep.subr.bf16.mxu0 %v2253
  %2816 = vmatpush1.bf16.msra.mxu0 %v2252
  %2817 = vmatprep.subr.bf16.mxu0 0
  %2818 = vmatpush1.bf16.msra.mxu0 0
  %2819 = vmatprep.subr.bf16.mxu0 0
  %2820 = vmatpush1.bf16.msra.mxu0 0
  %2821 = vmatprep.subr.bf16.mxu0 0
  %2822 = vmatpush1.bf16.msra.mxu0 0
  %2823 = vmatprep.subr.bf16.mxu0 0
  %2824 = vmatpush1.bf16.msra.mxu0 0
  %2825 = vmatprep.subr.bf16.mxu0 0
  %2826 = vmatpush1.bf16.msra.mxu0 0
  %2827 = vmatprep.subr.bf16.mxu0 0
  %2828 = vmatpush1.bf16.msra.mxu0 0
  %2829 = vmatprep.subr.bf16.mxu0 0
  %2830 = vmatpush1.bf16.msra.mxu0 0
  %2831 = vmatprep.subr.bf16.mxu0 0
  %2832 = vmatpush1.bf16.msra.mxu0 0
  %2833 = vmatprep.mubr.bf16.mxu0 0
  %2834 = vmatmul.mubr.bf16.gmra.mrb[0].mxu0 %v1610
  %v2835 = vpop.f32.mrb[0].mxu0
  %v2836 = vpop.f32.mrb[0].mxu0
  %v2837 = vpop.f32.mrb[0].mxu0
  %v2838 = vpop.f32.mrb[0].mxu0
  %2839 = vmatprep.mubr.bf16.mxu0 0
  %2840 = vmatmul.mubr.bf16.gmra.mrb[0].mxu0 %v1611
  %v2841 = vpop.f32.mrb[0].mxu0
  %v2842 = vpop.f32.mrb[0].mxu0
  %v2843 = vpop.f32.mrb[0].mxu0
  %v2844 = vpop.f32.mrb[0].mxu0
  %2845 = vmatprep.mubr.bf16.mxu0 0
  %2846 = vmatmul.mubr.bf16.gmra.mrb[0].mxu0 %v1612
  %v2847 = vpop.f32.mrb[0].mxu0
  %v2848 = vpop.f32.mrb[0].mxu0
  %v2849 = vpop.f32.mrb[0].mxu0
  %v2850 = vpop.f32.mrb[0].mxu0
  %2851 = vmatprep.mubr.bf16.mxu0 0
  %2852 = vmatmul.mubr.bf16.gmra.mrb[0].mxu0 %v1613
  %v2853 = vpop.f32.mrb[0].mxu0
  %v2854 = vpop.f32.mrb[0].mxu0
  %v2855 = vpop.f32.mrb[0].mxu0
  %v2856 = vpop.f32.mrb[0].mxu0
  %2857 = vmatprep.mubr.bf16.mxu0 0
  %2858 = vmatmul.mubr.bf16.gmra.mrb[0].mxu0 %v1614
  %v2859 = vpop.f32.mrb[0].mxu0
  %v2860 = vpop.f32.mrb[0].mxu0
  %v2861 = vpop.f32.mrb[0].mxu0
  %v2862 = vpop.f32.mrb[0].mxu0
  %2863 = vmatprep.mubr.bf16.mxu0 0
  %2864 = vmatmul.mubr.bf16.gmra.mrb[0].mxu0 %v1615
  %v2865 = vpop.f32.mrb[0].mxu0
  %v2866 = vadd.f32 0.0, %v2865
  %v2867 = vpop.f32.mrb[0].mxu0
  %v2868 = vpop.f32.mrb[0].mxu0
  %v2869 = vpop.f32.mrb[0].mxu0
  %v2870 = vadd.f32 0.0, %v2869
  %2871 = vmatprep.mubr.bf16.mxu0 0
  %2872 = vmatmul.mubr.bf16.gmra.mrb[0].mxu0 %v1616
  %v2873 = vpop.f32.mrb[0].mxu0
  %v2874 = vpop.f32.mrb[0].mxu0
  %v2875 = vpop.f32.mrb[0].mxu0
  %v2876 = vpop.f32.mrb[0].mxu0
  %2877 = vmatprep.mubr.bf16.mxu0 0
  %2878 = vmatmul.mubr.bf16.gmra.mrb[0].mxu0 %v1617
  %v2879 = vpop.f32.mrb[0].mxu0
  %v2880 = vpop.f32.mrb[0].mxu0
  %v2881 = vpop.f32.mrb[0].mxu0
  %v2882 = vpop.f32.mrb[0].mxu0
  %2883 = vdwg.mxu0
  %2884 = vmatprep.subr.bf16.mxu0 %v2143
  %2885 = vmatpush1.bf16.msra.mxu0 %v2142
  %2886 = vmatprep.subr.bf16.mxu0 %v2159
  %2887 = vmatpush1.bf16.msra.mxu0 %v2158
  %2888 = vmatprep.subr.bf16.mxu0 %v2175
  %2889 = vmatpush1.bf16.msra.mxu0 %v2174
  %2890 = vmatprep.subr.bf16.mxu0 %v2191
  %2891 = vmatpush1.bf16.msra.mxu0 %v2190
  %2892 = vmatprep.subr.bf16.mxu0 %v2207
  %2893 = vmatpush1.bf16.msra.mxu0 %v2206
  %2894 = vmatprep.subr.bf16.mxu0 %v2223
  %2895 = vmatpush1.bf16.msra.mxu0 %v2222
  %2896 = vmatprep.subr.bf16.mxu0 %v2239
  %2897 = vmatpush1.bf16.msra.mxu0 %v2238
  %2898 = vmatprep.subr.bf16.mxu0 %v2255
  %2899 = vmatpush1.bf16.msra.mxu0 %v2254
  %2900 = vmatprep.subr.bf16.mxu0 0
  %2901 = vmatpush1.bf16.msra.mxu0 0
  %2902 = vmatprep.subr.bf16.mxu0 0
  %2903 = vmatpush1.bf16.msra.mxu0 0
  %2904 = vmatprep.subr.bf16.mxu0 0
  %2905 = vmatpush1.bf16.msra.mxu0 0
  %2906 = vmatprep.subr.bf16.mxu0 0
  %2907 = vmatpush1.bf16.msra.mxu0 0
  %2908 = vmatprep.subr.bf16.mxu0 0
  %2909 = vmatpush1.bf16.msra.mxu0 0
  %2910 = vmatprep.subr.bf16.mxu0 0
  %2911 = vmatpush1.bf16.msra.mxu0 0
  %2912 = vmatprep.subr.bf16.mxu0 0
  %2913 = vmatpush1.bf16.msra.mxu0 0
  %2914 = vmatprep.subr.bf16.mxu0 0
  %2915 = vmatpush1.bf16.msra.mxu0 0
  %2916 = vmatprep.mubr.bf16.mxu0 0
  %2917 = vmatmul.mubr.bf16.gmra.mrb[0].mxu0 %v1610
  %v2918 = vpop.f32.mrb[0].mxu0
  %v2919 = vpop.f32.mrb[0].mxu0
  %v2920 = vpop.f32.mrb[0].mxu0
  %v2921 = vpop.f32.mrb[0].mxu0
  %2922 = vmatprep.mubr.bf16.mxu0 0
  %2923 = vmatmul.mubr.bf16.gmra.mrb[0].mxu0 %v1611
  %v2924 = vpop.f32.mrb[0].mxu0
  %v2925 = vpop.f32.mrb[0].mxu0
  %v2926 = vpop.f32.mrb[0].mxu0
  %v2927 = vpop.f32.mrb[0].mxu0
  %2928 = vmatprep.mubr.bf16.mxu0 0
  %2929 = vmatmul.mubr.bf16.gmra.mrb[0].mxu0 %v1612
  %v2930 = vpop.f32.mrb[0].mxu0
  %v2931 = vpop.f32.mrb[0].mxu0
  %v2932 = vpop.f32.mrb[0].mxu0
  %v2933 = vpop.f32.mrb[0].mxu0
  %2934 = vmatprep.mubr.bf16.mxu0 0
  %2935 = vmatmul.mubr.bf16.gmra.mrb[0].mxu0 %v1613
  %v2936 = vpop.f32.mrb[0].mxu0
  %v2937 = vpop.f32.mrb[0].mxu0
  %v2938 = vpop.f32.mrb[0].mxu0
  %v2939 = vpop.f32.mrb[0].mxu0
  %2940 = vmatprep.mubr.bf16.mxu0 0
  %2941 = vmatmul.mubr.bf16.gmra.mrb[0].mxu0 %v1614
  %v2942 = vpop.f32.mrb[0].mxu0
  %v2943 = vpop.f32.mrb[0].mxu0
  %v2944 = vpop.f32.mrb[0].mxu0
  %v2945 = vpop.f32.mrb[0].mxu0
  %2946 = vmatprep.mubr.bf16.mxu0 0
  %2947 = vmatmul.mubr.bf16.gmra.mrb[0].mxu0 %v1615
  %v2948 = vpop.f32.mrb[0].mxu0
  %v2949 = vpop.f32.mrb[0].mxu0
  %v2950 = vpop.f32.mrb[0].mxu0
  %v2951 = vpop.f32.mrb[0].mxu0
  %2952 = vmatprep.mubr.bf16.mxu0 0
  %2953 = vmatmul.mubr.bf16.gmra.mrb[0].mxu0 %v1616
  %v2954 = vpop.f32.mrb[0].mxu0
  %v2955 = vadd.f32 0.0, %v2954
  %v2956 = vpop.f32.mrb[0].mxu0
  %v2957 = vpop.f32.mrb[0].mxu0
  %v2958 = vpop.f32.mrb[0].mxu0
  %v2959 = vadd.f32 0.0, %v2958
  %2960 = vmatprep.mubr.bf16.mxu0 0
  %2961 = vmatmul.mubr.bf16.gmra.mrb[0].mxu0 %v1617
  %v2962 = vpop.f32.mrb[0].mxu0
  %v2963 = vpop.f32.mrb[0].mxu0
  %v2964 = vpop.f32.mrb[0].mxu0
  %v2965 = vpop.f32.mrb[0].mxu0
  %2966 = vdwg.mxu0
  %2967 = vmatprep.subr.bf16.mxu0 %v2145
  %2968 = vmatpush1.bf16.msra.mxu0 %v2144
  %2969 = vmatprep.subr.bf16.mxu0 %v2161
  %2970 = vmatpush1.bf16.msra.mxu0 %v2160
  %2971 = vmatprep.subr.bf16.mxu0 %v2177
  %2972 = vmatpush1.bf16.msra.mxu0 %v2176
  %2973 = vmatprep.subr.bf16.mxu0 %v2193
  %2974 = vmatpush1.bf16.msra.mxu0 %v2192
  %2975 = vmatprep.subr.bf16.mxu0 %v2209
  %2976 = vmatpush1.bf16.msra.mxu0 %v2208
  %2977 = vmatprep.subr.bf16.mxu0 %v2225
  %2978 = vmatpush1.bf16.msra.mxu0 %v2224
  %2979 = vmatprep.subr.bf16.mxu0 %v2241
  %2980 = vmatpush1.bf16.msra.mxu0 %v2240
  %2981 = vmatprep.subr.bf16.mxu0 %v2257
  %2982 = vmatpush1.bf16.msra.mxu0 %v2256
  %2983 = vmatprep.subr.bf16.mxu0 0
  %2984 = vmatpush1.bf16.msra.mxu0 0
  %2985 = vmatprep.subr.bf16.mxu0 0
  %2986 = vmatpush1.bf16.msra.mxu0 0
  %2987 = vmatprep.subr.bf16.mxu0 0
  %2988 = vmatpush1.bf16.msra.mxu0 0
  %2989 = vmatprep.subr.bf16.mxu0 0
  %2990 = vmatpush1.bf16.msra.mxu0 0
  %2991 = vmatprep.subr.bf16.mxu0 0
  %2992 = vmatpush1.bf16.msra.mxu0 0
  %2993 = vmatprep.subr.bf16.mxu0 0
  %2994 = vmatpush1.bf16.msra.mxu0 0
  %2995 = vmatprep.subr.bf16.mxu0 0
  %2996 = vmatpush1.bf16.msra.mxu0 0
  %2997 = vmatprep.subr.bf16.mxu0 0
  %2998 = vmatpush1.bf16.msra.mxu0 0
  %2999 = vmatprep.mubr.bf16.mxu0 0
  %3000 = vmatmul.mubr.bf16.gmra.mrb[0].mxu0 %v1610
  %v3001 = vpop.f32.mrb[0].mxu0
  %v3002 = vpop.f32.mrb[0].mxu0
  %v3003 = vpop.f32.mrb[0].mxu0
  %v3004 = vpop.f32.mrb[0].mxu0
  %3005 = vmatprep.mubr.bf16.mxu0 0
  %3006 = vmatmul.mubr.bf16.gmra.mrb[0].mxu0 %v1611
  %v3007 = vpop.f32.mrb[0].mxu0
  %v3008 = vpop.f32.mrb[0].mxu0
  %v3009 = vpop.f32.mrb[0].mxu0
  %v3010 = vpop.f32.mrb[0].mxu0
  %3011 = vmatprep.mubr.bf16.mxu0 0
  %3012 = vmatmul.mubr.bf16.gmra.mrb[0].mxu0 %v1612
  %v3013 = vpop.f32.mrb[0].mxu0
  %v3014 = vpop.f32.mrb[0].mxu0
  %v3015 = vpop.f32.mrb[0].mxu0
  %v3016 = vpop.f32.mrb[0].mxu0
  %3017 = vmatprep.mubr.bf16.mxu0 0
  %3018 = vmatmul.mubr.bf16.gmra.mrb[0].mxu0 %v1613
  %v3019 = vpop.f32.mrb[0].mxu0
  %v3020 = vpop.f32.mrb[0].mxu0
  %v3021 = vpop.f32.mrb[0].mxu0
  %v3022 = vpop.f32.mrb[0].mxu0
  %3023 = vmatprep.mubr.bf16.mxu0 0
  %3024 = vmatmul.mubr.bf16.gmra.mrb[0].mxu0 %v1614
  %v3025 = vpop.f32.mrb[0].mxu0
  %v3026 = vpop.f32.mrb[0].mxu0
  %v3027 = vpop.f32.mrb[0].mxu0
  %v3028 = vpop.f32.mrb[0].mxu0
  %3029 = vmatprep.mubr.bf16.mxu0 0
  %3030 = vmatmul.mubr.bf16.gmra.mrb[0].mxu0 %v1615
  %v3031 = vpop.f32.mrb[0].mxu0
  %v3032 = vpop.f32.mrb[0].mxu0
  %v3033 = vpop.f32.mrb[0].mxu0
  %v3034 = vpop.f32.mrb[0].mxu0
  %3035 = vmatprep.mubr.bf16.mxu0 0
  %3036 = vmatmul.mubr.bf16.gmra.mrb[0].mxu0 %v1616
  %v3037 = vpop.f32.mrb[0].mxu0
  %v3038 = vpop.f32.mrb[0].mxu0
  %v3039 = vpop.f32.mrb[0].mxu0
  %v3040 = vpop.f32.mrb[0].mxu0
  %3041 = vmatprep.mubr.bf16.mxu0 0
  %3042 = vmatmul.mubr.bf16.gmra.mrb[0].mxu0 %v1617
  %v3043 = vpop.f32.mrb[0].mxu0
  %v3044 = vadd.f32 0.0, %v3043
  %v3045 = vpop.f32.mrb[0].mxu0
  %v3046 = vpop.f32.mrb[0].mxu0
  %v3047 = vpop.f32.mrb[0].mxu0
  %v3048 = vadd.f32 0.0, %v3047
  %3049 = vdwg.mxu0
  %v3050 = vld [vmem:[%s5] sm:$0xf]
  %v3051 = vld [vmem:[%s5 + $0x4] sm:$0xf]
  %v3052 = vld [vmem:[%s5 + $0x8] sm:$0xf]
  %v3053 = vld [vmem:[%s5 + $0xc] sm:$0xf]
  %v3054 = vld [vmem:[%s5 + $0x10] sm:$0xf]
  %v3055 = vld [vmem:[%s5 + $0x14] sm:$0xf]
  %v3056 = vld [vmem:[%s5 + $0x18] sm:$0xf]
  %v3057 = vld [vmem:[%s5 + $0x1c] sm:$0xf]
  %v3058 = vld [vmem:[%s5 + $0x20] sm:$0xf]
  %v3059 = vld [vmem:[%s5 + $0x24] sm:$0xf]
  %v3060 = vld [vmem:[%s5 + $0x28] sm:$0xf]
  %v3061 = vld [vmem:[%s5 + $0x2c] sm:$0xf]
  %v3062 = vld [vmem:[%s5 + $0x30] sm:$0xf]
  %v3063 = vld [vmem:[%s5 + $0x34] sm:$0xf]
  %v3064 = vld [vmem:[%s5 + $0x38] sm:$0xf]
  %v3065 = vld [vmem:[%s5 + $0x3c] sm:$0xf]
  %v3066 = vpack.c.bf16 %v2425, %v2421
  %v3067 = vpack.c.bf16 %v2514, %v2510
  %v3068 = vpack.c.bf16 %v2603, %v2599
  %v3069 = vpack.c.bf16 %v2692, %v2688
  %v3070 = vpack.c.bf16 %v2781, %v2777
  %v3071 = vpack.c.bf16 %v2870, %v2866
  %v3072 = vpack.c.bf16 %v2959, %v2955
  %v3073 = vpack.c.bf16 %v3048, %v3044
  %v3074 = vld [vmem:[%s6] sm:$0xff]
  %v3075 = vld [vmem:[%s6 + $0x8] sm:$0xff]
  %v3076 = vld [vmem:[%s6 + $0x10] sm:$0xff]
  %v3077 = vld [vmem:[%s6 + $0x18] sm:$0xff]
  %v3078 = vld [vmem:[%s6 + $0x20] sm:$0xff]
  %v3079 = vld [vmem:[%s6 + $0x28] sm:$0xff]
  %v3080 = vld [vmem:[%s6 + $0x30] sm:$0xff]
  %v3081 = vld [vmem:[%s6 + $0x38] sm:$0xff]
  %v3082 = vld [vmem:[%s6 + $0x40] sm:$0xff]
  %v3083 = vld [vmem:[%s6 + $0x48] sm:$0xff]
  %v3084 = vld [vmem:[%s6 + $0x50] sm:$0xff]
  %v3085 = vld [vmem:[%s6 + $0x58] sm:$0xff]
  %v3086 = vld [vmem:[%s6 + $0x60] sm:$0xff]
  %v3087 = vld [vmem:[%s6 + $0x68] sm:$0xff]
  %v3088 = vld [vmem:[%s6 + $0x70] sm:$0xff]
  %v3089 = vld [vmem:[%s6 + $0x78] sm:$0xff]
  %3091 = vset.pattern.permute.xlu0 0
  %3092 = vperm.xlu0 %3091, %v3074
  %v3093 = vpop.permute.xlu0 %3092
  %3096 = vset.pattern.permute.xlu0 0
  %3097 = vperm.xlu0 %3096, %v3075
  %v3098 = vpop.permute.xlu0 %3097
  %3101 = vset.pattern.permute.xlu0 0
  %3102 = vperm.xlu0 %3101, %v3076
  %v3103 = vpop.permute.xlu0 %3102
  %3106 = vset.pattern.permute.xlu0 0
  %3107 = vperm.xlu0 %3106, %v3077
  %v3108 = vpop.permute.xlu0 %3107
  %3111 = vset.pattern.permute.xlu0 0
  %3112 = vperm.xlu0 %3111, %v3078
  %v3113 = vpop.permute.xlu0 %3112
  %3116 = vset.pattern.permute.xlu0 0
  %3117 = vperm.xlu0 %3116, %v3079
  %v3118 = vpop.permute.xlu0 %3117
  %3121 = vset.pattern.permute.xlu0 0
  %3122 = vperm.xlu0 %3121, %v3080
  %v3123 = vpop.permute.xlu0 %3122
  %3126 = vset.pattern.permute.xlu0 0
  %3127 = vperm.xlu0 %3126, %v3081
  %v3128 = vpop.permute.xlu0 %3127
  %3131 = vset.pattern.permute.xlu0 0
  %3132 = vperm.xlu0 %3131, %v3082
  %v3133 = vpop.permute.xlu0 %3132
  %3136 = vset.pattern.permute.xlu0 0
  %3137 = vperm.xlu0 %3136, %v3083
  %v3138 = vpop.permute.xlu0 %3137
  %3141 = vset.pattern.permute.xlu0 0
  %3142 = vperm.xlu0 %3141, %v3084
  %v3143 = vpop.permute.xlu0 %3142
  %3146 = vset.pattern.permute.xlu0 0
  %3147 = vperm.xlu0 %3146, %v3085
  %v3148 = vpop.permute.xlu0 %3147
  %3151 = vset.pattern.permute.xlu0 0
  %3152 = vperm.xlu0 %3151, %v3086
  %v3153 = vpop.permute.xlu0 %3152
  %3156 = vset.pattern.permute.xlu0 0
  %3157 = vperm.xlu0 %3156, %v3087
  %v3158 = vpop.permute.xlu0 %3157
  %3161 = vset.pattern.permute.xlu0 0
  %3162 = vperm.xlu0 %3161, %v3088
  %v3163 = vpop.permute.xlu0 %3162
  %3166 = vset.pattern.permute.xlu0 0
  %3167 = vperm.xlu0 %3166, %v3089
  %v3168 = vpop.permute.xlu0 %3167
  %v3186 = vunpack.c.l.b16 %v3050
  %v3187 = vunpack.c.l.b16 %v3051
  %v3188 = vunpack.c.l.b16 %v3052
  %v3189 = vunpack.c.l.b16 %v3053
  %v3190 = vunpack.c.l.b16 %v3054
  %v3191 = vunpack.c.l.b16 %v3055
  %v3192 = vunpack.c.l.b16 %v3056
  %v3193 = vunpack.c.l.b16 %v3057
  %v3194 = vunpack.c.l.b16 %v3058
  %v3195 = vunpack.c.l.b16 %v3059
  %v3196 = vunpack.c.l.b16 %v3060
  %v3197 = vunpack.c.l.b16 %v3061
  %v3198 = vunpack.c.l.b16 %v3062
  %v3199 = vunpack.c.l.b16 %v3063
  %v3200 = vunpack.c.l.b16 %v3064
  %v3201 = vunpack.c.l.b16 %v3065
  %v3202 = vpack.c.b16 %v3187, %v3186
  %v3203 = vpack.c.b16 %v3189, %v3188
  %v3204 = vpack.c.b16 %v3191, %v3190
  %v3205 = vpack.c.b16 %v3193, %v3192
  %v3206 = vpack.c.b16 %v3195, %v3194
  %v3207 = vpack.c.b16 %v3197, %v3196
  %v3208 = vpack.c.b16 %v3199, %v3198
  %v3209 = vpack.c.b16 %v3201, %v3200
  %3218 = vmatprep.subr.bf16.mxu0 0
  %3219 = vmatpush1.bf16.msra.mxu0 %v3066
  %3220 = vmatprep.subr.bf16.mxu0 0
  %3221 = vmatpush1.bf16.msra.mxu0 %v3067
  %3222 = vmatprep.subr.bf16.mxu0 0
  %3223 = vmatpush1.bf16.msra.mxu0 %v3068
  %3224 = vmatprep.subr.bf16.mxu0 0
  %3225 = vmatpush1.bf16.msra.mxu0 %v3069
  %3226 = vmatprep.subr.bf16.mxu0 0
  %3227 = vmatpush1.bf16.msra.mxu0 %v3070
  %3228 = vmatprep.subr.bf16.mxu0 0
  %3229 = vmatpush1.bf16.msra.mxu0 %v3071
  %3230 = vmatprep.subr.bf16.mxu0 0
  %3231 = vmatpush1.bf16.msra.mxu0 %v3072
  %3232 = vmatprep.subr.bf16.mxu0 0
  %3233 = vmatpush1.bf16.msra.mxu0 %v3073
  %3234 = vmatprep.subr.bf16.mxu0 0
  %3235 = vmatpush1.bf16.msra.mxu0 0
  %3236 = vmatprep.subr.bf16.mxu0 0
  %3237 = vmatpush1.bf16.msra.mxu0 0
  %3238 = vmatprep.subr.bf16.mxu0 0
  %3239 = vmatpush1.bf16.msra.mxu0 0
  %3240 = vmatprep.subr.bf16.mxu0 0
  %3241 = vmatpush1.bf16.msra.mxu0 0
  %3242 = vmatprep.subr.bf16.mxu0 0
  %3243 = vmatpush1.bf16.msra.mxu0 0
  %3244 = vmatprep.subr.bf16.mxu0 0
  %3245 = vmatpush1.bf16.msra.mxu0 0
  %3246 = vmatprep.subr.bf16.mxu0 0
  %3247 = vmatpush1.bf16.msra.mxu0 0
  %3248 = vmatprep.subr.bf16.mxu0 0
  %3249 = vmatpush1.bf16.msra.mxu0 0
  %3250 = vmatprep.mubr.bf16.mxu0 0
  %3251 = vmatmul.mubr.bf16.gmra.mrb[0].mxu0 %v3202
  %v3252 = vpop.f32.mrb[0].mxu0
  %v3253 = vadd.f32 %v3093, %v3252
  %v3254 = vpop.f32.mrb[0].mxu0
  %v3255 = vpop.f32.mrb[0].mxu0
  %v3256 = vadd.f32 %v3098, %v3255
  %v3257 = vpop.f32.mrb[0].mxu0
  %3258 = vmatprep.mubr.bf16.mxu0 0
  %3259 = vmatmul.mubr.bf16.gmra.mrb[0].mxu0 %v3203
  %v3260 = vpop.f32.mrb[0].mxu0
  %v3261 = vadd.f32 %v3103, %v3260
  %v3262 = vpop.f32.mrb[0].mxu0
  %v3263 = vpop.f32.mrb[0].mxu0
  %v3264 = vadd.f32 %v3108, %v3263
  %v3265 = vpop.f32.mrb[0].mxu0
  %3266 = vmatprep.mubr.bf16.mxu0 0
  %3267 = vmatmul.mubr.bf16.gmra.mrb[0].mxu0 %v3204
  %v3268 = vpop.f32.mrb[0].mxu0
  %v3269 = vadd.f32 %v3113, %v3268
  %v3270 = vpop.f32.mrb[0].mxu0
  %v3271 = vpop.f32.mrb[0].mxu0
  %v3272 = vadd.f32 %v3118, %v3271
  %v3273 = vpop.f32.mrb[0].mxu0
  %3274 = vmatprep.mubr.bf16.mxu0 0
  %3275 = vmatmul.mubr.bf16.gmra.mrb[0].mxu0 %v3205
  %v3276 = vpop.f32.mrb[0].mxu0
  %v3277 = vadd.f32 %v3123, %v3276
  %v3278 = vpop.f32.mrb[0].mxu0
  %v3279 = vpop.f32.mrb[0].mxu0
  %v3280 = vadd.f32 %v3128, %v3279
  %v3281 = vpop.f32.mrb[0].mxu0
  %3282 = vmatprep.mubr.bf16.mxu0 0
  %3283 = vmatmul.mubr.bf16.gmra.mrb[0].mxu0 %v3206
  %v3284 = vpop.f32.mrb[0].mxu0
  %v3285 = vadd.f32 %v3133, %v3284
  %v3286 = vpop.f32.mrb[0].mxu0
  %v3287 = vpop.f32.mrb[0].mxu0
  %v3288 = vadd.f32 %v3138, %v3287
  %v3289 = vpop.f32.mrb[0].mxu0
  %3290 = vmatprep.mubr.bf16.mxu0 0
  %3291 = vmatmul.mubr.bf16.gmra.mrb[0].mxu0 %v3207
  %v3292 = vpop.f32.mrb[0].mxu0
  %v3293 = vadd.f32 %v3143, %v3292
  %v3294 = vpop.f32.mrb[0].mxu0
  %v3295 = vpop.f32.mrb[0].mxu0
  %v3296 = vadd.f32 %v3148, %v3295
  %v3297 = vpop.f32.mrb[0].mxu0
  %3298 = vmatprep.mubr.bf16.mxu0 0
  %3299 = vmatmul.mubr.bf16.gmra.mrb[0].mxu0 %v3208
  %v3300 = vpop.f32.mrb[0].mxu0
  %v3301 = vadd.f32 %v3153, %v3300
  %v3302 = vpop.f32.mrb[0].mxu0
  %v3303 = vpop.f32.mrb[0].mxu0
  %v3304 = vadd.f32 %v3158, %v3303
  %v3305 = vpop.f32.mrb[0].mxu0
  %3306 = vmatprep.mubr.bf16.mxu0 0
  %3307 = vmatmul.mubr.bf16.gmra.mrb[0].mxu0 %v3209
  %v3308 = vpop.f32.mrb[0].mxu0
  %v3309 = vadd.f32 %v3163, %v3308
  %v3310 = vpop.f32.mrb[0].mxu0
  %v3311 = vpop.f32.mrb[0].mxu0
  %v3312 = vadd.f32 %v3168, %v3311
  %v3313 = vpop.f32.mrb[0].mxu0
  %3314 = vdwg.mxu0
  %vm3315 = vcmp.gt.f32.partialorder %v3253, 0.0
  %vm3316 = vcmp.gt.f32.partialorder %v3256, 0.0
  %vm3317 = vcmp.gt.f32.partialorder %v3261, 0.0
  %vm3318 = vcmp.gt.f32.partialorder %v3264, 0.0
  %vm3319 = vcmp.gt.f32.partialorder %v3269, 0.0
  %vm3320 = vcmp.gt.f32.partialorder %v3272, 0.0
  %vm3321 = vcmp.gt.f32.partialorder %v3277, 0.0
  %vm3322 = vcmp.gt.f32.partialorder %v3280, 0.0
  %vm3323 = vcmp.gt.f32.partialorder %v3285, 0.0
  %vm3324 = vcmp.gt.f32.partialorder %v3288, 0.0
  %vm3325 = vcmp.gt.f32.partialorder %v3293, 0.0
  %vm3326 = vcmp.gt.f32.partialorder %v3296, 0.0
  %vm3327 = vcmp.gt.f32.partialorder %v3301, 0.0
  %vm3328 = vcmp.gt.f32.partialorder %v3304, 0.0
  %vm3329 = vcmp.gt.f32.partialorder %v3309, 0.0
  %vm3330 = vcmp.gt.f32.partialorder %v3312, 0.0
  %v3331 = vmin.f32 %v3253, 0.0
  %v3332 = vmin.f32 %v3256, 0.0
  %v3333 = vmin.f32 %v3261, 0.0
  %v3334 = vmin.f32 %v3264, 0.0
  %v3335 = vmin.f32 %v3269, 0.0
  %v3336 = vmin.f32 %v3272, 0.0
  %v3337 = vmin.f32 %v3277, 0.0
  %v3338 = vmin.f32 %v3280, 0.0
  %v3339 = vmin.f32 %v3285, 0.0
  %v3340 = vmin.f32 %v3288, 0.0
  %v3341 = vmin.f32 %v3293, 0.0
  %v3342 = vmin.f32 %v3296, 0.0
  %v3343 = vmin.f32 %v3301, 0.0
  %v3344 = vmin.f32 %v3304, 0.0
  %v3345 = vmin.f32 %v3309, 0.0
  %v3346 = vmin.f32 %v3312, 0.0
  %v3347 = vmul.f32 %v3331, 1.442695
  %v3348 = vpow.pop %v3347
  %v3349 = vmul.f32 %v3332, 1.442695
  %v3350 = vpow.pop %v3349
  %v3351 = vmul.f32 %v3333, 1.442695
  %v3352 = vpow.pop %v3351
  %v3353 = vmul.f32 %v3334, 1.442695
  %v3354 = vpow.pop %v3353
  %v3355 = vmul.f32 %v3335, 1.442695
  %v3356 = vpow.pop %v3355
  %v3357 = vmul.f32 %v3336, 1.442695
  %v3358 = vpow.pop %v3357
  %v3359 = vmul.f32 %v3337, 1.442695
  %v3360 = vpow.pop %v3359
  %v3361 = vmul.f32 %v3338, 1.442695
  %v3362 = vpow.pop %v3361
  %v3363 = vmul.f32 %v3339, 1.442695
  %v3364 = vpow.pop %v3363
  %v3365 = vmul.f32 %v3340, 1.442695
  %v3366 = vpow.pop %v3365
  %v3367 = vmul.f32 %v3341, 1.442695
  %v3368 = vpow.pop %v3367
  %v3369 = vmul.f32 %v3342, 1.442695
  %v3370 = vpow.pop %v3369
  %v3371 = vmul.f32 %v3343, 1.442695
  %v3372 = vpow.pop %v3371
  %v3373 = vmul.f32 %v3344, 1.442695
  %v3374 = vpow.pop %v3373
  %v3375 = vmul.f32 %v3345, 1.442695
  %v3376 = vpow.pop %v3375
  %v3377 = vmul.f32 %v3346, 1.442695
  %v3378 = vpow.pop %v3377
  %v3379 = vsub.f32 %v3348, 1.0
  %v3380 = vsub.f32 %v3350, 1.0
  %v3381 = vsub.f32 %v3352, 1.0
  %v3382 = vsub.f32 %v3354, 1.0
  %v3383 = vsub.f32 %v3356, 1.0
  %v3384 = vsub.f32 %v3358, 1.0
  %v3385 = vsub.f32 %v3360, 1.0
  %v3386 = vsub.f32 %v3362, 1.0
  %v3387 = vsub.f32 %v3364, 1.0
  %v3388 = vsub.f32 %v3366, 1.0
  %v3389 = vsub.f32 %v3368, 1.0
  %v3390 = vsub.f32 %v3370, 1.0
  %v3391 = vsub.f32 %v3372, 1.0
  %v3392 = vsub.f32 %v3374, 1.0
  %v3393 = vsub.f32 %v3376, 1.0
  %v3394 = vsub.f32 %v3378, 1.0
  %v3395 = vsel %vm3315, %v3253, %v3379
  %v3396 = vsel %vm3316, %v3256, %v3380
  %v3397 = vsel %vm3317, %v3261, %v3381
  %v3398 = vsel %vm3318, %v3264, %v3382
  %v3399 = vsel %vm3319, %v3269, %v3383
  %v3400 = vsel %vm3320, %v3272, %v3384
  %v3401 = vsel %vm3321, %v3277, %v3385
  %v3402 = vsel %vm3322, %v3280, %v3386
  %v3403 = vsel %vm3323, %v3285, %v3387
  %v3404 = vsel %vm3324, %v3288, %v3388
  %v3405 = vsel %vm3325, %v3293, %v3389
  %v3406 = vsel %vm3326, %v3296, %v3390
  %v3407 = vsel %vm3327, %v3301, %v3391
  %v3408 = vsel %vm3328, %v3304, %v3392
  %v3409 = vsel %vm3329, %v3309, %v3393
  %v3410 = vsel %vm3330, %v3312, %v3394
  %v3411 = vld [vmem:[%s7] sm:$0xff]
  %v3412 = vld [vmem:[%s7 + $0x8] sm:$0xff]
  %v3413 = vld [vmem:[%s7 + $0x10] sm:$0xff]
  %v3414 = vld [vmem:[%s7 + $0x18] sm:$0xff]
  %v3415 = vld [vmem:[%s7 + $0x20] sm:$0xff]
  %v3416 = vld [vmem:[%s7 + $0x28] sm:$0xff]
  %v3417 = vld [vmem:[%s7 + $0x30] sm:$0xff]
  %v3418 = vld [vmem:[%s7 + $0x38] sm:$0xff]
  %v3419 = vld [vmem:[%s7 + $0x40] sm:$0xff]
  %v3420 = vld [vmem:[%s7 + $0x48] sm:$0xff]
  %v3421 = vld [vmem:[%s7 + $0x50] sm:$0xff]
  %v3422 = vld [vmem:[%s7 + $0x58] sm:$0xff]
  %v3423 = vld [vmem:[%s7 + $0x60] sm:$0xff]
  %v3424 = vld [vmem:[%s7 + $0x68] sm:$0xff]
  %v3425 = vld [vmem:[%s7 + $0x70] sm:$0xff]
  %v3426 = vld [vmem:[%s7 + $0x78] sm:$0xff]
  %v3427 = vmul.f32 %v3395, %v3411
  %v3428 = vmul.f32 %v3396, %v3412
  %v3429 = vmul.f32 %v3397, %v3413
  %v3430 = vmul.f32 %v3398, %v3414
  %v3431 = vmul.f32 %v3399, %v3415
  %v3432 = vmul.f32 %v3400, %v3416
  %v3433 = vmul.f32 %v3401, %v3417
  %v3434 = vmul.f32 %v3402, %v3418
  %v3435 = vmul.f32 %v3403, %v3419
  %v3436 = vmul.f32 %v3404, %v3420
  %v3437 = vmul.f32 %v3405, %v3421
  %v3438 = vmul.f32 %v3406, %v3422
  %v3439 = vmul.f32 %v3407, %v3423
  %v3440 = vmul.f32 %v3408, %v3424
  %v3441 = vmul.f32 %v3409, %v3425
  %v3442 = vmul.f32 %v3410, %v3426
  %vm3443 = vcmask 261120
  %v3444 = vsel %vm3443, %v3427, 0.0
  %3445 = vadd.xlane.f32.xlu0 %v3444
  %v3446 = vpop.xlane.xlu0 %3445
  %v3447 = vsel %vm3443, %v3428, 0.0
  %3448 = vadd.xlane.f32.xlu0 %v3447
  %v3449 = vpop.xlane.xlu0 %3448
  %v3450 = vsel %vm3443, %v3429, 0.0
  %3451 = vadd.xlane.f32.xlu0 %v3450
  %v3452 = vpop.xlane.xlu0 %3451
  %v3453 = vsel %vm3443, %v3430, 0.0
  %3454 = vadd.xlane.f32.xlu0 %v3453
  %v3455 = vpop.xlane.xlu0 %3454
  %v3456 = vsel %vm3443, %v3431, 0.0
  %3457 = vadd.xlane.f32.xlu0 %v3456
  %v3458 = vpop.xlane.xlu0 %3457
  %v3459 = vsel %vm3443, %v3432, 0.0
  %3460 = vadd.xlane.f32.xlu0 %v3459
  %v3461 = vpop.xlane.xlu0 %3460
  %v3462 = vsel %vm3443, %v3433, 0.0
  %3463 = vadd.xlane.f32.xlu0 %v3462
  %v3464 = vpop.xlane.xlu0 %3463
  %v3465 = vsel %vm3443, %v3434, 0.0
  %3466 = vadd.xlane.f32.xlu0 %v3465
  %v3467 = vpop.xlane.xlu0 %3466
  %v3468 = vsel %vm3443, %v3435, 0.0
  %3469 = vadd.xlane.f32.xlu0 %v3468
  %v3470 = vpop.xlane.xlu0 %3469
  %v3471 = vsel %vm3443, %v3436, 0.0
  %3472 = vadd.xlane.f32.xlu0 %v3471
  %v3473 = vpop.xlane.xlu0 %3472
  %v3474 = vsel %vm3443, %v3437, 0.0
  %3475 = vadd.xlane.f32.xlu0 %v3474
  %v3476 = vpop.xlane.xlu0 %3475
  %v3477 = vsel %vm3443, %v3438, 0.0
  %3478 = vadd.xlane.f32.xlu0 %v3477
  %v3479 = vpop.xlane.xlu0 %3478
  %v3480 = vsel %vm3443, %v3439, 0.0
  %3481 = vadd.xlane.f32.xlu0 %v3480
  %v3482 = vpop.xlane.xlu0 %3481
  %v3483 = vsel %vm3443, %v3440, 0.0
  %3484 = vadd.xlane.f32.xlu0 %v3483
  %v3485 = vpop.xlane.xlu0 %3484
  %v3486 = vsel %vm3443, %v3441, 0.0
  %3487 = vadd.xlane.f32.xlu0 %v3486
  %v3488 = vpop.xlane.xlu0 %3487
  %v3489 = vsel %vm3443, %v3442, 0.0
  %3490 = vadd.xlane.f32.xlu0 %v3489
  %v3491 = vpop.xlane.xlu0 %3490
  %s3492 = scalar_lea.vmem %s7, 128
  %v3493 = vld [vmem:[%s3492] sm:$0xff]
  %v3494 = vld [vmem:[%s3492 + $0x8] sm:$0xff]
  %v3495 = vld [vmem:[%s3492 + $0x10] sm:$0xff]
  %v3496 = vld [vmem:[%s3492 + $0x18] sm:$0xff]
  %v3497 = vld [vmem:[%s3492 + $0x20] sm:$0xff]
  %v3498 = vld [vmem:[%s3492 + $0x28] sm:$0xff]
  %v3499 = vld [vmem:[%s3492 + $0x30] sm:$0xff]
  %v3500 = vld [vmem:[%s3492 + $0x38] sm:$0xff]
  %v3501 = vld [vmem:[%s3492 + $0x40] sm:$0xff]
  %v3502 = vld [vmem:[%s3492 + $0x48] sm:$0xff]
  %v3503 = vld [vmem:[%s3492 + $0x50] sm:$0xff]
  %v3504 = vld [vmem:[%s3492 + $0x58] sm:$0xff]
  %v3505 = vld [vmem:[%s3492 + $0x60] sm:$0xff]
  %v3506 = vld [vmem:[%s3492 + $0x68] sm:$0xff]
  %v3507 = vld [vmem:[%s3492 + $0x70] sm:$0xff]
  %v3508 = vld [vmem:[%s3492 + $0x78] sm:$0xff]
  %v3509 = vmul.f32 %v3395, %v3493
  %v3510 = vmul.f32 %v3396, %v3494
  %v3511 = vmul.f32 %v3397, %v3495
  %v3512 = vmul.f32 %v3398, %v3496
  %v3513 = vmul.f32 %v3399, %v3497
  %v3514 = vmul.f32 %v3400, %v3498
  %v3515 = vmul.f32 %v3401, %v3499
  %v3516 = vmul.f32 %v3402, %v3500
  %v3517 = vmul.f32 %v3403, %v3501
  %v3518 = vmul.f32 %v3404, %v3502
  %v3519 = vmul.f32 %v3405, %v3503
  %v3520 = vmul.f32 %v3406, %v3504
  %v3521 = vmul.f32 %v3407, %v3505
  %v3522 = vmul.f32 %v3408, %v3506
  %v3523 = vmul.f32 %v3409, %v3507
  %v3524 = vmul.f32 %v3410, %v3508
  %v3525 = vsel %vm3443, %v3509, 0.0
  %3526 = vadd.xlane.f32.xlu0 %v3525
  %v3527 = vpop.xlane.xlu0 %3526
  %v3528 = vsel %vm3443, %v3510, 0.0
  %3529 = vadd.xlane.f32.xlu0 %v3528
  %v3530 = vpop.xlane.xlu0 %3529
  %v3531 = vsel %vm3443, %v3511, 0.0
  %3532 = vadd.xlane.f32.xlu0 %v3531
  %v3533 = vpop.xlane.xlu0 %3532
  %v3534 = vsel %vm3443, %v3512, 0.0
  %3535 = vadd.xlane.f32.xlu0 %v3534
  %v3536 = vpop.xlane.xlu0 %3535
  %v3537 = vsel %vm3443, %v3513, 0.0
  %3538 = vadd.xlane.f32.xlu0 %v3537
  %v3539 = vpop.xlane.xlu0 %3538
  %v3540 = vsel %vm3443, %v3514, 0.0
  %3541 = vadd.xlane.f32.xlu0 %v3540
  %v3542 = vpop.xlane.xlu0 %3541
  %v3543 = vsel %vm3443, %v3515, 0.0
  %3544 = vadd.xlane.f32.xlu0 %v3543
  %v3545 = vpop.xlane.xlu0 %3544
  %v3546 = vsel %vm3443, %v3516, 0.0
  %3547 = vadd.xlane.f32.xlu0 %v3546
  %v3548 = vpop.xlane.xlu0 %3547
  %v3549 = vsel %vm3443, %v3517, 0.0
  %3550 = vadd.xlane.f32.xlu0 %v3549
  %v3551 = vpop.xlane.xlu0 %3550
  %v3552 = vsel %vm3443, %v3518, 0.0
  %3553 = vadd.xlane.f32.xlu0 %v3552
  %v3554 = vpop.xlane.xlu0 %3553
  %v3555 = vsel %vm3443, %v3519, 0.0
  %3556 = vadd.xlane.f32.xlu0 %v3555
  %v3557 = vpop.xlane.xlu0 %3556
  %v3558 = vsel %vm3443, %v3520, 0.0
  %3559 = vadd.xlane.f32.xlu0 %v3558
  %v3560 = vpop.xlane.xlu0 %3559
  %v3561 = vsel %vm3443, %v3521, 0.0
  %3562 = vadd.xlane.f32.xlu0 %v3561
  %v3563 = vpop.xlane.xlu0 %3562
  %v3564 = vsel %vm3443, %v3522, 0.0
  %3565 = vadd.xlane.f32.xlu0 %v3564
  %v3566 = vpop.xlane.xlu0 %3565
  %v3567 = vsel %vm3443, %v3523, 0.0
  %3568 = vadd.xlane.f32.xlu0 %v3567
  %v3569 = vpop.xlane.xlu0 %3568
  %v3570 = vsel %vm3443, %v3524, 0.0
  %3571 = vadd.xlane.f32.xlu0 %v3570
  %v3572 = vpop.xlane.xlu0 %3571
  %s3573 = scalar_lea.vmem %s7, 256
  %v3574 = vld [vmem:[%s3573] sm:$0xff]
  %v3575 = vld [vmem:[%s3573 + $0x8] sm:$0xff]
  %v3576 = vld [vmem:[%s3573 + $0x10] sm:$0xff]
  %v3577 = vld [vmem:[%s3573 + $0x18] sm:$0xff]
  %v3578 = vld [vmem:[%s3573 + $0x20] sm:$0xff]
  %v3579 = vld [vmem:[%s3573 + $0x28] sm:$0xff]
  %v3580 = vld [vmem:[%s3573 + $0x30] sm:$0xff]
  %v3581 = vld [vmem:[%s3573 + $0x38] sm:$0xff]
  %v3582 = vld [vmem:[%s3573 + $0x40] sm:$0xff]
  %v3583 = vld [vmem:[%s3573 + $0x48] sm:$0xff]
  %v3584 = vld [vmem:[%s3573 + $0x50] sm:$0xff]
  %v3585 = vld [vmem:[%s3573 + $0x58] sm:$0xff]
  %v3586 = vld [vmem:[%s3573 + $0x60] sm:$0xff]
  %v3587 = vld [vmem:[%s3573 + $0x68] sm:$0xff]
  %v3588 = vld [vmem:[%s3573 + $0x70] sm:$0xff]
  %v3589 = vld [vmem:[%s3573 + $0x78] sm:$0xff]
  %v3590 = vmul.f32 %v3395, %v3574
  %v3591 = vmul.f32 %v3396, %v3575
  %v3592 = vmul.f32 %v3397, %v3576
  %v3593 = vmul.f32 %v3398, %v3577
  %v3594 = vmul.f32 %v3399, %v3578
  %v3595 = vmul.f32 %v3400, %v3579
  %v3596 = vmul.f32 %v3401, %v3580
  %v3597 = vmul.f32 %v3402, %v3581
  %v3598 = vmul.f32 %v3403, %v3582
  %v3599 = vmul.f32 %v3404, %v3583
  %v3600 = vmul.f32 %v3405, %v3584
  %v3601 = vmul.f32 %v3406, %v3585
  %v3602 = vmul.f32 %v3407, %v3586
  %v3603 = vmul.f32 %v3408, %v3587
  %v3604 = vmul.f32 %v3409, %v3588
  %v3605 = vmul.f32 %v3410, %v3589
  %v3606 = vsel %vm3443, %v3590, 0.0
  %3607 = vadd.xlane.f32.xlu0 %v3606
  %v3608 = vpop.xlane.xlu0 %3607
  %v3609 = vsel %vm3443, %v3591, 0.0
  %3610 = vadd.xlane.f32.xlu0 %v3609
  %v3611 = vpop.xlane.xlu0 %3610
  %v3612 = vsel %vm3443, %v3592, 0.0
  %3613 = vadd.xlane.f32.xlu0 %v3612
  %v3614 = vpop.xlane.xlu0 %3613
  %v3615 = vsel %vm3443, %v3593, 0.0
  %3616 = vadd.xlane.f32.xlu0 %v3615
  %v3617 = vpop.xlane.xlu0 %3616
  %v3618 = vsel %vm3443, %v3594, 0.0
  %3619 = vadd.xlane.f32.xlu0 %v3618
  %v3620 = vpop.xlane.xlu0 %3619
  %v3621 = vsel %vm3443, %v3595, 0.0
  %3622 = vadd.xlane.f32.xlu0 %v3621
  %v3623 = vpop.xlane.xlu0 %3622
  %v3624 = vsel %vm3443, %v3596, 0.0
  %3625 = vadd.xlane.f32.xlu0 %v3624
  %v3626 = vpop.xlane.xlu0 %3625
  %v3627 = vsel %vm3443, %v3597, 0.0
  %3628 = vadd.xlane.f32.xlu0 %v3627
  %v3629 = vpop.xlane.xlu0 %3628
  %v3630 = vsel %vm3443, %v3598, 0.0
  %3631 = vadd.xlane.f32.xlu0 %v3630
  %v3632 = vpop.xlane.xlu0 %3631
  %v3633 = vsel %vm3443, %v3599, 0.0
  %3634 = vadd.xlane.f32.xlu0 %v3633
  %v3635 = vpop.xlane.xlu0 %3634
  %v3636 = vsel %vm3443, %v3600, 0.0
  %3637 = vadd.xlane.f32.xlu0 %v3636
  %v3638 = vpop.xlane.xlu0 %3637
  %v3639 = vsel %vm3443, %v3601, 0.0
  %3640 = vadd.xlane.f32.xlu0 %v3639
  %v3641 = vpop.xlane.xlu0 %3640
  %v3642 = vsel %vm3443, %v3602, 0.0
  %3643 = vadd.xlane.f32.xlu0 %v3642
  %v3644 = vpop.xlane.xlu0 %3643
  %v3645 = vsel %vm3443, %v3603, 0.0
  %3646 = vadd.xlane.f32.xlu0 %v3645
  %v3647 = vpop.xlane.xlu0 %3646
  %v3648 = vsel %vm3443, %v3604, 0.0
  %3649 = vadd.xlane.f32.xlu0 %v3648
  %v3650 = vpop.xlane.xlu0 %3649
  %v3651 = vsel %vm3443, %v3605, 0.0
  %3652 = vadd.xlane.f32.xlu0 %v3651
  %v3653 = vpop.xlane.xlu0 %3652
  %s3654 = scalar_lea.vmem %s7, 384
  %v3655 = vld [vmem:[%s3654] sm:$0xff]
  %v3656 = vld [vmem:[%s3654 + $0x8] sm:$0xff]
  %v3657 = vld [vmem:[%s3654 + $0x10] sm:$0xff]
  %v3658 = vld [vmem:[%s3654 + $0x18] sm:$0xff]
  %v3659 = vld [vmem:[%s3654 + $0x20] sm:$0xff]
  %v3660 = vld [vmem:[%s3654 + $0x28] sm:$0xff]
  %v3661 = vld [vmem:[%s3654 + $0x30] sm:$0xff]
  %v3662 = vld [vmem:[%s3654 + $0x38] sm:$0xff]
  %v3663 = vld [vmem:[%s3654 + $0x40] sm:$0xff]
  %v3664 = vld [vmem:[%s3654 + $0x48] sm:$0xff]
  %v3665 = vld [vmem:[%s3654 + $0x50] sm:$0xff]
  %v3666 = vld [vmem:[%s3654 + $0x58] sm:$0xff]
  %v3667 = vld [vmem:[%s3654 + $0x60] sm:$0xff]
  %v3668 = vld [vmem:[%s3654 + $0x68] sm:$0xff]
  %v3669 = vld [vmem:[%s3654 + $0x70] sm:$0xff]
  %v3670 = vld [vmem:[%s3654 + $0x78] sm:$0xff]
  %v3671 = vmul.f32 %v3395, %v3655
  %v3672 = vmul.f32 %v3396, %v3656
  %v3673 = vmul.f32 %v3397, %v3657
  %v3674 = vmul.f32 %v3398, %v3658
  %v3675 = vmul.f32 %v3399, %v3659
  %v3676 = vmul.f32 %v3400, %v3660
  %v3677 = vmul.f32 %v3401, %v3661
  %v3678 = vmul.f32 %v3402, %v3662
  %v3679 = vmul.f32 %v3403, %v3663
  %v3680 = vmul.f32 %v3404, %v3664
  %v3681 = vmul.f32 %v3405, %v3665
  %v3682 = vmul.f32 %v3406, %v3666
  %v3683 = vmul.f32 %v3407, %v3667
  %v3684 = vmul.f32 %v3408, %v3668
  %v3685 = vmul.f32 %v3409, %v3669
  %v3686 = vmul.f32 %v3410, %v3670
  %v3687 = vsel %vm3443, %v3671, 0.0
  %3688 = vadd.xlane.f32.xlu0 %v3687
  %v3689 = vpop.xlane.xlu0 %3688
  %v3690 = vsel %vm3443, %v3672, 0.0
  %3691 = vadd.xlane.f32.xlu0 %v3690
  %v3692 = vpop.xlane.xlu0 %3691
  %v3693 = vsel %vm3443, %v3673, 0.0
  %3694 = vadd.xlane.f32.xlu0 %v3693
  %v3695 = vpop.xlane.xlu0 %3694
  %v3696 = vsel %vm3443, %v3674, 0.0
  %3697 = vadd.xlane.f32.xlu0 %v3696
  %v3698 = vpop.xlane.xlu0 %3697
  %v3699 = vsel %vm3443, %v3675, 0.0
  %3700 = vadd.xlane.f32.xlu0 %v3699
  %v3701 = vpop.xlane.xlu0 %3700
  %v3702 = vsel %vm3443, %v3676, 0.0
  %3703 = vadd.xlane.f32.xlu0 %v3702
  %v3704 = vpop.xlane.xlu0 %3703
  %v3705 = vsel %vm3443, %v3677, 0.0
  %3706 = vadd.xlane.f32.xlu0 %v3705
  %v3707 = vpop.xlane.xlu0 %3706
  %v3708 = vsel %vm3443, %v3678, 0.0
  %3709 = vadd.xlane.f32.xlu0 %v3708
  %v3710 = vpop.xlane.xlu0 %3709
  %v3711 = vsel %vm3443, %v3679, 0.0
  %3712 = vadd.xlane.f32.xlu0 %v3711
  %v3713 = vpop.xlane.xlu0 %3712
  %v3714 = vsel %vm3443, %v3680, 0.0
  %3715 = vadd.xlane.f32.xlu0 %v3714
  %v3716 = vpop.xlane.xlu0 %3715
  %v3717 = vsel %vm3443, %v3681, 0.0
  %3718 = vadd.xlane.f32.xlu0 %v3717
  %v3719 = vpop.xlane.xlu0 %3718
  %v3720 = vsel %vm3443, %v3682, 0.0
  %3721 = vadd.xlane.f32.xlu0 %v3720
  %v3722 = vpop.xlane.xlu0 %3721
  %v3723 = vsel %vm3443, %v3683, 0.0
  %3724 = vadd.xlane.f32.xlu0 %v3723
  %v3725 = vpop.xlane.xlu0 %3724
  %v3726 = vsel %vm3443, %v3684, 0.0
  %3727 = vadd.xlane.f32.xlu0 %v3726
  %v3728 = vpop.xlane.xlu0 %3727
  %v3729 = vsel %vm3443, %v3685, 0.0
  %3730 = vadd.xlane.f32.xlu0 %v3729
  %v3731 = vpop.xlane.xlu0 %3730
  %v3732 = vsel %vm3443, %v3686, 0.0
  %3733 = vadd.xlane.f32.xlu0 %v3732
  %v3734 = vpop.xlane.xlu0 %3733
  %vm3735 = vcmask 7168
  %v3736 = vsel %vm3735, %v3446, %v3527
  %v3737 = vsel %vm3735, %v3449, %v3530
  %v3738 = vsel %vm3735, %v3452, %v3533
  %v3739 = vsel %vm3735, %v3455, %v3536
  %v3740 = vsel %vm3735, %v3458, %v3539
  %v3741 = vsel %vm3735, %v3461, %v3542
  %v3742 = vsel %vm3735, %v3464, %v3545
  %v3743 = vsel %vm3735, %v3467, %v3548
  %v3744 = vsel %vm3735, %v3470, %v3551
  %v3745 = vsel %vm3735, %v3473, %v3554
  %v3746 = vsel %vm3735, %v3476, %v3557
  %v3747 = vsel %vm3735, %v3479, %v3560
  %v3748 = vsel %vm3735, %v3482, %v3563
  %v3749 = vsel %vm3735, %v3485, %v3566
  %v3750 = vsel %vm3735, %v3488, %v3569
  %v3751 = vsel %vm3735, %v3491, %v3572
  %vm3752 = vcmask 15360
  %v3753 = vsel %vm3752, %v3736, %v3608
  %v3754 = vsel %vm3752, %v3737, %v3611
  %v3755 = vsel %vm3752, %v3738, %v3614
  %v3756 = vsel %vm3752, %v3739, %v3617
  %v3757 = vsel %vm3752, %v3740, %v3620
  %v3758 = vsel %vm3752, %v3741, %v3623
  %v3759 = vsel %vm3752, %v3742, %v3626
  %v3760 = vsel %vm3752, %v3743, %v3629
  %v3761 = vsel %vm3752, %v3744, %v3632
  %v3762 = vsel %vm3752, %v3745, %v3635
  %v3763 = vsel %vm3752, %v3746, %v3638
  %v3764 = vsel %vm3752, %v3747, %v3641
  %v3765 = vsel %vm3752, %v3748, %v3644
  %v3766 = vsel %vm3752, %v3749, %v3647
  %v3767 = vsel %vm3752, %v3750, %v3650
  %v3768 = vsel %vm3752, %v3751, %v3653
  %vm3769 = vcmask 23552
  %v3770 = vsel %vm3769, %v3753, %v3689
  %v3771 = vsel %vm3769, %v3754, %v3692
  %v3772 = vsel %vm3769, %v3755, %v3695
  %v3773 = vsel %vm3769, %v3756, %v3698
  %v3774 = vsel %vm3769, %v3757, %v3701
  %v3775 = vsel %vm3769, %v3758, %v3704
  %v3776 = vsel %vm3769, %v3759, %v3707
  %v3777 = vsel %vm3769, %v3760, %v3710
  %v3778 = vsel %vm3769, %v3761, %v3713
  %v3779 = vsel %vm3769, %v3762, %v3716
  %v3780 = vsel %vm3769, %v3763, %v3719
  %v3781 = vsel %vm3769, %v3764, %v3722
  %v3782 = vsel %vm3769, %v3765, %v3725
  %v3783 = vsel %vm3769, %v3766, %v3728
  %v3784 = vsel %vm3769, %v3767, %v3731
  %v3785 = vsel %vm3769, %v3768, %v3734
  %v3786 = vld [vmem:[%s8] sm:$0xff]
  %v3787 = vld [vmem:[%s9] sm:$0x1]
  %v3789 = vlaneseq
  %v3790 = vshrl.u32 %v3789, 7
  %v3791 = vsub.s32 0, %v3790
  %v3792 = vrot.slane %v3787, %v3791
  %3794 = vmatprep.subr.mxu0 0.0
  %3795 = vmatpush1.msra.mxu0 %v3770
  %3796 = vmatprep.subr.mxu0 0.0
  %3797 = vmatpush1.msra.mxu0 %v3771
  %3798 = vmatprep.subr.mxu0 0.0
  %3799 = vmatpush1.msra.mxu0 %v3772
  %3800 = vmatprep.subr.mxu0 0.0
  %3801 = vmatpush1.msra.mxu0 %v3773
  %3802 = vmatprep.subr.mxu0 0.0
  %3803 = vmatpush1.msra.mxu0 %v3774
  %3804 = vmatprep.subr.mxu0 0.0
  %3805 = vmatpush1.msra.mxu0 %v3775
  %3806 = vmatprep.subr.mxu0 0.0
  %3807 = vmatpush1.msra.mxu0 %v3776
  %3808 = vmatprep.subr.mxu0 0.0
  %3809 = vmatpush1.msra.mxu0 %v3777
  %3810 = vmatprep.subr.mxu0 0.0
  %3811 = vmatpush1.msra.mxu0 %v3778
  %3812 = vmatprep.subr.mxu0 0.0
  %3813 = vmatpush1.msra.mxu0 %v3779
  %3814 = vmatprep.subr.mxu0 0.0
  %3815 = vmatpush1.msra.mxu0 %v3780
  %3816 = vmatprep.subr.mxu0 0.0
  %3817 = vmatpush1.msra.mxu0 %v3781
  %3818 = vmatprep.subr.mxu0 0.0
  %3819 = vmatpush1.msra.mxu0 %v3782
  %3820 = vmatprep.subr.mxu0 0.0
  %3821 = vmatpush1.msra.mxu0 %v3783
  %3822 = vmatprep.subr.mxu0 0.0
  %3823 = vmatpush1.msra.mxu0 %v3784
  %3824 = vmatprep.subr.mxu0 0.0
  %3825 = vmatpush1.msra.mxu0 %v3785
  %3826 = vmatprep.subr.mxu0 0.0
  %3827 = vmatpush1.msra.mxu0 0.0
  %3828 = vmatprep.subr.mxu0 0.0
  %3829 = vmatpush1.msra.mxu0 0.0
  %3830 = vmatprep.subr.mxu0 0.0
  %3831 = vmatpush1.msra.mxu0 0.0
  %3832 = vmatprep.subr.mxu0 0.0
  %3833 = vmatpush1.msra.mxu0 0.0
  %3834 = vmatprep.subr.mxu0 0.0
  %3835 = vmatpush1.msra.mxu0 0.0
  %3836 = vmatprep.subr.mxu0 0.0
  %3837 = vmatpush1.msra.mxu0 0.0
  %3838 = vmatprep.subr.mxu0 0.0
  %3839 = vmatpush1.msra.mxu0 0.0
  %3840 = vmatprep.subr.mxu0 0.0
  %3841 = vmatpush1.msra.mxu0 0.0
  %3842 = vmatprep.subr.mxu0 0.0
  %3843 = vmatpush1.msra.mxu0 0.0
  %3844 = vmatprep.subr.mxu0 0.0
  %3845 = vmatpush1.msra.mxu0 0.0
  %3846 = vmatprep.subr.mxu0 0.0
  %3847 = vmatpush1.msra.mxu0 0.0
  %3848 = vmatprep.subr.mxu0 0.0
  %3849 = vmatpush1.msra.mxu0 0.0
  %3850 = vmatprep.subr.mxu0 0.0
  %3851 = vmatpush1.msra.mxu0 0.0
  %3852 = vmatprep.subr.mxu0 0.0
  %3853 = vmatpush1.msra.mxu0 0.0
  %3854 = vmatprep.subr.mxu0 0.0
  %3855 = vmatpush1.msra.mxu0 0.0
  %3856 = vmatprep.subr.mxu0 0.0
  %3857 = vmatpush1.msra.mxu0 0.0
  %3858 = vmatprep.mubr.f32.mxu0 0.0
  %3859 = vmatmul.mubr.f32.gmra.mrb[0].mxu0 %v3786
  %v3860 = vpop.f32.mrb[0].mxu0
  %v3861 = vadd.f32 %v3792, %v3860
  %v3862 = vpop.f32.mrb[0].mxu0
  %3863 = vdwg.mxu0
  %vm3864 = vcmask 31744
  %3865 = vst.msk [vmem:[%s10] sm:$0xff] %vm3864, %v3861
  // Predicated region
  $region42: #{eegnet_forward.1} parent=0 // pred_check
    _
  $region43: #{eegnet_forward.1} parent=0 // pred_check_branch
    %3867 = sbr.rel (0) target = $region45
  $region44: #{eegnet_forward.1} parent=0 // pred_region
    _
  $region45: #{eegnet_forward.1} parent=0 // pred_fallthru
    _
  // Predicated region
  $region46: #{eegnet_forward.1} parent=0 // pred_check
    _
  $region47: #{eegnet_forward.1} parent=0 // pred_check_branch
    %3869 = sbr.rel (0) target = $region49
  $region48: #{eegnet_forward.1} parent=0 // pred_region
    _
  $region49: #{eegnet_forward.1} parent=0 // pred_fallthru
    _

</llo_original>
